<compile_context>
chip_gen: v6e
topology: v6e:2x2x1
jax: 0.10.0
libtpu: 0.0.40
codegen_flags: <defaults>
</compile_context>

<pallas_src>
import functools

import jax
import jax.numpy as jnp
from jax.experimental import pallas as pl
from jax.experimental.pallas import tpu as pltpu

C_HIDDEN1 = 512   # conv1_ output channels (fixed by the module)
C_HIDDEN2 = 128   # conv_mid output / bn1 channels (fixed by the module)
BN_EPS = 1e-5


# ---------------------------------------------------------------------------
# Fused kernel: whole Attention forward for one batch element.
# ---------------------------------------------------------------------------
def _attention_fused_kernel(xcols_ref, w1_ref, b1_ref, wm_ref, scale_ref,
                            shift_ref, w2_ref, b2_ref, mask_ref,
                            out2_ref, gmap_ref,
                            out1_scr, pad_scr, col_scr,
                            *, w_sp, pad, approx_recip):
    """All tensors are in transposed (channels, H*W) layout.

    xcols_ref: (9*Cin, HW)  im2col of the input (tap-major, channel-minor rows)
    w1_ref:    (512, 9*Cin)        b1_ref:    (512, 1)
    wm_ref:    (128, 512)          scale/shift: (128, 1)   folded BN (+ conv_mid bias)
    w2_ref:    (Cout, 9*128)       b2_ref:    (Cout, 1)
    mask_ref:  (1, HW)             1-pixel border mask
    out2_ref:  (Cout, HW)          gmap_ref:  (1, HW)
    out1_scr:  (512, HW)           pad_scr:   (128, HW + 2*pad)   col_scr: (9*128, HW)
    """
    hw = xcols_ref.shape[1]
    c2 = pad_scr.shape[0]                      # 128

    # ---- conv1_: 3x3 conv as ONE K=9*Cin matmul, + bias + ReLU -> (512, HW)
    y1 = jnp.dot(w1_ref[...], xcols_ref[...], preferred_element_type=jnp.float32)
    out1_scr[...] = jnp.maximum(y1 + b1_ref[...], 0.0).astype(out1_scr.dtype)

    # ---- conv_mid (1x1) + folded BatchNorm + ReLU -> (128, HW)
    #      stored into a lane-zero-padded scratch so the 3x3 taps of conv2_
    #      become plain static slices along the lane (spatial) axis.
    y2 = jnp.dot(wm_ref[...], out1_scr[...], preferred_element_type=jnp.float32)
    y2 = jnp.maximum(y2 * scale_ref[...] + shift_ref[...], 0.0)
    pad_scr[...] = jnp.zeros(pad_scr.shape, pad_scr.dtype)
    pad_scr[:, pl.ds(pad, hw)] = y2.astype(pad_scr.dtype)

    # ---- in-VMEM im2col for conv2_ -> (9*128, HW)
    #      shift by s = dy*W + dx on the flattened spatial axis; out-of-image rows
    #      are covered by the zero padding, column wrap-around by the dx masks.
    col_pos = jax.lax.broadcasted_iota(jnp.int32, (1, hw), 1) % w_sp
    left_ok = col_pos >= 1                 # reading the pixel to the left  (dx=-1)
    right_ok = col_pos <= w_sp - 2         # reading the pixel to the right (dx=+1)
    k = 0
    for dy in (-1, 0, 1):
        for dx in (-1, 0, 1):
            s = dy * w_sp + dx
            sh = pad_scr[:, pl.ds(pad + s, hw)]
            if dx == -1:
                sh = jnp.where(left_ok, sh, 0.0)
            elif dx == 1:
                sh = jnp.where(right_ok, sh, 0.0)
            col_scr[pl.ds(k * c2, c2), :] = sh.astype(col_scr.dtype)
            k += 1

    # ---- conv2_: ONE K=9*128 matmul, + bias -> logits (Cout, HW)
    y3 = jnp.dot(w2_ref[...], col_scr[...], preferred_element_type=jnp.float32)
    y3 = y3 + b2_ref[...]

    # ---- spatial softmax per channel (torch softmax over the flattened H*W dim)
    m = jnp.max(y3, axis=1, keepdims=True)
    e = jnp.exp(y3 - m)
    denom = jnp.sum(e, axis=1, keepdims=True)
    soft = e * pl.reciprocal(denom, approx=approx_recip)
    out2_ref[...] = soft.astype(out2_ref.dtype)

    # ---- ChannelPool (max over channels) + 1-pixel border mask
    gmap = jnp.max(soft, axis=0, keepdims=True)           # (1, HW)
    gmap_ref[...] = (gmap * mask_ref[...]).astype(gmap_ref.dtype)


# ---------------------------------------------------------------------------
# Wrapper: parameter layout conversion, BN fold, one fused pallas_call.
# ---------------------------------------------------------------------------
def attention_forward(x_nchw, params, *, use_bf16=False):
    n, cin, h, w_sp = x_nchw.shape
    cout = params["w2"].shape[0]
    hw = h * w_sp
    cdt = jnp.bfloat16 if use_bf16 else jnp.float32
    # lane-tile aligned padding amount (>= W+1) for the in-kernel shifted slices
    pad = ((w_sp + 1 + 127) // 128) * 128

    # im2col for the first (tiny-Cin) conv only: (N, 9*Cin, HW); rows are
    # (kh, kw)-major, channel-minor to match the flattened weight columns.
    xp = jnp.pad(x_nchw, ((0, 0), (0, 0), (1, 1), (1, 1)))
    cols = [xp[:, :, dy:dy + h, dx:dx + w_sp].reshape(n, cin, hw)
            for dy in range(3) for dx in range(3)]
    xcols = jnp.concatenate(cols, axis=1).astype(cdt)            # (N, 9*Cin, HW)

    # weights in transposed "output-channels-on-rows" layout
    w1t = jnp.transpose(params["w1"], (0, 2, 3, 1)).reshape(C_HIDDEN1, 9 * cin).astype(cdt)
    wmt = params["w_mid"][:, :, 0, 0].astype(cdt)                # (128, 512)
    w2t = jnp.transpose(params["w2"], (0, 2, 3, 1)).reshape(cout, 9 * C_HIDDEN2).astype(cdt)

    b1 = params["b1"].reshape(-1, 1).astype(jnp.float32)         # (512, 1)
    # fold eval-mode BatchNorm (+ conv_mid bias) into per-channel scale/shift
    inv = params["gamma"] / jnp.sqrt(params["run_var"] + BN_EPS)
    scale = inv.reshape(-1, 1).astype(jnp.float32)               # (128, 1)
    shift = ((params["b_mid"] - params["run_mean"]) * inv
             + params["beta"]).reshape(-1, 1).astype(jnp.float32)
    b2 = params["b2"].reshape(-1, 1).astype(jnp.float32)         # (Cout, 1)

    # 1-pixel border mask on the flattened spatial axis: (1, HW)
    rr = jnp.arange(hw) // w_sp
    cc = jnp.arange(hw) % w_sp
    border = (rr >= 1) & (rr <= h - 2) & (cc >= 1) & (cc <= w_sp - 2)
    mask = border.astype(jnp.float32).reshape(1, hw)

    kern = functools.partial(_attention_fused_kernel,
                             w_sp=w_sp, pad=pad, approx_recip=use_bf16)

    out2_flat, gmap_flat = pl.pallas_call(
        kern,
        out_shape=(jax.ShapeDtypeStruct((n, cout, hw), jnp.float32),
                   jax.ShapeDtypeStruct((n, 1, hw), jnp.float32)),
        grid=(n,),
        in_specs=[
            pl.BlockSpec((None, 9 * cin, hw), lambda i: (i, 0, 0)),
            pl.BlockSpec((C_HIDDEN1, 9 * cin), lambda i: (0, 0)),
            pl.BlockSpec((C_HIDDEN1, 1), lambda i: (0, 0)),
            pl.BlockSpec((C_HIDDEN2, C_HIDDEN1), lambda i: (0, 0)),
            pl.BlockSpec((C_HIDDEN2, 1), lambda i: (0, 0)),
            pl.BlockSpec((C_HIDDEN2, 1), lambda i: (0, 0)),
            pl.BlockSpec((cout, 9 * C_HIDDEN2), lambda i: (0, 0)),
            pl.BlockSpec((cout, 1), lambda i: (0, 0)),
            pl.BlockSpec((1, hw), lambda i: (0, 0)),
        ],
        out_specs=(pl.BlockSpec((None, cout, hw), lambda i: (i, 0, 0)),
                   pl.BlockSpec((None, 1, hw), lambda i: (i, 0, 0))),
        scratch_shapes=[
            pltpu.VMEM((C_HIDDEN1, hw), cdt),                       # out1^T
            pltpu.VMEM((C_HIDDEN2, hw + 2 * pad), cdt),             # out1_2^T, zero-padded
            pltpu.VMEM((9 * C_HIDDEN2, hw), cdt),                   # im2col for conv2_
        ],
        compiler_params=pltpu.CompilerParams(
            dimension_semantics=("parallel",)),
    )(xcols, w1t, b1, wmt, scale, shift, w2t, b2, mask)

    # (N, C, HW) -> (N, C, H, W): identical semantics to torch's .view(n, c, h, w)
    out2 = out2_flat.reshape(n, cout, h, w_sp)
    global_map = gmap_flat.reshape(n, 1, h, w_sp)
    return out2, global_map


# ---------------------------------------------------------------------------
# Pure-JAX reference (mirrors the PyTorch forward) for the correctness check.
# ---------------------------------------------------------------------------
def reference_forward(x, p):
    def conv(x, w, b, pad):
        y = jax.lax.conv_general_dilated(
            x, w, window_strides=(1, 1), padding=[(pad, pad), (pad, pad)],
            dimension_numbers=("NCHW", "OIHW", "NCHW"))
        return y + b[None, :, None, None]

    out1 = jax.nn.relu(conv(x, p["w1"], p["b1"], 1))
    z = conv(out1, p["w_mid"], p["b_mid"], 0)
    z = (z - p["run_mean"][None, :, None, None]) / jnp.sqrt(
        p["run_var"] + BN_EPS)[None, :, None, None]
    z = z * p["gamma"][None, :, None, None] + p["beta"][None, :, None, None]
    out1_2 = jax.nn.relu(z)
    out2 = conv(out1_2, p["w2"], p["b2"], 1)
    n, c, h, w = out2.shape
    out2 = jax.nn.softmax(out2.reshape(n, c, h * w), axis=2).reshape(n, c, h, w)
    gmap = jnp.max(out2, axis=1, keepdims=True)
    mask = jnp.zeros_like(gmap).at[:, :, 1:h - 1, 1:w - 1].set(1.0)
    return out2, gmap * mask


# ---------------------------------------------------------------------------
if __name__ == "__main__":
    N, IN_CH, OUT_CH, H, W = 2, 4, 8, 16, 16

    keys = jax.random.split(jax.random.PRNGKey(0), 11)
    params = {
        "w1": jax.random.normal(keys[0], (C_HIDDEN1, IN_CH, 3, 3), jnp.float32) * 0.05,
        "b1": jax.random.normal(keys[1], (C_HIDDEN1,), jnp.float32) * 0.05,
        "w_mid": jax.random.normal(keys[2], (C_HIDDEN2, C_HIDDEN1, 1, 1), jnp.float32) * 0.05,
        "b_mid": jax.random.normal(keys[3], (C_HIDDEN2,), jnp.float32) * 0.05,
        "gamma": 1.0 + 0.1 * jax.random.normal(keys[4], (C_HIDDEN2,), jnp.float32),
        "beta": 0.1 * jax.random.normal(keys[5], (C_HIDDEN2,), jnp.float32),
        "run_mean": 0.1 * jax.random.normal(keys[6], (C_HIDDEN2,), jnp.float32),
        "run_var": jax.random.uniform(keys[7], (C_HIDDEN2,), jnp.float32, 0.5, 1.5),
        "w2": jax.random.normal(keys[8], (OUT_CH, C_HIDDEN2, 3, 3), jnp.float32) * 0.05,
        "b2": jax.random.normal(keys[9], (OUT_CH,), jnp.float32) * 0.05,
    }
    x = jax.random.normal(keys[10], (N, IN_CH, H, W), jnp.float32)

    ref_out2, ref_gmap = reference_forward(x, params)

    # f32 MXU operands (exact path) — tight tolerances
    fwd_f32 = jax.jit(functools.partial(attention_forward, use_bf16=False))
    out2, global_map = fwd_f32(x, params)
    jax.block_until_ready((out2, global_map))
    assert out2.shape == (N, OUT_CH, H, W)
    assert global_map.shape == (N, 1, H, W)
    assert jnp.allclose(out2, ref_out2, atol=1e-5, rtol=1e-4)
    assert jnp.allclose(global_map, ref_gmap, atol=1e-5, rtol=1e-4)

    # bf16 MXU operands with f32 accumulation (recommended on v6e/v7x) — loose tolerances
    fwd_bf16 = jax.jit(functools.partial(attention_forward, use_bf16=True))
    out2_b, gmap_b = fwd_bf16(x, params)
    jax.block_until_ready((out2_b, gmap_b))
    assert jnp.allclose(out2_b, ref_out2, atol=1e-3, rtol=5e-2)
    assert jnp.allclose(gmap_b, ref_gmap, atol=1e-3, rtol=5e-2)

    print("KERNEL_OK")
</pallas_src>

<mosaic_0001>
module attributes {stable_mosaic.version = 11 : i64} {
  func.func @_attention_fused_kernel(%arg0: i32, %arg1: memref<1x36x256xf32, #tpu.memory_space<vmem>>, %arg2: memref<512x36xf32, #tpu.memory_space<vmem>>, %arg3: memref<512x1xf32, #tpu.memory_space<vmem>>, %arg4: memref<128x512xf32, #tpu.memory_space<vmem>>, %arg5: memref<128x1xf32, #tpu.memory_space<vmem>>, %arg6: memref<128x1xf32, #tpu.memory_space<vmem>>, %arg7: memref<8x1152xf32, #tpu.memory_space<vmem>>, %arg8: memref<8x1xf32, #tpu.memory_space<vmem>>, %arg9: memref<1x256xf32, #tpu.memory_space<vmem>>, %arg10: memref<1x8x256xf32, #tpu.memory_space<vmem>>, %arg11: memref<1x1x256xf32, #tpu.memory_space<vmem>>, %arg12: memref<512x256xf32, #tpu.memory_space<vmem>>, %arg13: memref<128x512xf32, #tpu.memory_space<vmem>>, %arg14: memref<1152x256xf32, #tpu.memory_space<vmem>>) attributes {dimension_semantics = [#tpu.dimension_semantics<parallel>], iteration_bounds = array<i64: 2>, scalar_prefetch = 0 : i64, scratch_operands = 3 : i64, tpu.core_type = #tpu.core_type<tc>, window_params = [{transform_indices = @transform_0, window_bounds = array<i64: 1, 36, 256>}, {pipeline_mode = #tpu.pipeline_mode<synchronous>, transform_indices = @transform_1, window_bounds = array<i64: 512, 36>}, {pipeline_mode = #tpu.pipeline_mode<synchronous>, transform_indices = @transform_2, window_bounds = array<i64: 512, 1>}, {pipeline_mode = #tpu.pipeline_mode<synchronous>, transform_indices = @transform_3, window_bounds = array<i64: 128, 512>}, {pipeline_mode = #tpu.pipeline_mode<synchronous>, transform_indices = @transform_4, window_bounds = array<i64: 128, 1>}, {pipeline_mode = #tpu.pipeline_mode<synchronous>, transform_indices = @transform_5, window_bounds = array<i64: 128, 1>}, {pipeline_mode = #tpu.pipeline_mode<synchronous>, transform_indices = @transform_6, window_bounds = array<i64: 8, 1152>}, {pipeline_mode = #tpu.pipeline_mode<synchronous>, transform_indices = @transform_7, window_bounds = array<i64: 8, 1>}, {pipeline_mode = #tpu.pipeline_mode<synchronous>, transform_indices = @transform_8, window_bounds = array<i64: 1, 256>}, {transform_indices = @transform_9, window_bounds = array<i64: 1, 8, 256>}, {transform_indices = @transform_10, window_bounds = array<i64: 1, 1, 256>}]} {
    %c0 = arith.constant 0 : index
    %c0_0 = arith.constant 0 : index
    %0 = vector.load %arg2[%c0, %c0_0] : memref<512x36xf32, #tpu.memory_space<vmem>>, vector<512x36xf32>
    %c0_1 = arith.constant 0 : index
    %c0_2 = arith.constant 0 : index
    %c0_3 = arith.constant 0 : index
    %1 = vector.load %arg1[%c0_1, %c0_2, %c0_3] : memref<1x36x256xf32, #tpu.memory_space<vmem>>, vector<1x36x256xf32>
    %2 = vector.shape_cast %1 : vector<1x36x256xf32> to vector<36x256xf32>
    %cst = arith.constant dense<0.000000e+00> : vector<512x256xf32>
    %3 = tpu.matmul %0, %2, %cst {dimension_numbers = #tpu.dot_dimension_numbers<[1], [0], [0], [1], [0, 0, 1, 1], [], []>} : vector<512x36xf32>, vector<36x256xf32>, vector<512x256xf32> -> vector<512x256xf32>
    %c0_4 = arith.constant 0 : index
    %c0_5 = arith.constant 0 : index
    %4 = vector.load %arg3[%c0_4, %c0_5] : memref<512x1xf32, #tpu.memory_space<vmem>>, vector<512x1xf32>
    %5 = vector.broadcast %4 : vector<512x1xf32> to vector<512x256xf32>
    %6 = arith.addf %3, %5 : vector<512x256xf32>
    %cst_6 = arith.constant 0.000000e+00 : f32
    %7 = vector.broadcast %cst_6 : f32 to vector<512x256xf32>
    %8 = arith.maximumf %6, %7 : vector<512x256xf32>
    %c0_7 = arith.constant 0 : index
    %c0_8 = arith.constant 0 : index
    %9 = vector.load %arg12[%c0_7, %c0_8] : memref<512x256xf32, #tpu.memory_space<vmem>>, vector<512x256xf32>
    tpu.vector_store %arg12[%c0_7, %c0_8], %8 {strides = array<i32>} : memref<512x256xf32, #tpu.memory_space<vmem>>, vector<512x256xf32>,
    %c0_9 = arith.constant 0 : index
    %c0_10 = arith.constant 0 : index
    %10 = vector.load %arg4[%c0_9, %c0_10] : memref<128x512xf32, #tpu.memory_space<vmem>>, vector<128x512xf32>
    %c0_11 = arith.constant 0 : index
    %c0_12 = arith.constant 0 : index
    %11 = vector.load %arg12[%c0_11, %c0_12] : memref<512x256xf32, #tpu.memory_space<vmem>>, vector<512x256xf32>
    %cst_13 = arith.constant dense<0.000000e+00> : vector<128x256xf32>
    %12 = tpu.matmul %10, %11, %cst_13 {dimension_numbers = #tpu.dot_dimension_numbers<[1], [0], [0], [1], [0, 0, 1, 1], [], []>} : vector<128x512xf32>, vector<512x256xf32>, vector<128x256xf32> -> vector<128x256xf32>
    %c0_14 = arith.constant 0 : index
    %c0_15 = arith.constant 0 : index
    %13 = vector.load %arg5[%c0_14, %c0_15] : memref<128x1xf32, #tpu.memory_space<vmem>>, vector<128x1xf32>
    %14 = vector.broadcast %13 : vector<128x1xf32> to vector<128x256xf32>
    %15 = arith.mulf %12, %14 : vector<128x256xf32>
    %c0_16 = arith.constant 0 : index
    %c0_17 = arith.constant 0 : index
    %16 = vector.load %arg6[%c0_16, %c0_17] : memref<128x1xf32, #tpu.memory_space<vmem>>, vector<128x1xf32>
    %17 = vector.broadcast %16 : vector<128x1xf32> to vector<128x256xf32>
    %18 = arith.addf %15, %17 : vector<128x256xf32>
    %cst_18 = arith.constant 0.000000e+00 : f32
    %19 = vector.broadcast %cst_18 : f32 to vector<128x256xf32>
    %20 = arith.maximumf %18, %19 : vector<128x256xf32>
    %cst_19 = arith.constant 0.000000e+00 : f32
    %21 = vector.broadcast %cst_19 : f32 to vector<128x512xf32>
    %c0_20 = arith.constant 0 : index
    %c0_21 = arith.constant 0 : index
    %22 = vector.load %arg13[%c0_20, %c0_21] : memref<128x512xf32, #tpu.memory_space<vmem>>, vector<128x512xf32>
    tpu.vector_store %arg13[%c0_20, %c0_21], %21 {strides = array<i32>} : memref<128x512xf32, #tpu.memory_space<vmem>>, vector<128x512xf32>,
    %c0_22 = arith.constant 0 : index
    %c128 = arith.constant 128 : index
    %23 = vector.load %arg13[%c0_22, %c128] : memref<128x512xf32, #tpu.memory_space<vmem>>, vector<128x256xf32>
    tpu.vector_store %arg13[%c0_22, %c128], %20 {strides = array<i32>} : memref<128x512xf32, #tpu.memory_space<vmem>>, vector<128x256xf32>,
    %24 = tpu.iota {dimensions = array<i32: 1>} : vector<1x256xi32>
    %c16_i32 = arith.constant 16 : i32
    %c0_i32 = arith.constant 0 : i32
    %25 = arith.cmpi eq, %c16_i32, %c0_i32 : i32
    %c1_i32 = arith.constant 1 : i32
    %26 = arith.select %25, %c1_i32, %c16_i32 : i32
    %27 = vector.broadcast %26 : i32 to vector<1x256xi32>
    %28 = arith.remsi %24, %27 : vector<1x256xi32>
    %c0_i32_23 = arith.constant 0 : i32
    %29 = vector.broadcast %c0_i32_23 : i32 to vector<1x256xi32>
    %30 = arith.cmpi ne, %28, %29 : vector<1x256xi32>
    %c0_i32_24 = arith.constant 0 : i32
    %31 = vector.broadcast %c0_i32_24 : i32 to vector<1x256xi32>
    %32 = arith.cmpi slt, %28, %31 : vector<1x256xi32>
    %c0_i32_25 = arith.constant 0 : i32
    %33 = arith.cmpi slt, %26, %c0_i32_25 : i32
    %34 = vector.broadcast %33 : i1 to vector<1x256xi1>
    %35 = vector.broadcast %34 : vector<1x256xi1> to vector<1x256xi1>
    %36 = arith.xori %32, %35 : vector<1x256xi1>
    %37 = arith.andi %36, %30 : vector<1x256xi1>
    %38 = vector.broadcast %26 : i32 to vector<1x256xi32>
    %39 = arith.addi %28, %38 : vector<1x256xi32>
    %40 = arith.select %37, %39, %28 : vector<1x256xi1>, vector<1x256xi32>
    %c1_i32_26 = arith.constant 1 : i32
    %41 = vector.broadcast %c1_i32_26 : i32 to vector<1x256xi32>
    %42 = arith.cmpi sge, %40, %41 : vector<1x256xi32>
    %c14_i32 = arith.constant 14 : i32
    %43 = vector.broadcast %c14_i32 : i32 to vector<1x256xi32>
    %44 = arith.cmpi sle, %40, %43 : vector<1x256xi32>
    %c0_27 = arith.constant 0 : index
    %c111 = arith.constant 111 : index
    %45 = vector.load %arg13[%c0_27, %c111] : memref<128x512xf32, #tpu.memory_space<vmem>>, vector<128x256xf32>
    %cst_28 = arith.constant 0.000000e+00 : f32
    %46 = vector.shape_cast %42 : vector<1x256xi1> to vector<1x256xi1>
    %47 = vector.broadcast %46 : vector<1x256xi1> to vector<128x256xi1>
    %48 = vector.broadcast %cst_28 : f32 to vector<128x256xf32>
    %49 = arith.select %47, %45, %48 : vector<128x256xi1>, vector<128x256xf32>
    %c0_29 = arith.constant 0 : index
    %c0_30 = arith.constant 0 : index
    %50 = vector.load %arg14[%c0_29, %c0_30] : memref<1152x256xf32, #tpu.memory_space<vmem>>, vector<128x256xf32>
    tpu.vector_store %arg14[%c0_29, %c0_30], %49 {strides = array<i32>} : memref<1152x256xf32, #tpu.memory_space<vmem>>, vector<128x256xf32>,
    %c0_31 = arith.constant 0 : index
    %c112 = arith.constant 112 : index
    %51 = vector.load %arg13[%c0_31, %c112] : memref<128x512xf32, #tpu.memory_space<vmem>>, vector<128x256xf32>
    %c128_32 = arith.constant 128 : index
    %c0_33 = arith.constant 0 : index
    %52 = vector.load %arg14[%c128_32, %c0_33] : memref<1152x256xf32, #tpu.memory_space<vmem>>, vector<128x256xf32>
    tpu.vector_store %arg14[%c128_32, %c0_33], %51 {strides = array<i32>} : memref<1152x256xf32, #tpu.memory_space<vmem>>, vector<128x256xf32>,
    %c0_34 = arith.constant 0 : index
    %c113 = arith.constant 113 : index
    %53 = vector.load %arg13[%c0_34, %c113] : memref<128x512xf32, #tpu.memory_space<vmem>>, vector<128x256xf32>
    %cst_35 = arith.constant 0.000000e+00 : f32
    %54 = vector.shape_cast %44 : vector<1x256xi1> to vector<1x256xi1>
    %55 = vector.broadcast %54 : vector<1x256xi1> to vector<128x256xi1>
    %56 = vector.broadcast %cst_35 : f32 to vector<128x256xf32>
    %57 = arith.select %55, %53, %56 : vector<128x256xi1>, vector<128x256xf32>
    %c256 = arith.constant 256 : index
    %c0_36 = arith.constant 0 : index
    %58 = vector.load %arg14[%c256, %c0_36] : memref<1152x256xf32, #tpu.memory_space<vmem>>, vector<128x256xf32>
    tpu.vector_store %arg14[%c256, %c0_36], %57 {strides = array<i32>} : memref<1152x256xf32, #tpu.memory_space<vmem>>, vector<128x256xf32>,
    %c0_37 = arith.constant 0 : index
    %c127 = arith.constant 127 : index
    %59 = vector.load %arg13[%c0_37, %c127] : memref<128x512xf32, #tpu.memory_space<vmem>>, vector<128x256xf32>
    %cst_38 = arith.constant 0.000000e+00 : f32
    %60 = vector.shape_cast %42 : vector<1x256xi1> to vector<1x256xi1>
    %61 = vector.broadcast %60 : vector<1x256xi1> to vector<128x256xi1>
    %62 = vector.broadcast %cst_38 : f32 to vector<128x256xf32>
    %63 = arith.select %61, %59, %62 : vector<128x256xi1>, vector<128x256xf32>
    %c384 = arith.constant 384 : index
    %c0_39 = arith.constant 0 : index
    %64 = vector.load %arg14[%c384, %c0_39] : memref<1152x256xf32, #tpu.memory_space<vmem>>, vector<128x256xf32>
    tpu.vector_store %arg14[%c384, %c0_39], %63 {strides = array<i32>} : memref<1152x256xf32, #tpu.memory_space<vmem>>, vector<128x256xf32>,
    %c0_40 = arith.constant 0 : index
    %c128_41 = arith.constant 128 : index
    %65 = vector.load %arg13[%c0_40, %c128_41] : memref<128x512xf32, #tpu.memory_space<vmem>>, vector<128x256xf32>
    %c512 = arith.constant 512 : index
    %c0_42 = arith.constant 0 : index
    %66 = vector.load %arg14[%c512, %c0_42] : memref<1152x256xf32, #tpu.memory_space<vmem>>, vector<128x256xf32>
    tpu.vector_store %arg14[%c512, %c0_42], %65 {strides = array<i32>} : memref<1152x256xf32, #tpu.memory_space<vmem>>, vector<128x256xf32>,
    %c0_43 = arith.constant 0 : index
    %c129 = arith.constant 129 : index
    %67 = vector.load %arg13[%c0_43, %c129] : memref<128x512xf32, #tpu.memory_space<vmem>>, vector<128x256xf32>
    %cst_44 = arith.constant 0.000000e+00 : f32
    %68 = vector.shape_cast %44 : vector<1x256xi1> to vector<1x256xi1>
    %69 = vector.broadcast %68 : vector<1x256xi1> to vector<128x256xi1>
    %70 = vector.broadcast %cst_44 : f32 to vector<128x256xf32>
    %71 = arith.select %69, %67, %70 : vector<128x256xi1>, vector<128x256xf32>
    %c640 = arith.constant 640 : index
    %c0_45 = arith.constant 0 : index
    %72 = vector.load %arg14[%c640, %c0_45] : memref<1152x256xf32, #tpu.memory_space<vmem>>, vector<128x256xf32>
    tpu.vector_store %arg14[%c640, %c0_45], %71 {strides = array<i32>} : memref<1152x256xf32, #tpu.memory_space<vmem>>, vector<128x256xf32>,
    %c0_46 = arith.constant 0 : index
    %c143 = arith.constant 143 : index
    %73 = vector.load %arg13[%c0_46, %c143] : memref<128x512xf32, #tpu.memory_space<vmem>>, vector<128x256xf32>
    %cst_47 = arith.constant 0.000000e+00 : f32
    %74 = vector.shape_cast %42 : vector<1x256xi1> to vector<1x256xi1>
    %75 = vector.broadcast %74 : vector<1x256xi1> to vector<128x256xi1>
    %76 = vector.broadcast %cst_47 : f32 to vector<128x256xf32>
    %77 = arith.select %75, %73, %76 : vector<128x256xi1>, vector<128x256xf32>
    %c768 = arith.constant 768 : index
    %c0_48 = arith.constant 0 : index
    %78 = vector.load %arg14[%c768, %c0_48] : memref<1152x256xf32, #tpu.memory_space<vmem>>, vector<128x256xf32>
    tpu.vector_store %arg14[%c768, %c0_48], %77 {strides = array<i32>} : memref<1152x256xf32, #tpu.memory_space<vmem>>, vector<128x256xf32>,
    %c0_49 = arith.constant 0 : index
    %c144 = arith.constant 144 : index
    %79 = vector.load %arg13[%c0_49, %c144] : memref<128x512xf32, #tpu.memory_space<vmem>>, vector<128x256xf32>
    %c896 = arith.constant 896 : index
    %c0_50 = arith.constant 0 : index
    %80 = vector.load %arg14[%c896, %c0_50] : memref<1152x256xf32, #tpu.memory_space<vmem>>, vector<128x256xf32>
    tpu.vector_store %arg14[%c896, %c0_50], %79 {strides = array<i32>} : memref<1152x256xf32, #tpu.memory_space<vmem>>, vector<128x256xf32>,
    %c0_51 = arith.constant 0 : index
    %c145 = arith.constant 145 : index
    %81 = vector.load %arg13[%c0_51, %c145] : memref<128x512xf32, #tpu.memory_space<vmem>>, vector<128x256xf32>
    %cst_52 = arith.constant 0.000000e+00 : f32
    %82 = vector.shape_cast %44 : vector<1x256xi1> to vector<1x256xi1>
    %83 = vector.broadcast %82 : vector<1x256xi1> to vector<128x256xi1>
    %84 = vector.broadcast %cst_52 : f32 to vector<128x256xf32>
    %85 = arith.select %83, %81, %84 : vector<128x256xi1>, vector<128x256xf32>
    %c1024 = arith.constant 1024 : index
    %c0_53 = arith.constant 0 : index
    %86 = vector.load %arg14[%c1024, %c0_53] : memref<1152x256xf32, #tpu.memory_space<vmem>>, vector<128x256xf32>
    tpu.vector_store %arg14[%c1024, %c0_53], %85 {strides = array<i32>} : memref<1152x256xf32, #tpu.memory_space<vmem>>, vector<128x256xf32>,
    %c0_54 = arith.constant 0 : index
    %c0_55 = arith.constant 0 : index
    %87 = vector.load %arg7[%c0_54, %c0_55] : memref<8x1152xf32, #tpu.memory_space<vmem>>, vector<8x1152xf32>
    %c0_56 = arith.constant 0 : index
    %c0_57 = arith.constant 0 : index
    %88 = vector.load %arg14[%c0_56, %c0_57] : memref<1152x256xf32, #tpu.memory_space<vmem>>, vector<1152x256xf32>
    %cst_58 = arith.constant dense<0.000000e+00> : vector<8x256xf32>
    %89 = tpu.matmul %87, %88, %cst_58 {dimension_numbers = #tpu.dot_dimension_numbers<[1], [0], [0], [1], [0, 0, 1, 1], [], []>} : vector<8x1152xf32>, vector<1152x256xf32>, vector<8x256xf32> -> vector<8x256xf32>
    %c0_59 = arith.constant 0 : index
    %c0_60 = arith.constant 0 : index
    %90 = vector.load %arg8[%c0_59, %c0_60] : memref<8x1xf32, #tpu.memory_space<vmem>>, vector<8x1xf32>
    %91 = vector.broadcast %90 : vector<8x1xf32> to vector<8x256xf32>
    %92 = arith.addf %89, %91 : vector<8x256xf32>
    %cst_61 = arith.constant dense<0xFF800000> : vector<8xf32>
    %93 = vector.multi_reduction <maximumf>, %92, %cst_61 [1] : vector<8x256xf32> to vector<8xf32>
    %94 = vector.shape_cast %93 : vector<8xf32> to vector<8x1xf32>
    %95 = vector.broadcast %94 : vector<8x1xf32> to vector<8x256xf32>
    %96 = arith.subf %92, %95 : vector<8x256xf32>
    %97 = math.exp %96 : vector<8x256xf32>
    %cst_62 = arith.constant dense<0.000000e+00> : vector<8xf32>
    %98 = vector.multi_reduction <add>, %97, %cst_62 [1] : vector<8x256xf32> to vector<8xf32>
    %99 = vector.shape_cast %98 : vector<8xf32> to vector<8x1xf32>
    %100 = tpu.reciprocal %99 : vector<8x1xf32> -> vector<8x1xf32>
    %101 = vector.broadcast %100 : vector<8x1xf32> to vector<8x256xf32>
    %102 = arith.mulf %97, %101 : vector<8x256xf32>
    %c0_63 = arith.constant 0 : index
    %c0_64 = arith.constant 0 : index
    %c0_65 = arith.constant 0 : index
    %103 = vector.load %arg10[%c0_63, %c0_64, %c0_65] : memref<1x8x256xf32, #tpu.memory_space<vmem>>, vector<1x8x256xf32>
    %104 = vector.shape_cast %103 : vector<1x8x256xf32> to vector<8x256xf32>
    %105 = vector.shape_cast %102 : vector<8x256xf32> to vector<1x8x256xf32>
    tpu.vector_store %arg10[%c0_63, %c0_64, %c0_65], %105 {strides = array<i32>} : memref<1x8x256xf32, #tpu.memory_space<vmem>>, vector<1x8x256xf32>,
    %cst_66 = arith.constant dense<0xFF800000> : vector<256xf32>
    %106 = vector.multi_reduction <maximumf>, %102, %cst_66 [0] : vector<8x256xf32> to vector<256xf32>
    %107 = vector.shape_cast %106 : vector<256xf32> to vector<1x256xf32>
    %c0_67 = arith.constant 0 : index
    %c0_68 = arith.constant 0 : index
    %108 = vector.load %arg9[%c0_67, %c0_68] : memref<1x256xf32, #tpu.memory_space<vmem>>, vector<1x256xf32>
    %109 = arith.mulf %107, %108 : vector<1x256xf32>
    %c0_69 = arith.constant 0 : index
    %c0_70 = arith.constant 0 : index
    %c0_71 = arith.constant 0 : index
    %110 = vector.load %arg11[%c0_69, %c0_70, %c0_71] : memref<1x1x256xf32, #tpu.memory_space<vmem>>, vector<1x1x256xf32>
    %111 = vector.shape_cast %110 : vector<1x1x256xf32> to vector<1x256xf32>
    %112 = vector.shape_cast %109 : vector<1x256xf32> to vector<1x1x256xf32>
    tpu.vector_store %arg11[%c0_69, %c0_70, %c0_71], %112 {strides = array<i32>} : memref<1x1x256xf32, #tpu.memory_space<vmem>>, vector<1x1x256xf32>,
    return
  }
  func.func @transform_0(%arg0: i32) -> (i32, i32, i32) {
    %c0_i32 = arith.constant 0 : i32
    %c0_i32_0 = arith.constant 0 : i32
    %c0_i32_1 = arith.constant 0 : i32
    return %arg0, %c0_i32, %c0_i32_0 : i32, i32, i32
  }
  func.func @transform_1(%arg0: i32) -> (i32, i32) {
    %c0_i32 = arith.constant 0 : i32
    %c0_i32_0 = arith.constant 0 : i32
    %c0_i32_1 = arith.constant 0 : i32
    return %c0_i32, %c0_i32_0 : i32, i32
  }
  func.func @transform_2(%arg0: i32) -> (i32, i32) {
    %c0_i32 = arith.constant 0 : i32
    %c0_i32_0 = arith.constant 0 : i32
    %c0_i32_1 = arith.constant 0 : i32
    return %c0_i32, %c0_i32_0 : i32, i32
  }
  func.func @transform_3(%arg0: i32) -> (i32, i32) {
    %c0_i32 = arith.constant 0 : i32
    %c0_i32_0 = arith.constant 0 : i32
    %c0_i32_1 = arith.constant 0 : i32
    return %c0_i32, %c0_i32_0 : i32, i32
  }
  func.func @transform_4(%arg0: i32) -> (i32, i32) {
    %c0_i32 = arith.constant 0 : i32
    %c0_i32_0 = arith.constant 0 : i32
    %c0_i32_1 = arith.constant 0 : i32
    return %c0_i32, %c0_i32_0 : i32, i32
  }
  func.func @transform_5(%arg0: i32) -> (i32, i32) {
    %c0_i32 = arith.constant 0 : i32
    %c0_i32_0 = arith.constant 0 : i32
    %c0_i32_1 = arith.constant 0 : i32
    return %c0_i32, %c0_i32_0 : i32, i32
  }
  func.func @transform_6(%arg0: i32) -> (i32, i32) {
    %c0_i32 = arith.constant 0 : i32
    %c0_i32_0 = arith.constant 0 : i32
    %c0_i32_1 = arith.constant 0 : i32
    return %c0_i32, %c0_i32_0 : i32, i32
  }
  func.func @transform_7(%arg0: i32) -> (i32, i32) {
    %c0_i32 = arith.constant 0 : i32
    %c0_i32_0 = arith.constant 0 : i32
    %c0_i32_1 = arith.constant 0 : i32
    return %c0_i32, %c0_i32_0 : i32, i32
  }
  func.func @transform_8(%arg0: i32) -> (i32, i32) {
    %c0_i32 = arith.constant 0 : i32
    %c0_i32_0 = arith.constant 0 : i32
    %c0_i32_1 = arith.constant 0 : i32
    return %c0_i32, %c0_i32_0 : i32, i32
  }
  func.func @transform_9(%arg0: i32) -> (i32, i32, i32) {
    %c0_i32 = arith.constant 0 : i32
    %c0_i32_0 = arith.constant 0 : i32
    %c0_i32_1 = arith.constant 0 : i32
    return %arg0, %c0_i32, %c0_i32_0 : i32, i32, i32
  }
  func.func @transform_10(%arg0: i32) -> (i32, i32, i32) {
    %c0_i32 = arith.constant 0 : i32
    %c0_i32_0 = arith.constant 0 : i32
    %c0_i32_1 = arith.constant 0 : i32
    return %arg0, %c0_i32, %c0_i32_0 : i32, i32, i32
  }
}

</mosaic_0001>

<llo_original>
// kernel: attention_forward.1
$region0: #{attention_forward.1}
  #allocation0 [shape = 'u32[]', space=smem, size = 0x4, offset = 0x4, fixed_abs, tag = 'smem constant byte address 0x4 - core index']
  #allocation1 [shape = 'u32[144,128]{1,0:T(1,128)}', space=vmem, size = 0x12000, scoped, tag = 'internal scratch']
  #allocation2 [shape = 'f32[512,256]{1,0:T(8,128)}', space=vmem, size = 0x80000, scoped, tag = 'scratch operand']
  #allocation3 [shape = 'f32[128,512]{1,0:T(8,128)}', space=vmem, size = 0x40000, scoped, tag = 'scratch operand']
  #allocation4 [shape = 'f32[1152,256]{1,0:T(8,128)}', space=vmem, size = 0x120000, scoped, tag = 'scratch operand']
  %s0 = inlined_call_operand.vmem [shape: f32[2,36,256], index: 0, kind: input, shape index: {}]
  %s1 = inlined_call_operand.vmem [shape: f32[512,36], index: 1, kind: input, shape index: {}]
  %s2 = inlined_call_operand.vmem [shape: f32[512,1], index: 2, kind: input, shape index: {}]
  %s3 = inlined_call_operand.vmem [shape: f32[128,512], index: 3, kind: input, shape index: {}]
  %s4 = inlined_call_operand.vmem [shape: f32[128,1], index: 4, kind: input, shape index: {}]
  %s5 = inlined_call_operand.vmem [shape: f32[128,1], index: 5, kind: input, shape index: {}]
  %s6 = inlined_call_operand.vmem [shape: f32[8,1152], index: 6, kind: input, shape index: {}]
  %s7 = inlined_call_operand.vmem [shape: f32[8,1], index: 7, kind: input, shape index: {}]
  %s8 = inlined_call_operand.vmem [shape: f32[1,256], index: 8, kind: input, shape index: {}]
  %s9 = inlined_call_operand.vmem [shape: f32[2,8,256], index: 9, kind: output, shape index: {0}]
  %s10 = inlined_call_operand.vmem [shape: f32[2,1,256], index: 10, kind: output, shape index: {1}]
  %11 = xla_tuple %s9, %s10
  %s12 = sld [smem:[#allocation0]]
  $region77: #{attention_forward.1} parent=0
    _
  %s14 = ssub.s32 1, %s12
  %s15 = scalar_select 0, %s14, %s12
  loop: start=0, step=1, limit=4
  $region2: #{attention_forward.1} parent=0 // loop_pre_header
    _
  $region3: #{attention_forward.1} parent=0 // loop_header
    %s17 = sphi 0, %s21
    %p18 = scmp.ge.s32.totalorder %s17, 4
    %s27 = sphi 0, %s29
    %s30 = sphi 0, %s27
    %s31 = sphi 0, %s30
    %s47 = sphi 0, %s31
    %s51 = sphi 0, %s51
    %s53 = sphi 0, %s51
    %s54 = sphi 0, %s53
    %s68 = sphi 0, %s54
    %s72 = sphi 0, %s72
    %s74 = sphi 0, %s72
    %s75 = sphi 0, %s74
    %s89 = sphi 0, %s75
    %s93 = sphi 0, %s93
    %s95 = sphi 0, %s93
    %s96 = sphi 0, %s95
    %s110 = sphi 0, %s96
    %s114 = sphi 0, %s114
    %s116 = sphi 0, %s114
    %s117 = sphi 0, %s116
    %s131 = sphi 0, %s117
    %s135 = sphi 0, %s135
    %s137 = sphi 0, %s135
    %s138 = sphi 0, %s137
    %s152 = sphi 0, %s138
    %s156 = sphi 0, %s156
    %s158 = sphi 0, %s156
    %s159 = sphi 0, %s158
    %s173 = sphi 0, %s159
    %s177 = sphi 0, %s177
    %s179 = sphi 0, %s177
    %s180 = sphi 0, %s179
    %s194 = sphi 0, %s180
    %s198 = sphi 0, %s198
    %s200 = sphi 0, %s198
    %s201 = sphi 0, %s200
    %s215 = sphi 0, %s201
    %s221 = sphi 0, %s223
    %s224 = sphi 0, %s221
    %s225 = sphi 0, %s224
    %s241 = sphi 0, %s225
    %s247 = sphi 0, %s249
    %s250 = sphi 0, %s247
    %s251 = sphi 0, %s250
    %s267 = sphi 0, %s251
  $region4: #{attention_forward.1} parent=0 // loop_header_branch
    %20 = sbr.rel (%p18) target = $region8
  $region5: #{attention_forward.1} parent=0 // loop_body
    %s22 = ssub.s32 %s17, 1
    %s23 = ssub.s32 %s17, 2
    %s24 = sadd.s32 %s17, 1
    %s25 = ssub.s32 %s17, %s24
    %p26 = scmp.eq.s32.totalorder %s25, 0
    %s28 = sadd.s32 %s27, 1
    %s29 = scalar_select %p26, %s27, %s28
    %p32 = pneg %p26
    %p33 = scmp.eq.s32.totalorder %s17, 1
    %p34 = por %p32, %p33
    %p35 = scmp.ne.s32.totalorder %s27, %s30
    %p36 = scmp.eq.s32.totalorder %s17, 0
    %p37 = por %p35, %p36
    %p38 = scmp.ne.s32.totalorder %s27, %s30
    %p39 = scmp.eq.s32.totalorder %s22, 1
    %p40 = por %p38, %p39
    %p41 = scmp.ne.s32.totalorder %s30, %s31
    %p42 = scmp.eq.s32.totalorder %s22, 0
    %p43 = por %p41, %p42
    %p44 = scmp.ne.s32.totalorder %s30, %s31
    %p45 = scmp.eq.s32.totalorder %s23, 1
    %p46 = por %p44, %p45
    %p48 = scmp.ne.s32.totalorder %s31, %s47
    %p49 = scmp.eq.s32.totalorder %s23, 0
    %p50 = por %p48, %p49
    %s52 = sadd.s32 %s51, 1
    %p55 = scmp.eq.s32.totalorder %s17, 1
    %p56 = scmp.ne.s32.totalorder %s51, %s53
    %p57 = scmp.eq.s32.totalorder %s17, 0
    %p58 = por %p56, %p57
    %p59 = scmp.ne.s32.totalorder %s51, %s53
    %p60 = scmp.eq.s32.totalorder %s22, 1
    %p61 = por %p59, %p60
    %p62 = scmp.ne.s32.totalorder %s53, %s54
    %p63 = scmp.eq.s32.totalorder %s22, 0
    %p64 = por %p62, %p63
    %p65 = scmp.ne.s32.totalorder %s53, %s54
    %p66 = scmp.eq.s32.totalorder %s23, 1
    %p67 = por %p65, %p66
    %p69 = scmp.ne.s32.totalorder %s54, %s68
    %p70 = scmp.eq.s32.totalorder %s23, 0
    %p71 = por %p69, %p70
    %s73 = sadd.s32 %s72, 1
    %p76 = scmp.eq.s32.totalorder %s17, 1
    %p77 = scmp.ne.s32.totalorder %s72, %s74
    %p78 = scmp.eq.s32.totalorder %s17, 0
    %p79 = por %p77, %p78
    %p80 = scmp.ne.s32.totalorder %s72, %s74
    %p81 = scmp.eq.s32.totalorder %s22, 1
    %p82 = por %p80, %p81
    %p83 = scmp.ne.s32.totalorder %s74, %s75
    %p84 = scmp.eq.s32.totalorder %s22, 0
    %p85 = por %p83, %p84
    %p86 = scmp.ne.s32.totalorder %s74, %s75
    %p87 = scmp.eq.s32.totalorder %s23, 1
    %p88 = por %p86, %p87
    %p90 = scmp.ne.s32.totalorder %s75, %s89
    %p91 = scmp.eq.s32.totalorder %s23, 0
    %p92 = por %p90, %p91
    %s94 = sadd.s32 %s93, 1
    %p97 = scmp.eq.s32.totalorder %s17, 1
    %p98 = scmp.ne.s32.totalorder %s93, %s95
    %p99 = scmp.eq.s32.totalorder %s17, 0
    %p100 = por %p98, %p99
    %p101 = scmp.ne.s32.totalorder %s93, %s95
    %p102 = scmp.eq.s32.totalorder %s22, 1
    %p103 = por %p101, %p102
    %p104 = scmp.ne.s32.totalorder %s95, %s96
    %p105 = scmp.eq.s32.totalorder %s22, 0
    %p106 = por %p104, %p105
    %p107 = scmp.ne.s32.totalorder %s95, %s96
    %p108 = scmp.eq.s32.totalorder %s23, 1
    %p109 = por %p107, %p108
    %p111 = scmp.ne.s32.totalorder %s96, %s110
    %p112 = scmp.eq.s32.totalorder %s23, 0
    %p113 = por %p111, %p112
    %s115 = sadd.s32 %s114, 1
    %p118 = scmp.eq.s32.totalorder %s17, 1
    %p119 = scmp.ne.s32.totalorder %s114, %s116
    %p120 = scmp.eq.s32.totalorder %s17, 0
    %p121 = por %p119, %p120
    %p122 = scmp.ne.s32.totalorder %s114, %s116
    %p123 = scmp.eq.s32.totalorder %s22, 1
    %p124 = por %p122, %p123
    %p125 = scmp.ne.s32.totalorder %s116, %s117
    %p126 = scmp.eq.s32.totalorder %s22, 0
    %p127 = por %p125, %p126
    %p128 = scmp.ne.s32.totalorder %s116, %s117
    %p129 = scmp.eq.s32.totalorder %s23, 1
    %p130 = por %p128, %p129
    %p132 = scmp.ne.s32.totalorder %s117, %s131
    %p133 = scmp.eq.s32.totalorder %s23, 0
    %p134 = por %p132, %p133
    %s136 = sadd.s32 %s135, 1
    %p139 = scmp.eq.s32.totalorder %s17, 1
    %p140 = scmp.ne.s32.totalorder %s135, %s137
    %p141 = scmp.eq.s32.totalorder %s17, 0
    %p142 = por %p140, %p141
    %p143 = scmp.ne.s32.totalorder %s135, %s137
    %p144 = scmp.eq.s32.totalorder %s22, 1
    %p145 = por %p143, %p144
    %p146 = scmp.ne.s32.totalorder %s137, %s138
    %p147 = scmp.eq.s32.totalorder %s22, 0
    %p148 = por %p146, %p147
    %p149 = scmp.ne.s32.totalorder %s137, %s138
    %p150 = scmp.eq.s32.totalorder %s23, 1
    %p151 = por %p149, %p150
    %p153 = scmp.ne.s32.totalorder %s138, %s152
    %p154 = scmp.eq.s32.totalorder %s23, 0
    %p155 = por %p153, %p154
    %s157 = sadd.s32 %s156, 1
    %p160 = scmp.eq.s32.totalorder %s17, 1
    %p161 = scmp.ne.s32.totalorder %s156, %s158
    %p162 = scmp.eq.s32.totalorder %s17, 0
    %p163 = por %p161, %p162
    %p164 = scmp.ne.s32.totalorder %s156, %s158
    %p165 = scmp.eq.s32.totalorder %s22, 1
    %p166 = por %p164, %p165
    %p167 = scmp.ne.s32.totalorder %s158, %s159
    %p168 = scmp.eq.s32.totalorder %s22, 0
    %p169 = por %p167, %p168
    %p170 = scmp.ne.s32.totalorder %s158, %s159
    %p171 = scmp.eq.s32.totalorder %s23, 1
    %p172 = por %p170, %p171
    %p174 = scmp.ne.s32.totalorder %s159, %s173
    %p175 = scmp.eq.s32.totalorder %s23, 0
    %p176 = por %p174, %p175
    %s178 = sadd.s32 %s177, 1
    %p181 = scmp.eq.s32.totalorder %s17, 1
    %p182 = scmp.ne.s32.totalorder %s177, %s179
    %p183 = scmp.eq.s32.totalorder %s17, 0
    %p184 = por %p182, %p183
    %p185 = scmp.ne.s32.totalorder %s177, %s179
    %p186 = scmp.eq.s32.totalorder %s22, 1
    %p187 = por %p185, %p186
    %p188 = scmp.ne.s32.totalorder %s179, %s180
    %p189 = scmp.eq.s32.totalorder %s22, 0
    %p190 = por %p188, %p189
    %p191 = scmp.ne.s32.totalorder %s179, %s180
    %p192 = scmp.eq.s32.totalorder %s23, 1
    %p193 = por %p191, %p192
    %p195 = scmp.ne.s32.totalorder %s180, %s194
    %p196 = scmp.eq.s32.totalorder %s23, 0
    %p197 = por %p195, %p196
    %s199 = sadd.s32 %s198, 1
    %p202 = scmp.eq.s32.totalorder %s17, 1
    %p203 = scmp.ne.s32.totalorder %s198, %s200
    %p204 = scmp.eq.s32.totalorder %s17, 0
    %p205 = por %p203, %p204
    %p206 = scmp.ne.s32.totalorder %s198, %s200
    %p207 = scmp.eq.s32.totalorder %s22, 1
    %p208 = por %p206, %p207
    %p209 = scmp.ne.s32.totalorder %s200, %s201
    %p210 = scmp.eq.s32.totalorder %s22, 0
    %p211 = por %p209, %p210
    %p212 = scmp.ne.s32.totalorder %s200, %s201
    %p213 = scmp.eq.s32.totalorder %s23, 1
    %p214 = por %p212, %p213
    %p216 = scmp.ne.s32.totalorder %s201, %s215
    %p217 = scmp.eq.s32.totalorder %s23, 0
    %p218 = por %p216, %p217
    %s219 = ssub.s32 %s17, %s24
    %p220 = scmp.eq.s32.totalorder %s219, 0
    %s222 = sadd.s32 %s221, 1
    %s223 = scalar_select %p220, %s221, %s222
    %p226 = pneg %p220
    %p227 = scmp.eq.s32.totalorder %s17, 1
    %p228 = por %p226, %p227
    %p229 = scmp.ne.s32.totalorder %s221, %s224
    %p230 = scmp.eq.s32.totalorder %s17, 0
    %p231 = por %p229, %p230
    %p232 = scmp.ne.s32.totalorder %s221, %s224
    %p233 = scmp.eq.s32.totalorder %s22, 1
    %p234 = por %p232, %p233
    %p235 = scmp.ne.s32.totalorder %s224, %s225
    %p236 = scmp.eq.s32.totalorder %s22, 0
    %p237 = por %p235, %p236
    %p238 = scmp.ne.s32.totalorder %s224, %s225
    %p239 = scmp.eq.s32.totalorder %s23, 1
    %p240 = por %p238, %p239
    %p242 = scmp.ne.s32.totalorder %s225, %s241
    %p243 = scmp.eq.s32.totalorder %s23, 0
    %p244 = por %p242, %p243
    %s245 = ssub.s32 %s17, %s24
    %p246 = scmp.eq.s32.totalorder %s245, 0
    %s248 = sadd.s32 %s247, 1
    %s249 = scalar_select %p246, %s247, %s248
    %p252 = pneg %p246
    %p253 = scmp.eq.s32.totalorder %s17, 1
    %p254 = por %p252, %p253
    %p255 = scmp.ne.s32.totalorder %s247, %s250
    %p256 = scmp.eq.s32.totalorder %s17, 0
    %p257 = por %p255, %p256
    %p258 = scmp.ne.s32.totalorder %s247, %s250
    %p259 = scmp.eq.s32.totalorder %s22, 1
    %p260 = por %p258, %p259
    %p261 = scmp.ne.s32.totalorder %s250, %s251
    %p262 = scmp.eq.s32.totalorder %s22, 0
    %p263 = por %p261, %p262
    %p264 = scmp.ne.s32.totalorder %s250, %s251
    %p265 = scmp.eq.s32.totalorder %s23, 1
    %p266 = por %p264, %p265
    %p268 = scmp.ne.s32.totalorder %s251, %s267
    %p269 = scmp.eq.s32.totalorder %s23, 0
    %p270 = por %p268, %p269
    %p271 = scmp.le.s32.totalorder 1, %s17
    %p272 = scmp.lt.s32.totalorder %s17, 3
    %p273 = pnand %p271, %p272
    %p274 = pneg %p273
    // Predicated region
    $region9: #{attention_forward.1} parent=5 // pred_check
      _
    $region10: #{attention_forward.1} parent=5 // pred_check_branch
      %276 = sbr.rel (%p273) target = $region12
    $region11: #{attention_forward.1} parent=5 // pred_region
      %s277 = ssub.s32 %s17, 1
      // Predicated region
      $region13: #{attention_forward.1} parent=11 // pred_check
        %p278 = pneg %p64
      $region14: #{attention_forward.1} parent=11 // pred_check_branch
        %280 = sbr.rel (%p278) target = $region16
      $region15: #{attention_forward.1} parent=11 // pred_region
        _
      $region16: #{attention_forward.1} parent=11 // pred_fallthru
        _
      // Predicated region
      $region17: #{attention_forward.1} parent=11 // pred_check
        %p281 = pneg %p85
      $region18: #{attention_forward.1} parent=11 // pred_check_branch
        %283 = sbr.rel (%p281) target = $region20
      $region19: #{attention_forward.1} parent=11 // pred_region
        _
      $region20: #{attention_forward.1} parent=11 // pred_fallthru
        _
      // Predicated region
      $region21: #{attention_forward.1} parent=11 // pred_check
        %p284 = pneg %p106
      $region22: #{attention_forward.1} parent=11 // pred_check_branch
        %286 = sbr.rel (%p284) target = $region24
      $region23: #{attention_forward.1} parent=11 // pred_region
        _
      $region24: #{attention_forward.1} parent=11 // pred_fallthru
        _
      // Predicated region
      $region25: #{attention_forward.1} parent=11 // pred_check
        %p287 = pneg %p127
      $region26: #{attention_forward.1} parent=11 // pred_check_branch
        %289 = sbr.rel (%p287) target = $region28
      $region27: #{attention_forward.1} parent=11 // pred_region
        _
      $region28: #{attention_forward.1} parent=11 // pred_fallthru
        _
      // Predicated region
      $region29: #{attention_forward.1} parent=11 // pred_check
        %p290 = pneg %p148
      $region30: #{attention_forward.1} parent=11 // pred_check_branch
        %292 = sbr.rel (%p290) target = $region32
      $region31: #{attention_forward.1} parent=11 // pred_region
        _
      $region32: #{attention_forward.1} parent=11 // pred_fallthru
        _
      // Predicated region
      $region33: #{attention_forward.1} parent=11 // pred_check
        %p293 = pneg %p169
      $region34: #{attention_forward.1} parent=11 // pred_check_branch
        %295 = sbr.rel (%p293) target = $region36
      $region35: #{attention_forward.1} parent=11 // pred_region
        _
      $region36: #{attention_forward.1} parent=11 // pred_fallthru
        _
      // Predicated region
      $region37: #{attention_forward.1} parent=11 // pred_check
        %p296 = pneg %p190
      $region38: #{attention_forward.1} parent=11 // pred_check_branch
        %298 = sbr.rel (%p296) target = $region40
      $region39: #{attention_forward.1} parent=11 // pred_region
        _
      $region40: #{attention_forward.1} parent=11 // pred_fallthru
        _
      // Predicated region
      $region41: #{attention_forward.1} parent=11 // pred_check
        %p299 = pneg %p211
      $region42: #{attention_forward.1} parent=11 // pred_check_branch
        %301 = sbr.rel (%p299) target = $region44
      $region43: #{attention_forward.1} parent=11 // pred_region
        _
      $region44: #{attention_forward.1} parent=11 // pred_fallthru
        _
    $region12: #{attention_forward.1} parent=5 // pred_fallthru
      _
    %p302 = scmp.lt.s32.totalorder %s17, 2
    // Predicated region
    $region45: #{attention_forward.1} parent=5 // pred_check
      %p303 = pneg %p302
    $region46: #{attention_forward.1} parent=5 // pred_check_branch
      %305 = sbr.rel (%p303) target = $region48
    $region47: #{attention_forward.1} parent=5 // pred_region
      // Predicated region
      $region49: #{attention_forward.1} parent=47 // pred_check
        %p306 = pneg %p37
      $region50: #{attention_forward.1} parent=47 // pred_check_branch
        %308 = sbr.rel (%p306) target = $region52
      $region51: #{attention_forward.1} parent=47 // pred_region
        %p309 = scmp.lt.s32.totalorder %s17, 1
        %s310 = scalar_select %p309, %s17, 1
        %s311 = smul.addr %s310, 10
        %s312 = smul.addr %s311, 8
        %s313 = scalar_lea.vmem %s0, %s312
      $region52: #{attention_forward.1} parent=47 // pred_fallthru
        _
    $region48: #{attention_forward.1} parent=5 // pred_fallthru
      _
    %p314 = scmp.le.s32.totalorder 1, %s17
    %p315 = scmp.lt.s32.totalorder %s17, 3
    %p316 = pnand %p314, %p315
    %p317 = pneg %p316
    // Predicated region
    $region53: #{attention_forward.1} parent=5 // pred_check
      _
    $region54: #{attention_forward.1} parent=5 // pred_check_branch
      %319 = sbr.rel (%p316) target = $region56
    $region55: #{attention_forward.1} parent=5 // pred_region
      %s320 = ssub.s32 %s17, 1
      %p321 = scmp.lt.s32.totalorder %s22, 1
      %s322 = scalar_select %p321, %s22, 1
      %s323 = smul.addr %s322, 10
      %s324 = smul.addr %s323, 8
      %s325 = scalar_lea.vmem %s0, %s324
      %p326 = pneg %p43
      %p327 = pneg %p40
      %p328 = pneg %p64
      %p329 = pneg %p61
      %p330 = pneg %p85
      %p331 = pneg %p82
      %p332 = pneg %p106
      %p333 = pneg %p103
      %p334 = pneg %p127
      %p335 = pneg %p124
      %p336 = pneg %p148
      %p337 = pneg %p145
      %p338 = pneg %p169
      %p339 = pneg %p166
      %p340 = pneg %p190
      %p341 = pneg %p187
      %p342 = pneg %p211
      %p343 = pneg %p208
      %p344 = pneg %p237
      %p345 = pneg %p234
      %p346 = scmp.lt.s32.totalorder %s22, 1
      %s347 = scalar_select %p346, %s22, 1
      %s348 = smul.addr %s347, 2
      %s349 = smul.addr %s348, 8
      %s350 = scalar_lea.vmem %s9, %s349
      %p351 = pneg %p263
      %p352 = pneg %p260
      %p353 = scmp.lt.s32.totalorder %s22, 1
      %s354 = scalar_select %p353, %s22, 1
      %s355 = smul.addr %s354, 2
      %s356 = scalar_lea.vmem %s10, %s355
      %p357 = scmp.lt.s32.totalorder %s22, 1
      %s358 = scalar_select %p357, %s22, 1
      %s359 = smul.addr %s358, 10
      %s360 = smul.addr %s359, 8
      %s361 = scalar_lea.vmem %s0, %s360
      %p362 = scmp.lt.s32.totalorder %s22, 1
      %s363 = scalar_select %p362, %s22, 1
      %s364 = smul.addr %s363, 2
      %s365 = smul.addr %s364, 8
      %s366 = scalar_lea.vmem %s9, %s365
      %p367 = scmp.lt.s32.totalorder %s22, 1
      %s368 = scalar_select %p367, %s22, 1
      %s369 = smul.addr %s368, 2
      %s370 = scalar_lea.vmem %s10, %s369
      %v371 = vld [vmem:[%s1] sm:$0xff]
      %v372 = vld [vmem:[%s1 + $0x8] sm:$0xff]
      %v373 = vld [vmem:[%s1 + $0x10] sm:$0xff]
      %v374 = vld [vmem:[%s1 + $0x18] sm:$0xff]
      %v375 = vld [vmem:[%s1 + $0x20] sm:$0xff]
      %v376 = vld [vmem:[%s1 + $0x28] sm:$0xff]
      %v377 = vld [vmem:[%s1 + $0x30] sm:$0xff]
      %v378 = vld [vmem:[%s1 + $0x38] sm:$0xff]
      %v379 = vld [vmem:[%s1 + $0x40] sm:$0xff]
      %v380 = vld [vmem:[%s1 + $0x48] sm:$0xff]
      %v381 = vld [vmem:[%s1 + $0x50] sm:$0xff]
      %v382 = vld [vmem:[%s1 + $0x58] sm:$0xff]
      %v383 = vld [vmem:[%s1 + $0x60] sm:$0xff]
      %v384 = vld [vmem:[%s1 + $0x68] sm:$0xff]
      %v385 = vld [vmem:[%s1 + $0x70] sm:$0xff]
      %v386 = vld [vmem:[%s1 + $0x78] sm:$0xff]
      %v387 = vld [vmem:[%s1 + $0x80] sm:$0xff]
      %v388 = vld [vmem:[%s1 + $0x88] sm:$0xff]
      %v389 = vld [vmem:[%s1 + $0x90] sm:$0xff]
      %v390 = vld [vmem:[%s1 + $0x98] sm:$0xff]
      %v391 = vld [vmem:[%s1 + $0xa0] sm:$0xff]
      %v392 = vld [vmem:[%s1 + $0xa8] sm:$0xff]
      %v393 = vld [vmem:[%s1 + $0xb0] sm:$0xff]
      %v394 = vld [vmem:[%s1 + $0xb8] sm:$0xff]
      %v395 = vld [vmem:[%s1 + $0xc0] sm:$0xff]
      %v396 = vld [vmem:[%s1 + $0xc8] sm:$0xff]
      %v397 = vld [vmem:[%s1 + $0xd0] sm:$0xff]
      %v398 = vld [vmem:[%s1 + $0xd8] sm:$0xff]
      %v399 = vld [vmem:[%s1 + $0xe0] sm:$0xff]
      %v400 = vld [vmem:[%s1 + $0xe8] sm:$0xff]
      %v401 = vld [vmem:[%s1 + $0xf0] sm:$0xff]
      %v402 = vld [vmem:[%s1 + $0xf8] sm:$0xff]
      %v403 = vld [vmem:[%s1 + $0x100] sm:$0xff]
      %v404 = vld [vmem:[%s1 + $0x108] sm:$0xff]
      %v405 = vld [vmem:[%s1 + $0x110] sm:$0xff]
      %v406 = vld [vmem:[%s1 + $0x118] sm:$0xff]
      %v407 = vld [vmem:[%s1 + $0x120] sm:$0xff]
      %v408 = vld [vmem:[%s1 + $0x128] sm:$0xff]
      %v409 = vld [vmem:[%s1 + $0x130] sm:$0xff]
      %v410 = vld [vmem:[%s1 + $0x138] sm:$0xff]
      %v411 = vld [vmem:[%s1 + $0x140] sm:$0xff]
      %v412 = vld [vmem:[%s1 + $0x148] sm:$0xff]
      %v413 = vld [vmem:[%s1 + $0x150] sm:$0xff]
      %v414 = vld [vmem:[%s1 + $0x158] sm:$0xff]
      %v415 = vld [vmem:[%s1 + $0x160] sm:$0xff]
      %v416 = vld [vmem:[%s1 + $0x168] sm:$0xff]
      %v417 = vld [vmem:[%s1 + $0x170] sm:$0xff]
      %v418 = vld [vmem:[%s1 + $0x178] sm:$0xff]
      %v419 = vld [vmem:[%s1 + $0x180] sm:$0xff]
      %v420 = vld [vmem:[%s1 + $0x188] sm:$0xff]
      %v421 = vld [vmem:[%s1 + $0x190] sm:$0xff]
      %v422 = vld [vmem:[%s1 + $0x198] sm:$0xff]
      %v423 = vld [vmem:[%s1 + $0x1a0] sm:$0xff]
      %v424 = vld [vmem:[%s1 + $0x1a8] sm:$0xff]
      %v425 = vld [vmem:[%s1 + $0x1b0] sm:$0xff]
      %v426 = vld [vmem:[%s1 + $0x1b8] sm:$0xff]
      %v427 = vld [vmem:[%s1 + $0x1c0] sm:$0xff]
      %v428 = vld [vmem:[%s1 + $0x1c8] sm:$0xff]
      %v429 = vld [vmem:[%s1 + $0x1d0] sm:$0xff]
      %v430 = vld [vmem:[%s1 + $0x1d8] sm:$0xff]
      %v431 = vld [vmem:[%s1 + $0x1e0] sm:$0xff]
      %v432 = vld [vmem:[%s1 + $0x1e8] sm:$0xff]
      %v433 = vld [vmem:[%s1 + $0x1f0] sm:$0xff]
      %v434 = vld [vmem:[%s1 + $0x1f8] sm:$0xff]
      %v435 = vld [vmem:[%s361] sm:$0xff]
      %v436 = vld [vmem:[%s361 + $0x8] sm:$0xff]
      %v437 = vld [vmem:[%s361 + $0x10] sm:$0xff]
      %v438 = vld [vmem:[%s361 + $0x18] sm:$0xff]
      %v439 = vld [vmem:[%s361 + $0x20] sm:$0xff]
      %v440 = vld [vmem:[%s361 + $0x28] sm:$0xff]
      %v441 = vld [vmem:[%s361 + $0x30] sm:$0xff]
      %v442 = vld [vmem:[%s361 + $0x38] sm:$0xff]
      %v443 = vld [vmem:[%s361 + $0x40] sm:$0xf]
      %v444 = vld [vmem:[%s361 + $0x48] sm:$0xf]
      %v445 = vld [vmem:[%s2] sm:$0xff]
      %v446 = vld [vmem:[%s2 + $0x8] sm:$0xff]
      %v447 = vld [vmem:[%s2 + $0x10] sm:$0xff]
      %v448 = vld [vmem:[%s2 + $0x18] sm:$0xff]
      %v449 = vld [vmem:[%s2 + $0x20] sm:$0xff]
      %v450 = vld [vmem:[%s2 + $0x28] sm:$0xff]
      %v451 = vld [vmem:[%s2 + $0x30] sm:$0xff]
      %v452 = vld [vmem:[%s2 + $0x38] sm:$0xff]
      %v453 = vld [vmem:[%s2 + $0x40] sm:$0xff]
      %v454 = vld [vmem:[%s2 + $0x48] sm:$0xff]
      %v455 = vld [vmem:[%s2 + $0x50] sm:$0xff]
      %v456 = vld [vmem:[%s2 + $0x58] sm:$0xff]
      %v457 = vld [vmem:[%s2 + $0x60] sm:$0xff]
      %v458 = vld [vmem:[%s2 + $0x68] sm:$0xff]
      %v459 = vld [vmem:[%s2 + $0x70] sm:$0xff]
      %v460 = vld [vmem:[%s2 + $0x78] sm:$0xff]
      %v461 = vld [vmem:[%s2 + $0x80] sm:$0xff]
      %v462 = vld [vmem:[%s2 + $0x88] sm:$0xff]
      %v463 = vld [vmem:[%s2 + $0x90] sm:$0xff]
      %v464 = vld [vmem:[%s2 + $0x98] sm:$0xff]
      %v465 = vld [vmem:[%s2 + $0xa0] sm:$0xff]
      %v466 = vld [vmem:[%s2 + $0xa8] sm:$0xff]
      %v467 = vld [vmem:[%s2 + $0xb0] sm:$0xff]
      %v468 = vld [vmem:[%s2 + $0xb8] sm:$0xff]
      %v469 = vld [vmem:[%s2 + $0xc0] sm:$0xff]
      %v470 = vld [vmem:[%s2 + $0xc8] sm:$0xff]
      %v471 = vld [vmem:[%s2 + $0xd0] sm:$0xff]
      %v472 = vld [vmem:[%s2 + $0xd8] sm:$0xff]
      %v473 = vld [vmem:[%s2 + $0xe0] sm:$0xff]
      %v474 = vld [vmem:[%s2 + $0xe8] sm:$0xff]
      %v475 = vld [vmem:[%s2 + $0xf0] sm:$0xff]
      %v476 = vld [vmem:[%s2 + $0xf8] sm:$0xff]
      %v477 = vld [vmem:[%s2 + $0x100] sm:$0xff]
      %v478 = vld [vmem:[%s2 + $0x108] sm:$0xff]
      %v479 = vld [vmem:[%s2 + $0x110] sm:$0xff]
      %v480 = vld [vmem:[%s2 + $0x118] sm:$0xff]
      %v481 = vld [vmem:[%s2 + $0x120] sm:$0xff]
      %v482 = vld [vmem:[%s2 + $0x128] sm:$0xff]
      %v483 = vld [vmem:[%s2 + $0x130] sm:$0xff]
      %v484 = vld [vmem:[%s2 + $0x138] sm:$0xff]
      %v485 = vld [vmem:[%s2 + $0x140] sm:$0xff]
      %v486 = vld [vmem:[%s2 + $0x148] sm:$0xff]
      %v487 = vld [vmem:[%s2 + $0x150] sm:$0xff]
      %v488 = vld [vmem:[%s2 + $0x158] sm:$0xff]
      %v489 = vld [vmem:[%s2 + $0x160] sm:$0xff]
      %v490 = vld [vmem:[%s2 + $0x168] sm:$0xff]
      %v491 = vld [vmem:[%s2 + $0x170] sm:$0xff]
      %v492 = vld [vmem:[%s2 + $0x178] sm:$0xff]
      %v493 = vld [vmem:[%s2 + $0x180] sm:$0xff]
      %v494 = vld [vmem:[%s2 + $0x188] sm:$0xff]
      %v495 = vld [vmem:[%s2 + $0x190] sm:$0xff]
      %v496 = vld [vmem:[%s2 + $0x198] sm:$0xff]
      %v497 = vld [vmem:[%s2 + $0x1a0] sm:$0xff]
      %v498 = vld [vmem:[%s2 + $0x1a8] sm:$0xff]
      %v499 = vld [vmem:[%s2 + $0x1b0] sm:$0xff]
      %v500 = vld [vmem:[%s2 + $0x1b8] sm:$0xff]
      %v501 = vld [vmem:[%s2 + $0x1c0] sm:$0xff]
      %v502 = vld [vmem:[%s2 + $0x1c8] sm:$0xff]
      %v503 = vld [vmem:[%s2 + $0x1d0] sm:$0xff]
      %v504 = vld [vmem:[%s2 + $0x1d8] sm:$0xff]
      %v505 = vld [vmem:[%s2 + $0x1e0] sm:$0xff]
      %v506 = vld [vmem:[%s2 + $0x1e8] sm:$0xff]
      %v507 = vld [vmem:[%s2 + $0x1f0] sm:$0xff]
      %v508 = vld [vmem:[%s2 + $0x1f8] sm:$0xff]
      %510 = vset.pattern.permute.xlu0 0
      %511 = vperm.xlu0 %510, %v445
      %v512 = vpop.permute.xlu0 %511
      %515 = vset.pattern.permute.xlu0 0
      %516 = vperm.xlu0 %515, %v446
      %v517 = vpop.permute.xlu0 %516
      %520 = vset.pattern.permute.xlu0 0
      %521 = vperm.xlu0 %520, %v447
      %v522 = vpop.permute.xlu0 %521
      %525 = vset.pattern.permute.xlu0 0
      %526 = vperm.xlu0 %525, %v448
      %v527 = vpop.permute.xlu0 %526
      %530 = vset.pattern.permute.xlu0 0
      %531 = vperm.xlu0 %530, %v449
      %v532 = vpop.permute.xlu0 %531
      %535 = vset.pattern.permute.xlu0 0
      %536 = vperm.xlu0 %535, %v450
      %v537 = vpop.permute.xlu0 %536
      %540 = vset.pattern.permute.xlu0 0
      %541 = vperm.xlu0 %540, %v451
      %v542 = vpop.permute.xlu0 %541
      %545 = vset.pattern.permute.xlu0 0
      %546 = vperm.xlu0 %545, %v452
      %v547 = vpop.permute.xlu0 %546
      %550 = vset.pattern.permute.xlu0 0
      %551 = vperm.xlu0 %550, %v453
      %v552 = vpop.permute.xlu0 %551
      %555 = vset.pattern.permute.xlu0 0
      %556 = vperm.xlu0 %555, %v454
      %v557 = vpop.permute.xlu0 %556
      %560 = vset.pattern.permute.xlu0 0
      %561 = vperm.xlu0 %560, %v455
      %v562 = vpop.permute.xlu0 %561
      %565 = vset.pattern.permute.xlu0 0
      %566 = vperm.xlu0 %565, %v456
      %v567 = vpop.permute.xlu0 %566
      %570 = vset.pattern.permute.xlu0 0
      %571 = vperm.xlu0 %570, %v457
      %v572 = vpop.permute.xlu0 %571
      %575 = vset.pattern.permute.xlu0 0
      %576 = vperm.xlu0 %575, %v458
      %v577 = vpop.permute.xlu0 %576
      %580 = vset.pattern.permute.xlu0 0
      %581 = vperm.xlu0 %580, %v459
      %v582 = vpop.permute.xlu0 %581
      %585 = vset.pattern.permute.xlu0 0
      %586 = vperm.xlu0 %585, %v460
      %v587 = vpop.permute.xlu0 %586
      %590 = vset.pattern.permute.xlu0 0
      %591 = vperm.xlu0 %590, %v461
      %v592 = vpop.permute.xlu0 %591
      %595 = vset.pattern.permute.xlu0 0
      %596 = vperm.xlu0 %595, %v462
      %v597 = vpop.permute.xlu0 %596
      %600 = vset.pattern.permute.xlu0 0
      %601 = vperm.xlu0 %600, %v463
      %v602 = vpop.permute.xlu0 %601
      %605 = vset.pattern.permute.xlu0 0
      %606 = vperm.xlu0 %605, %v464
      %v607 = vpop.permute.xlu0 %606
      %610 = vset.pattern.permute.xlu0 0
      %611 = vperm.xlu0 %610, %v465
      %v612 = vpop.permute.xlu0 %611
      %615 = vset.pattern.permute.xlu0 0
      %616 = vperm.xlu0 %615, %v466
      %v617 = vpop.permute.xlu0 %616
      %620 = vset.pattern.permute.xlu0 0
      %621 = vperm.xlu0 %620, %v467
      %v622 = vpop.permute.xlu0 %621
      %625 = vset.pattern.permute.xlu0 0
      %626 = vperm.xlu0 %625, %v468
      %v627 = vpop.permute.xlu0 %626
      %630 = vset.pattern.permute.xlu0 0
      %631 = vperm.xlu0 %630, %v469
      %v632 = vpop.permute.xlu0 %631
      %635 = vset.pattern.permute.xlu0 0
      %636 = vperm.xlu0 %635, %v470
      %v637 = vpop.permute.xlu0 %636
      %640 = vset.pattern.permute.xlu0 0
      %641 = vperm.xlu0 %640, %v471
      %v642 = vpop.permute.xlu0 %641
      %645 = vset.pattern.permute.xlu0 0
      %646 = vperm.xlu0 %645, %v472
      %v647 = vpop.permute.xlu0 %646
      %650 = vset.pattern.permute.xlu0 0
      %651 = vperm.xlu0 %650, %v473
      %v652 = vpop.permute.xlu0 %651
      %655 = vset.pattern.permute.xlu0 0
      %656 = vperm.xlu0 %655, %v474
      %v657 = vpop.permute.xlu0 %656
      %660 = vset.pattern.permute.xlu0 0
      %661 = vperm.xlu0 %660, %v475
      %v662 = vpop.permute.xlu0 %661
      %665 = vset.pattern.permute.xlu0 0
      %666 = vperm.xlu0 %665, %v476
      %v667 = vpop.permute.xlu0 %666
      %670 = vset.pattern.permute.xlu0 0
      %671 = vperm.xlu0 %670, %v477
      %v672 = vpop.permute.xlu0 %671
      %675 = vset.pattern.permute.xlu0 0
      %676 = vperm.xlu0 %675, %v478
      %v677 = vpop.permute.xlu0 %676
      %680 = vset.pattern.permute.xlu0 0
      %681 = vperm.xlu0 %680, %v479
      %v682 = vpop.permute.xlu0 %681
      %685 = vset.pattern.permute.xlu0 0
      %686 = vperm.xlu0 %685, %v480
      %v687 = vpop.permute.xlu0 %686
      %690 = vset.pattern.permute.xlu0 0
      %691 = vperm.xlu0 %690, %v481
      %v692 = vpop.permute.xlu0 %691
      %695 = vset.pattern.permute.xlu0 0
      %696 = vperm.xlu0 %695, %v482
      %v697 = vpop.permute.xlu0 %696
      %700 = vset.pattern.permute.xlu0 0
      %701 = vperm.xlu0 %700, %v483
      %v702 = vpop.permute.xlu0 %701
      %705 = vset.pattern.permute.xlu0 0
      %706 = vperm.xlu0 %705, %v484
      %v707 = vpop.permute.xlu0 %706
      %710 = vset.pattern.permute.xlu0 0
      %711 = vperm.xlu0 %710, %v485
      %v712 = vpop.permute.xlu0 %711
      %715 = vset.pattern.permute.xlu0 0
      %716 = vperm.xlu0 %715, %v486
      %v717 = vpop.permute.xlu0 %716
      %720 = vset.pattern.permute.xlu0 0
      %721 = vperm.xlu0 %720, %v487
      %v722 = vpop.permute.xlu0 %721
      %725 = vset.pattern.permute.xlu0 0
      %726 = vperm.xlu0 %725, %v488
      %v727 = vpop.permute.xlu0 %726
      %730 = vset.pattern.permute.xlu0 0
      %731 = vperm.xlu0 %730, %v489
      %v732 = vpop.permute.xlu0 %731
      %735 = vset.pattern.permute.xlu0 0
      %736 = vperm.xlu0 %735, %v490
      %v737 = vpop.permute.xlu0 %736
      %740 = vset.pattern.permute.xlu0 0
      %741 = vperm.xlu0 %740, %v491
      %v742 = vpop.permute.xlu0 %741
      %745 = vset.pattern.permute.xlu0 0
      %746 = vperm.xlu0 %745, %v492
      %v747 = vpop.permute.xlu0 %746
      %750 = vset.pattern.permute.xlu0 0
      %751 = vperm.xlu0 %750, %v493
      %v752 = vpop.permute.xlu0 %751
      %755 = vset.pattern.permute.xlu0 0
      %756 = vperm.xlu0 %755, %v494
      %v757 = vpop.permute.xlu0 %756
      %760 = vset.pattern.permute.xlu0 0
      %761 = vperm.xlu0 %760, %v495
      %v762 = vpop.permute.xlu0 %761
      %765 = vset.pattern.permute.xlu0 0
      %766 = vperm.xlu0 %765, %v496
      %v767 = vpop.permute.xlu0 %766
      %770 = vset.pattern.permute.xlu0 0
      %771 = vperm.xlu0 %770, %v497
      %v772 = vpop.permute.xlu0 %771
      %775 = vset.pattern.permute.xlu0 0
      %776 = vperm.xlu0 %775, %v498
      %v777 = vpop.permute.xlu0 %776
      %780 = vset.pattern.permute.xlu0 0
      %781 = vperm.xlu0 %780, %v499
      %v782 = vpop.permute.xlu0 %781
      %785 = vset.pattern.permute.xlu0 0
      %786 = vperm.xlu0 %785, %v500
      %v787 = vpop.permute.xlu0 %786
      %790 = vset.pattern.permute.xlu0 0
      %791 = vperm.xlu0 %790, %v501
      %v792 = vpop.permute.xlu0 %791
      %795 = vset.pattern.permute.xlu0 0
      %796 = vperm.xlu0 %795, %v502
      %v797 = vpop.permute.xlu0 %796
      %800 = vset.pattern.permute.xlu0 0
      %801 = vperm.xlu0 %800, %v503
      %v802 = vpop.permute.xlu0 %801
      %805 = vset.pattern.permute.xlu0 0
      %806 = vperm.xlu0 %805, %v504
      %v807 = vpop.permute.xlu0 %806
      %810 = vset.pattern.permute.xlu0 0
      %811 = vperm.xlu0 %810, %v505
      %v812 = vpop.permute.xlu0 %811
      %815 = vset.pattern.permute.xlu0 0
      %816 = vperm.xlu0 %815, %v506
      %v817 = vpop.permute.xlu0 %816
      %820 = vset.pattern.permute.xlu0 0
      %821 = vperm.xlu0 %820, %v507
      %v822 = vpop.permute.xlu0 %821
      %825 = vset.pattern.permute.xlu0 0
      %826 = vperm.xlu0 %825, %v508
      %v827 = vpop.permute.xlu0 %826
      %vm829 = vcmask 293888
      %v831 = vsel %vm829, %v371, 0
      %v834 = vsel %vm829, %v372, 0
      %v837 = vsel %vm829, %v373, 0
      %v840 = vsel %vm829, %v374, 0
      %v843 = vsel %vm829, %v375, 0
      %v846 = vsel %vm829, %v376, 0
      %v849 = vsel %vm829, %v377, 0
      %v852 = vsel %vm829, %v378, 0
      %v855 = vsel %vm829, %v379, 0
      %v858 = vsel %vm829, %v380, 0
      %v861 = vsel %vm829, %v381, 0
      %v864 = vsel %vm829, %v382, 0
      %v867 = vsel %vm829, %v383, 0
      %v870 = vsel %vm829, %v384, 0
      %v873 = vsel %vm829, %v385, 0
      %v876 = vsel %vm829, %v386, 0
      %v879 = vsel %vm829, %v387, 0
      %v882 = vsel %vm829, %v388, 0
      %v885 = vsel %vm829, %v389, 0
      %v888 = vsel %vm829, %v390, 0
      %v891 = vsel %vm829, %v391, 0
      %v894 = vsel %vm829, %v392, 0
      %v897 = vsel %vm829, %v393, 0
      %v900 = vsel %vm829, %v394, 0
      %v903 = vsel %vm829, %v395, 0
      %v906 = vsel %vm829, %v396, 0
      %v909 = vsel %vm829, %v397, 0
      %v912 = vsel %vm829, %v398, 0
      %v915 = vsel %vm829, %v399, 0
      %v918 = vsel %vm829, %v400, 0
      %v921 = vsel %vm829, %v401, 0
      %v924 = vsel %vm829, %v402, 0
      %v927 = vsel %vm829, %v403, 0
      %v930 = vsel %vm829, %v404, 0
      %v933 = vsel %vm829, %v405, 0
      %v936 = vsel %vm829, %v406, 0
      %v939 = vsel %vm829, %v407, 0
      %v942 = vsel %vm829, %v408, 0
      %v945 = vsel %vm829, %v409, 0
      %v948 = vsel %vm829, %v410, 0
      %v951 = vsel %vm829, %v411, 0
      %v954 = vsel %vm829, %v412, 0
      %v957 = vsel %vm829, %v413, 0
      %v960 = vsel %vm829, %v414, 0
      %v963 = vsel %vm829, %v415, 0
      %v966 = vsel %vm829, %v416, 0
      %v969 = vsel %vm829, %v417, 0
      %v972 = vsel %vm829, %v418, 0
      %v975 = vsel %vm829, %v419, 0
      %v978 = vsel %vm829, %v420, 0
      %v981 = vsel %vm829, %v421, 0
      %v984 = vsel %vm829, %v422, 0
      %v987 = vsel %vm829, %v423, 0
      %v990 = vsel %vm829, %v424, 0
      %v993 = vsel %vm829, %v425, 0
      %v996 = vsel %vm829, %v426, 0
      %v999 = vsel %vm829, %v427, 0
      %v1002 = vsel %vm829, %v428, 0
      %v1005 = vsel %vm829, %v429, 0
      %v1008 = vsel %vm829, %v430, 0
      %v1011 = vsel %vm829, %v431, 0
      %v1014 = vsel %vm829, %v432, 0
      %v1017 = vsel %vm829, %v433, 0
      %v1020 = vsel %vm829, %v434, 0
      %vm1022 = vcmask 1043456
      %v1024 = vsel %vm1022, %v443, 0
      %v1027 = vsel %vm1022, %v444, 0
      %1029 = vmatprep.subr.mxu0 0.0
      %1030 = vmatpush1.msra.mxu0 0.0
      %1031 = vmatprep.subr.mxu0 0.0
      %1032 = vmatpush1.msra.mxu0 0.0
      %1033 = vmatprep.subr.mxu0 0.0
      %1034 = vmatpush1.msra.mxu0 0.0
      %1035 = vmatprep.subr.mxu0 0.0
      %1036 = vmatpush1.msra.mxu0 0.0
      %1037 = vmatprep.subr.mxu0 0.0
      %1038 = vmatpush1.msra.mxu0 0.0
      %1039 = vmatprep.subr.mxu0 0.0
      %1040 = vmatpush1.msra.mxu0 0.0
      %1041 = vmatprep.subr.mxu0 0.0
      %1042 = vmatpush1.msra.mxu0 0.0
      %1043 = vmatprep.subr.mxu0 0.0
      %1044 = vmatpush1.msra.mxu0 0.0
      %1045 = vmatprep.subr.mxu0 0.0
      %1046 = vmatpush1.msra.mxu0 0.0
      %1047 = vmatprep.subr.mxu0 0.0
      %1048 = vmatpush1.msra.mxu0 0.0
      %1049 = vmatprep.subr.mxu0 0.0
      %1050 = vmatpush1.msra.mxu0 0.0
      %1051 = vmatprep.subr.mxu0 %v1027
      %1052 = vmatpush1.msra.mxu0 %v1024
      %1053 = vmatprep.subr.mxu0 %v442
      %1054 = vmatpush1.msra.mxu0 %v441
      %1055 = vmatprep.subr.mxu0 %v440
      %1056 = vmatpush1.msra.mxu0 %v439
      %1057 = vmatprep.subr.mxu0 %v438
      %1058 = vmatpush1.msra.mxu0 %v437
      %1059 = vmatprep.subr.mxu0 %v436
      %1060 = vmatpush1.msra.mxu0 %v435
      %1061 = vmatprep.subr.mxu0 0.0
      %1062 = vmatpush2.msra.mxu0 0.0
      %1063 = vmatprep.subr.mxu0 0.0
      %1064 = vmatpush2.msra.mxu0 0.0
      %1065 = vmatprep.subr.mxu0 0.0
      %1066 = vmatpush2.msra.mxu0 0.0
      %1067 = vmatprep.subr.mxu0 0.0
      %1068 = vmatpush2.msra.mxu0 0.0
      %1069 = vmatprep.subr.mxu0 0.0
      %1070 = vmatpush2.msra.mxu0 0.0
      %1071 = vmatprep.subr.mxu0 0.0
      %1072 = vmatpush2.msra.mxu0 0.0
      %1073 = vmatprep.subr.mxu0 0.0
      %1074 = vmatpush2.msra.mxu0 0.0
      %1075 = vmatprep.subr.mxu0 0.0
      %1076 = vmatpush2.msra.mxu0 0.0
      %1077 = vmatprep.subr.mxu0 0.0
      %1078 = vmatpush2.msra.mxu0 0.0
      %1079 = vmatprep.subr.mxu0 0.0
      %1080 = vmatpush2.msra.mxu0 0.0
      %1081 = vmatprep.subr.mxu0 0.0
      %1082 = vmatpush2.msra.mxu0 0.0
      %1083 = vmatprep.subr.mxu0 0.0
      %1084 = vmatpush2.msra.mxu0 0.0
      %1085 = vmatprep.subr.mxu0 0.0
      %1086 = vmatpush2.msra.mxu0 0.0
      %1087 = vmatprep.subr.mxu0 0.0
      %1088 = vmatpush2.msra.mxu0 0.0
      %1089 = vmatprep.subr.mxu0 0.0
      %1090 = vmatpush2.msra.mxu0 0.0
      %1091 = vmatprep.subr.mxu0 0.0
      %1092 = vmatpush2.msra.mxu0 0.0
      %1093 = vmatprep.mubr.f32.mxu0 0.0
      %1094 = vmatmul.mubr.f32.gmra.mxu0 %v831
      %v1095 = vpop.f32.mrf.mxu0
      %v1096 = vadd.f32 %v512, %v1095
      %v1097 = vpop.f32.mrf.mxu0
      %v1098 = vadd.f32 %v512, %v1097
      %1099 = vmatprep.mubr.f32.mxu0 0.0
      %1100 = vmatmul.mubr.f32.gmra.mxu0 %v834
      %v1101 = vpop.f32.mrf.mxu0
      %v1102 = vadd.f32 %v517, %v1101
      %v1103 = vpop.f32.mrf.mxu0
      %v1104 = vadd.f32 %v517, %v1103
      %1105 = vmatprep.mubr.f32.mxu0 0.0
      %1106 = vmatmul.mubr.f32.gmra.mxu0 %v837
      %v1107 = vpop.f32.mrf.mxu0
      %v1108 = vadd.f32 %v522, %v1107
      %v1109 = vpop.f32.mrf.mxu0
      %v1110 = vadd.f32 %v522, %v1109
      %1111 = vmatprep.mubr.f32.mxu0 0.0
      %1112 = vmatmul.mubr.f32.gmra.mxu0 %v840
      %v1113 = vpop.f32.mrf.mxu0
      %v1114 = vadd.f32 %v527, %v1113
      %v1115 = vpop.f32.mrf.mxu0
      %v1116 = vadd.f32 %v527, %v1115
      %1117 = vmatprep.mubr.f32.mxu0 0.0
      %1118 = vmatmul.mubr.f32.gmra.mxu0 %v843
      %v1119 = vpop.f32.mrf.mxu0
      %v1120 = vadd.f32 %v532, %v1119
      %v1121 = vpop.f32.mrf.mxu0
      %v1122 = vadd.f32 %v532, %v1121
      %1123 = vmatprep.mubr.f32.mxu0 0.0
      %1124 = vmatmul.mubr.f32.gmra.mxu0 %v846
      %v1125 = vpop.f32.mrf.mxu0
      %v1126 = vadd.f32 %v537, %v1125
      %v1127 = vpop.f32.mrf.mxu0
      %v1128 = vadd.f32 %v537, %v1127
      %1129 = vmatprep.mubr.f32.mxu0 0.0
      %1130 = vmatmul.mubr.f32.gmra.mxu0 %v849
      %v1131 = vpop.f32.mrf.mxu0
      %v1132 = vadd.f32 %v542, %v1131
      %v1133 = vpop.f32.mrf.mxu0
      %v1134 = vadd.f32 %v542, %v1133
      %1135 = vmatprep.mubr.f32.mxu0 0.0
      %1136 = vmatmul.mubr.f32.gmra.mxu0 %v852
      %v1137 = vpop.f32.mrf.mxu0
      %v1138 = vadd.f32 %v547, %v1137
      %v1139 = vpop.f32.mrf.mxu0
      %v1140 = vadd.f32 %v547, %v1139
      %1141 = vmatprep.mubr.f32.mxu0 0.0
      %1142 = vmatmul.mubr.f32.gmra.mxu0 %v855
      %v1143 = vpop.f32.mrf.mxu0
      %v1144 = vadd.f32 %v552, %v1143
      %v1145 = vpop.f32.mrf.mxu0
      %v1146 = vadd.f32 %v552, %v1145
      %1147 = vmatprep.mubr.f32.mxu0 0.0
      %1148 = vmatmul.mubr.f32.gmra.mxu0 %v858
      %v1149 = vpop.f32.mrf.mxu0
      %v1150 = vadd.f32 %v557, %v1149
      %v1151 = vpop.f32.mrf.mxu0
      %v1152 = vadd.f32 %v557, %v1151
      %1153 = vmatprep.mubr.f32.mxu0 0.0
      %1154 = vmatmul.mubr.f32.gmra.mxu0 %v861
      %v1155 = vpop.f32.mrf.mxu0
      %v1156 = vadd.f32 %v562, %v1155
      %v1157 = vpop.f32.mrf.mxu0
      %v1158 = vadd.f32 %v562, %v1157
      %1159 = vmatprep.mubr.f32.mxu0 0.0
      %1160 = vmatmul.mubr.f32.gmra.mxu0 %v864
      %v1161 = vpop.f32.mrf.mxu0
      %v1162 = vadd.f32 %v567, %v1161
      %v1163 = vpop.f32.mrf.mxu0
      %v1164 = vadd.f32 %v567, %v1163
      %1165 = vmatprep.mubr.f32.mxu0 0.0
      %1166 = vmatmul.mubr.f32.gmra.mxu0 %v867
      %v1167 = vpop.f32.mrf.mxu0
      %v1168 = vadd.f32 %v572, %v1167
      %v1169 = vpop.f32.mrf.mxu0
      %v1170 = vadd.f32 %v572, %v1169
      %1171 = vmatprep.mubr.f32.mxu0 0.0
      %1172 = vmatmul.mubr.f32.gmra.mxu0 %v870
      %v1173 = vpop.f32.mrf.mxu0
      %v1174 = vadd.f32 %v577, %v1173
      %v1175 = vpop.f32.mrf.mxu0
      %v1176 = vadd.f32 %v577, %v1175
      %1177 = vmatprep.mubr.f32.mxu0 0.0
      %1178 = vmatmul.mubr.f32.gmra.mxu0 %v873
      %v1179 = vpop.f32.mrf.mxu0
      %v1180 = vadd.f32 %v582, %v1179
      %v1181 = vpop.f32.mrf.mxu0
      %v1182 = vadd.f32 %v582, %v1181
      %1183 = vmatprep.mubr.f32.mxu0 0.0
      %1184 = vmatmul.mubr.f32.gmra.mxu0 %v876
      %v1185 = vpop.f32.mrf.mxu0
      %v1186 = vadd.f32 %v587, %v1185
      %v1187 = vpop.f32.mrf.mxu0
      %v1188 = vadd.f32 %v587, %v1187
      %1189 = vmatprep.mubr.f32.mxu0 0.0
      %1190 = vmatmul.mubr.f32.gmra.mxu0 %v879
      %v1191 = vpop.f32.mrf.mxu0
      %v1192 = vadd.f32 %v592, %v1191
      %v1193 = vpop.f32.mrf.mxu0
      %v1194 = vadd.f32 %v592, %v1193
      %1195 = vmatprep.mubr.f32.mxu0 0.0
      %1196 = vmatmul.mubr.f32.gmra.mxu0 %v882
      %v1197 = vpop.f32.mrf.mxu0
      %v1198 = vadd.f32 %v597, %v1197
      %v1199 = vpop.f32.mrf.mxu0
      %v1200 = vadd.f32 %v597, %v1199
      %1201 = vmatprep.mubr.f32.mxu0 0.0
      %1202 = vmatmul.mubr.f32.gmra.mxu0 %v885
      %v1203 = vpop.f32.mrf.mxu0
      %v1204 = vadd.f32 %v602, %v1203
      %v1205 = vpop.f32.mrf.mxu0
      %v1206 = vadd.f32 %v602, %v1205
      %1207 = vmatprep.mubr.f32.mxu0 0.0
      %1208 = vmatmul.mubr.f32.gmra.mxu0 %v888
      %v1209 = vpop.f32.mrf.mxu0
      %v1210 = vadd.f32 %v607, %v1209
      %v1211 = vpop.f32.mrf.mxu0
      %v1212 = vadd.f32 %v607, %v1211
      %1213 = vmatprep.mubr.f32.mxu0 0.0
      %1214 = vmatmul.mubr.f32.gmra.mxu0 %v891
      %v1215 = vpop.f32.mrf.mxu0
      %v1216 = vadd.f32 %v612, %v1215
      %v1217 = vpop.f32.mrf.mxu0
      %v1218 = vadd.f32 %v612, %v1217
      %1219 = vmatprep.mubr.f32.mxu0 0.0
      %1220 = vmatmul.mubr.f32.gmra.mxu0 %v894
      %v1221 = vpop.f32.mrf.mxu0
      %v1222 = vadd.f32 %v617, %v1221
      %v1223 = vpop.f32.mrf.mxu0
      %v1224 = vadd.f32 %v617, %v1223
      %1225 = vmatprep.mubr.f32.mxu0 0.0
      %1226 = vmatmul.mubr.f32.gmra.mxu0 %v897
      %v1227 = vpop.f32.mrf.mxu0
      %v1228 = vadd.f32 %v622, %v1227
      %v1229 = vpop.f32.mrf.mxu0
      %v1230 = vadd.f32 %v622, %v1229
      %1231 = vmatprep.mubr.f32.mxu0 0.0
      %1232 = vmatmul.mubr.f32.gmra.mxu0 %v900
      %v1233 = vpop.f32.mrf.mxu0
      %v1234 = vadd.f32 %v627, %v1233
      %v1235 = vpop.f32.mrf.mxu0
      %v1236 = vadd.f32 %v627, %v1235
      %1237 = vmatprep.mubr.f32.mxu0 0.0
      %1238 = vmatmul.mubr.f32.gmra.mxu0 %v903
      %v1239 = vpop.f32.mrf.mxu0
      %v1240 = vadd.f32 %v632, %v1239
      %v1241 = vpop.f32.mrf.mxu0
      %v1242 = vadd.f32 %v632, %v1241
      %1243 = vmatprep.mubr.f32.mxu0 0.0
      %1244 = vmatmul.mubr.f32.gmra.mxu0 %v906
      %v1245 = vpop.f32.mrf.mxu0
      %v1246 = vadd.f32 %v637, %v1245
      %v1247 = vpop.f32.mrf.mxu0
      %v1248 = vadd.f32 %v637, %v1247
      %1249 = vmatprep.mubr.f32.mxu0 0.0
      %1250 = vmatmul.mubr.f32.gmra.mxu0 %v909
      %v1251 = vpop.f32.mrf.mxu0
      %v1252 = vadd.f32 %v642, %v1251
      %v1253 = vpop.f32.mrf.mxu0
      %v1254 = vadd.f32 %v642, %v1253
      %1255 = vmatprep.mubr.f32.mxu0 0.0
      %1256 = vmatmul.mubr.f32.gmra.mxu0 %v912
      %v1257 = vpop.f32.mrf.mxu0
      %v1258 = vadd.f32 %v647, %v1257
      %v1259 = vpop.f32.mrf.mxu0
      %v1260 = vadd.f32 %v647, %v1259
      %1261 = vmatprep.mubr.f32.mxu0 0.0
      %1262 = vmatmul.mubr.f32.gmra.mxu0 %v915
      %v1263 = vpop.f32.mrf.mxu0
      %v1264 = vadd.f32 %v652, %v1263
      %v1265 = vpop.f32.mrf.mxu0
      %v1266 = vadd.f32 %v652, %v1265
      %1267 = vmatprep.mubr.f32.mxu0 0.0
      %1268 = vmatmul.mubr.f32.gmra.mxu0 %v918
      %v1269 = vpop.f32.mrf.mxu0
      %v1270 = vadd.f32 %v657, %v1269
      %v1271 = vpop.f32.mrf.mxu0
      %v1272 = vadd.f32 %v657, %v1271
      %1273 = vmatprep.mubr.f32.mxu0 0.0
      %1274 = vmatmul.mubr.f32.gmra.mxu0 %v921
      %v1275 = vpop.f32.mrf.mxu0
      %v1276 = vadd.f32 %v662, %v1275
      %v1277 = vpop.f32.mrf.mxu0
      %v1278 = vadd.f32 %v662, %v1277
      %1279 = vmatprep.mubr.f32.mxu0 0.0
      %1280 = vmatmul.mubr.f32.gmra.mxu0 %v924
      %v1281 = vpop.f32.mrf.mxu0
      %v1282 = vadd.f32 %v667, %v1281
      %v1283 = vpop.f32.mrf.mxu0
      %v1284 = vadd.f32 %v667, %v1283
      %1285 = vmatprep.mubr.f32.mxu0 0.0
      %1286 = vmatmul.mubr.f32.gmra.mxu0 %v927
      %v1287 = vpop.f32.mrf.mxu0
      %v1288 = vadd.f32 %v672, %v1287
      %v1289 = vpop.f32.mrf.mxu0
      %v1290 = vadd.f32 %v672, %v1289
      %1291 = vmatprep.mubr.f32.mxu0 0.0
      %1292 = vmatmul.mubr.f32.gmra.mxu0 %v930
      %v1293 = vpop.f32.mrf.mxu0
      %v1294 = vadd.f32 %v677, %v1293
      %v1295 = vpop.f32.mrf.mxu0
      %v1296 = vadd.f32 %v677, %v1295
      %1297 = vmatprep.mubr.f32.mxu0 0.0
      %1298 = vmatmul.mubr.f32.gmra.mxu0 %v933
      %v1299 = vpop.f32.mrf.mxu0
      %v1300 = vadd.f32 %v682, %v1299
      %v1301 = vpop.f32.mrf.mxu0
      %v1302 = vadd.f32 %v682, %v1301
      %1303 = vmatprep.mubr.f32.mxu0 0.0
      %1304 = vmatmul.mubr.f32.gmra.mxu0 %v936
      %v1305 = vpop.f32.mrf.mxu0
      %v1306 = vadd.f32 %v687, %v1305
      %v1307 = vpop.f32.mrf.mxu0
      %v1308 = vadd.f32 %v687, %v1307
      %1309 = vmatprep.mubr.f32.mxu0 0.0
      %1310 = vmatmul.mubr.f32.gmra.mxu0 %v939
      %v1311 = vpop.f32.mrf.mxu0
      %v1312 = vadd.f32 %v692, %v1311
      %v1313 = vpop.f32.mrf.mxu0
      %v1314 = vadd.f32 %v692, %v1313
      %1315 = vmatprep.mubr.f32.mxu0 0.0
      %1316 = vmatmul.mubr.f32.gmra.mxu0 %v942
      %v1317 = vpop.f32.mrf.mxu0
      %v1318 = vadd.f32 %v697, %v1317
      %v1319 = vpop.f32.mrf.mxu0
      %v1320 = vadd.f32 %v697, %v1319
      %1321 = vmatprep.mubr.f32.mxu0 0.0
      %1322 = vmatmul.mubr.f32.gmra.mxu0 %v945
      %v1323 = vpop.f32.mrf.mxu0
      %v1324 = vadd.f32 %v702, %v1323
      %v1325 = vpop.f32.mrf.mxu0
      %v1326 = vadd.f32 %v702, %v1325
      %1327 = vmatprep.mubr.f32.mxu0 0.0
      %1328 = vmatmul.mubr.f32.gmra.mxu0 %v948
      %v1329 = vpop.f32.mrf.mxu0
      %v1330 = vadd.f32 %v707, %v1329
      %v1331 = vpop.f32.mrf.mxu0
      %v1332 = vadd.f32 %v707, %v1331
      %1333 = vmatprep.mubr.f32.mxu0 0.0
      %1334 = vmatmul.mubr.f32.gmra.mxu0 %v951
      %v1335 = vpop.f32.mrf.mxu0
      %v1336 = vadd.f32 %v712, %v1335
      %v1337 = vpop.f32.mrf.mxu0
      %v1338 = vadd.f32 %v712, %v1337
      %1339 = vmatprep.mubr.f32.mxu0 0.0
      %1340 = vmatmul.mubr.f32.gmra.mxu0 %v954
      %v1341 = vpop.f32.mrf.mxu0
      %v1342 = vadd.f32 %v717, %v1341
      %v1343 = vpop.f32.mrf.mxu0
      %v1344 = vadd.f32 %v717, %v1343
      %1345 = vmatprep.mubr.f32.mxu0 0.0
      %1346 = vmatmul.mubr.f32.gmra.mxu0 %v957
      %v1347 = vpop.f32.mrf.mxu0
      %v1348 = vadd.f32 %v722, %v1347
      %v1349 = vpop.f32.mrf.mxu0
      %v1350 = vadd.f32 %v722, %v1349
      %1351 = vmatprep.mubr.f32.mxu0 0.0
      %1352 = vmatmul.mubr.f32.gmra.mxu0 %v960
      %v1353 = vpop.f32.mrf.mxu0
      %v1354 = vadd.f32 %v727, %v1353
      %v1355 = vpop.f32.mrf.mxu0
      %v1356 = vadd.f32 %v727, %v1355
      %1357 = vmatprep.mubr.f32.mxu0 0.0
      %1358 = vmatmul.mubr.f32.gmra.mxu0 %v963
      %v1359 = vpop.f32.mrf.mxu0
      %v1360 = vadd.f32 %v732, %v1359
      %v1361 = vpop.f32.mrf.mxu0
      %v1362 = vadd.f32 %v732, %v1361
      %1363 = vmatprep.mubr.f32.mxu0 0.0
      %1364 = vmatmul.mubr.f32.gmra.mxu0 %v966
      %v1365 = vpop.f32.mrf.mxu0
      %v1366 = vadd.f32 %v737, %v1365
      %v1367 = vpop.f32.mrf.mxu0
      %v1368 = vadd.f32 %v737, %v1367
      %1369 = vmatprep.mubr.f32.mxu0 0.0
      %1370 = vmatmul.mubr.f32.gmra.mxu0 %v969
      %v1371 = vpop.f32.mrf.mxu0
      %v1372 = vadd.f32 %v742, %v1371
      %v1373 = vpop.f32.mrf.mxu0
      %v1374 = vadd.f32 %v742, %v1373
      %1375 = vmatprep.mubr.f32.mxu0 0.0
      %1376 = vmatmul.mubr.f32.gmra.mxu0 %v972
      %v1377 = vpop.f32.mrf.mxu0
      %v1378 = vadd.f32 %v747, %v1377
      %v1379 = vpop.f32.mrf.mxu0
      %v1380 = vadd.f32 %v747, %v1379
      %1381 = vmatprep.mubr.f32.mxu0 0.0
      %1382 = vmatmul.mubr.f32.gmra.mxu0 %v975
      %v1383 = vpop.f32.mrf.mxu0
      %v1384 = vadd.f32 %v752, %v1383
      %v1385 = vpop.f32.mrf.mxu0
      %v1386 = vadd.f32 %v752, %v1385
      %1387 = vmatprep.mubr.f32.mxu0 0.0
      %1388 = vmatmul.mubr.f32.gmra.mxu0 %v978
      %v1389 = vpop.f32.mrf.mxu0
      %v1390 = vadd.f32 %v757, %v1389
      %v1391 = vpop.f32.mrf.mxu0
      %v1392 = vadd.f32 %v757, %v1391
      %1393 = vmatprep.mubr.f32.mxu0 0.0
      %1394 = vmatmul.mubr.f32.gmra.mxu0 %v981
      %v1395 = vpop.f32.mrf.mxu0
      %v1396 = vadd.f32 %v762, %v1395
      %v1397 = vpop.f32.mrf.mxu0
      %v1398 = vadd.f32 %v762, %v1397
      %1399 = vmatprep.mubr.f32.mxu0 0.0
      %1400 = vmatmul.mubr.f32.gmra.mxu0 %v984
      %v1401 = vpop.f32.mrf.mxu0
      %v1402 = vadd.f32 %v767, %v1401
      %v1403 = vpop.f32.mrf.mxu0
      %v1404 = vadd.f32 %v767, %v1403
      %1405 = vmatprep.mubr.f32.mxu0 0.0
      %1406 = vmatmul.mubr.f32.gmra.mxu0 %v987
      %v1407 = vpop.f32.mrf.mxu0
      %v1408 = vadd.f32 %v772, %v1407
      %v1409 = vpop.f32.mrf.mxu0
      %v1410 = vadd.f32 %v772, %v1409
      %1411 = vmatprep.mubr.f32.mxu0 0.0
      %1412 = vmatmul.mubr.f32.gmra.mxu0 %v990
      %v1413 = vpop.f32.mrf.mxu0
      %v1414 = vadd.f32 %v777, %v1413
      %v1415 = vpop.f32.mrf.mxu0
      %v1416 = vadd.f32 %v777, %v1415
      %1417 = vmatprep.mubr.f32.mxu0 0.0
      %1418 = vmatmul.mubr.f32.gmra.mxu0 %v993
      %v1419 = vpop.f32.mrf.mxu0
      %v1420 = vadd.f32 %v782, %v1419
      %v1421 = vpop.f32.mrf.mxu0
      %v1422 = vadd.f32 %v782, %v1421
      %1423 = vmatprep.mubr.f32.mxu0 0.0
      %1424 = vmatmul.mubr.f32.gmra.mxu0 %v996
      %v1425 = vpop.f32.mrf.mxu0
      %v1426 = vadd.f32 %v787, %v1425
      %v1427 = vpop.f32.mrf.mxu0
      %v1428 = vadd.f32 %v787, %v1427
      %1429 = vmatprep.mubr.f32.mxu0 0.0
      %1430 = vmatmul.mubr.f32.gmra.mxu0 %v999
      %v1431 = vpop.f32.mrf.mxu0
      %v1432 = vadd.f32 %v792, %v1431
      %v1433 = vpop.f32.mrf.mxu0
      %v1434 = vadd.f32 %v792, %v1433
      %1435 = vmatprep.mubr.f32.mxu0 0.0
      %1436 = vmatmul.mubr.f32.gmra.mxu0 %v1002
      %v1437 = vpop.f32.mrf.mxu0
      %v1438 = vadd.f32 %v797, %v1437
      %v1439 = vpop.f32.mrf.mxu0
      %v1440 = vadd.f32 %v797, %v1439
      %1441 = vmatprep.mubr.f32.mxu0 0.0
      %1442 = vmatmul.mubr.f32.gmra.mxu0 %v1005
      %v1443 = vpop.f32.mrf.mxu0
      %v1444 = vadd.f32 %v802, %v1443
      %v1445 = vpop.f32.mrf.mxu0
      %v1446 = vadd.f32 %v802, %v1445
      %1447 = vmatprep.mubr.f32.mxu0 0.0
      %1448 = vmatmul.mubr.f32.gmra.mxu0 %v1008
      %v1449 = vpop.f32.mrf.mxu0
      %v1450 = vadd.f32 %v807, %v1449
      %v1451 = vpop.f32.mrf.mxu0
      %v1452 = vadd.f32 %v807, %v1451
      %1453 = vmatprep.mubr.f32.mxu0 0.0
      %1454 = vmatmul.mubr.f32.gmra.mxu0 %v1011
      %v1455 = vpop.f32.mrf.mxu0
      %v1456 = vadd.f32 %v812, %v1455
      %v1457 = vpop.f32.mrf.mxu0
      %v1458 = vadd.f32 %v812, %v1457
      %1459 = vmatprep.mubr.f32.mxu0 0.0
      %1460 = vmatmul.mubr.f32.gmra.mxu0 %v1014
      %v1461 = vpop.f32.mrf.mxu0
      %v1462 = vadd.f32 %v817, %v1461
      %v1463 = vpop.f32.mrf.mxu0
      %v1464 = vadd.f32 %v817, %v1463
      %1465 = vmatprep.mubr.f32.mxu0 0.0
      %1466 = vmatmul.mubr.f32.gmra.mxu0 %v1017
      %v1467 = vpop.f32.mrf.mxu0
      %v1468 = vadd.f32 %v822, %v1467
      %v1469 = vpop.f32.mrf.mxu0
      %v1470 = vadd.f32 %v822, %v1469
      %1471 = vmatprep.mubr.f32.mxu0 0.0
      %1472 = vmatmul.mubr.f32.gmra.mxu0 %v1020
      %v1473 = vpop.f32.mrf.mxu0
      %v1474 = vadd.f32 %v827, %v1473
      %v1475 = vpop.f32.mrf.mxu0
      %v1476 = vadd.f32 %v827, %v1475
      %1477 = vdwg.mxu0
      %v1478 = vmax.f32 %v1096, 0.0
      %v1479 = vmax.f32 %v1098, 0.0
      %v1480 = vmax.f32 %v1102, 0.0
      %v1481 = vmax.f32 %v1104, 0.0
      %v1482 = vmax.f32 %v1108, 0.0
      %v1483 = vmax.f32 %v1110, 0.0
      %v1484 = vmax.f32 %v1114, 0.0
      %v1485 = vmax.f32 %v1116, 0.0
      %v1486 = vmax.f32 %v1120, 0.0
      %v1487 = vmax.f32 %v1122, 0.0
      %v1488 = vmax.f32 %v1126, 0.0
      %v1489 = vmax.f32 %v1128, 0.0
      %v1490 = vmax.f32 %v1132, 0.0
      %v1491 = vmax.f32 %v1134, 0.0
      %v1492 = vmax.f32 %v1138, 0.0
      %v1493 = vmax.f32 %v1140, 0.0
      %v1494 = vmax.f32 %v1144, 0.0
      %v1495 = vmax.f32 %v1146, 0.0
      %v1496 = vmax.f32 %v1150, 0.0
      %v1497 = vmax.f32 %v1152, 0.0
      %v1498 = vmax.f32 %v1156, 0.0
      %v1499 = vmax.f32 %v1158, 0.0
      %v1500 = vmax.f32 %v1162, 0.0
      %v1501 = vmax.f32 %v1164, 0.0
      %v1502 = vmax.f32 %v1168, 0.0
      %v1503 = vmax.f32 %v1170, 0.0
      %v1504 = vmax.f32 %v1174, 0.0
      %v1505 = vmax.f32 %v1176, 0.0
      %v1506 = vmax.f32 %v1180, 0.0
      %v1507 = vmax.f32 %v1182, 0.0
      %v1508 = vmax.f32 %v1186, 0.0
      %v1509 = vmax.f32 %v1188, 0.0
      %v1510 = vmax.f32 %v1192, 0.0
      %v1511 = vmax.f32 %v1194, 0.0
      %v1512 = vmax.f32 %v1198, 0.0
      %v1513 = vmax.f32 %v1200, 0.0
      %v1514 = vmax.f32 %v1204, 0.0
      %v1515 = vmax.f32 %v1206, 0.0
      %v1516 = vmax.f32 %v1210, 0.0
      %v1517 = vmax.f32 %v1212, 0.0
      %v1518 = vmax.f32 %v1216, 0.0
      %v1519 = vmax.f32 %v1218, 0.0
      %v1520 = vmax.f32 %v1222, 0.0
      %v1521 = vmax.f32 %v1224, 0.0
      %v1522 = vmax.f32 %v1228, 0.0
      %v1523 = vmax.f32 %v1230, 0.0
      %v1524 = vmax.f32 %v1234, 0.0
      %v1525 = vmax.f32 %v1236, 0.0
      %v1526 = vmax.f32 %v1240, 0.0
      %v1527 = vmax.f32 %v1242, 0.0
      %v1528 = vmax.f32 %v1246, 0.0
      %v1529 = vmax.f32 %v1248, 0.0
      %v1530 = vmax.f32 %v1252, 0.0
      %v1531 = vmax.f32 %v1254, 0.0
      %v1532 = vmax.f32 %v1258, 0.0
      %v1533 = vmax.f32 %v1260, 0.0
      %v1534 = vmax.f32 %v1264, 0.0
      %v1535 = vmax.f32 %v1266, 0.0
      %v1536 = vmax.f32 %v1270, 0.0
      %v1537 = vmax.f32 %v1272, 0.0
      %v1538 = vmax.f32 %v1276, 0.0
      %v1539 = vmax.f32 %v1278, 0.0
      %v1540 = vmax.f32 %v1282, 0.0
      %v1541 = vmax.f32 %v1284, 0.0
      %v1542 = vmax.f32 %v1288, 0.0
      %v1543 = vmax.f32 %v1290, 0.0
      %v1544 = vmax.f32 %v1294, 0.0
      %v1545 = vmax.f32 %v1296, 0.0
      %v1546 = vmax.f32 %v1300, 0.0
      %v1547 = vmax.f32 %v1302, 0.0
      %v1548 = vmax.f32 %v1306, 0.0
      %v1549 = vmax.f32 %v1308, 0.0
      %v1550 = vmax.f32 %v1312, 0.0
      %v1551 = vmax.f32 %v1314, 0.0
      %v1552 = vmax.f32 %v1318, 0.0
      %v1553 = vmax.f32 %v1320, 0.0
      %v1554 = vmax.f32 %v1324, 0.0
      %v1555 = vmax.f32 %v1326, 0.0
      %v1556 = vmax.f32 %v1330, 0.0
      %v1557 = vmax.f32 %v1332, 0.0
      %v1558 = vmax.f32 %v1336, 0.0
      %v1559 = vmax.f32 %v1338, 0.0
      %v1560 = vmax.f32 %v1342, 0.0
      %v1561 = vmax.f32 %v1344, 0.0
      %v1562 = vmax.f32 %v1348, 0.0
      %v1563 = vmax.f32 %v1350, 0.0
      %v1564 = vmax.f32 %v1354, 0.0
      %v1565 = vmax.f32 %v1356, 0.0
      %v1566 = vmax.f32 %v1360, 0.0
      %v1567 = vmax.f32 %v1362, 0.0
      %v1568 = vmax.f32 %v1366, 0.0
      %v1569 = vmax.f32 %v1368, 0.0
      %v1570 = vmax.f32 %v1372, 0.0
      %v1571 = vmax.f32 %v1374, 0.0
      %v1572 = vmax.f32 %v1378, 0.0
      %v1573 = vmax.f32 %v1380, 0.0
      %v1574 = vmax.f32 %v1384, 0.0
      %v1575 = vmax.f32 %v1386, 0.0
      %v1576 = vmax.f32 %v1390, 0.0
      %v1577 = vmax.f32 %v1392, 0.0
      %v1578 = vmax.f32 %v1396, 0.0
      %v1579 = vmax.f32 %v1398, 0.0
      %v1580 = vmax.f32 %v1402, 0.0
      %v1581 = vmax.f32 %v1404, 0.0
      %v1582 = vmax.f32 %v1408, 0.0
      %v1583 = vmax.f32 %v1410, 0.0
      %v1584 = vmax.f32 %v1414, 0.0
      %v1585 = vmax.f32 %v1416, 0.0
      %v1586 = vmax.f32 %v1420, 0.0
      %v1587 = vmax.f32 %v1422, 0.0
      %v1588 = vmax.f32 %v1426, 0.0
      %v1589 = vmax.f32 %v1428, 0.0
      %v1590 = vmax.f32 %v1432, 0.0
      %v1591 = vmax.f32 %v1434, 0.0
      %v1592 = vmax.f32 %v1438, 0.0
      %v1593 = vmax.f32 %v1440, 0.0
      %v1594 = vmax.f32 %v1444, 0.0
      %v1595 = vmax.f32 %v1446, 0.0
      %v1596 = vmax.f32 %v1450, 0.0
      %v1597 = vmax.f32 %v1452, 0.0
      %v1598 = vmax.f32 %v1456, 0.0
      %v1599 = vmax.f32 %v1458, 0.0
      %v1600 = vmax.f32 %v1462, 0.0
      %v1601 = vmax.f32 %v1464, 0.0
      %v1602 = vmax.f32 %v1468, 0.0
      %v1603 = vmax.f32 %v1470, 0.0
      %v1604 = vmax.f32 %v1474, 0.0
      %v1605 = vmax.f32 %v1476, 0.0
      %1606 = vst [vmem:[#allocation2] sm:$0xff] %v1478
      %1607 = vst [vmem:[#allocation2 + $0x8] sm:$0xff] %v1479
      %1608 = vst [vmem:[#allocation2 + $0x10] sm:$0xff] %v1480
      %1609 = vst [vmem:[#allocation2 + $0x18] sm:$0xff] %v1481
      %1610 = vst [vmem:[#allocation2 + $0x20] sm:$0xff] %v1482
      %1611 = vst [vmem:[#allocation2 + $0x28] sm:$0xff] %v1483
      %1612 = vst [vmem:[#allocation2 + $0x30] sm:$0xff] %v1484
      %1613 = vst [vmem:[#allocation2 + $0x38] sm:$0xff] %v1485
      %1614 = vst [vmem:[#allocation2 + $0x40] sm:$0xff] %v1486
      %1615 = vst [vmem:[#allocation2 + $0x48] sm:$0xff] %v1487
      %1616 = vst [vmem:[#allocation2 + $0x50] sm:$0xff] %v1488
      %1617 = vst [vmem:[#allocation2 + $0x58] sm:$0xff] %v1489
      %1618 = vst [vmem:[#allocation2 + $0x60] sm:$0xff] %v1490
      %1619 = vst [vmem:[#allocation2 + $0x68] sm:$0xff] %v1491
      %1620 = vst [vmem:[#allocation2 + $0x70] sm:$0xff] %v1492
      %1621 = vst [vmem:[#allocation2 + $0x78] sm:$0xff] %v1493
      %1622 = vst [vmem:[#allocation2 + $0x80] sm:$0xff] %v1494
      %1623 = vst [vmem:[#allocation2 + $0x88] sm:$0xff] %v1495
      %1624 = vst [vmem:[#allocation2 + $0x90] sm:$0xff] %v1496
      %1625 = vst [vmem:[#allocation2 + $0x98] sm:$0xff] %v1497
      %1626 = vst [vmem:[#allocation2 + $0xa0] sm:$0xff] %v1498
      %1627 = vst [vmem:[#allocation2 + $0xa8] sm:$0xff] %v1499
      %1628 = vst [vmem:[#allocation2 + $0xb0] sm:$0xff] %v1500
      %1629 = vst [vmem:[#allocation2 + $0xb8] sm:$0xff] %v1501
      %1630 = vst [vmem:[#allocation2 + $0xc0] sm:$0xff] %v1502
      %1631 = vst [vmem:[#allocation2 + $0xc8] sm:$0xff] %v1503
      %1632 = vst [vmem:[#allocation2 + $0xd0] sm:$0xff] %v1504
      %1633 = vst [vmem:[#allocation2 + $0xd8] sm:$0xff] %v1505
      %1634 = vst [vmem:[#allocation2 + $0xe0] sm:$0xff] %v1506
      %1635 = vst [vmem:[#allocation2 + $0xe8] sm:$0xff] %v1507
      %1636 = vst [vmem:[#allocation2 + $0xf0] sm:$0xff] %v1508
      %1637 = vst [vmem:[#allocation2 + $0xf8] sm:$0xff] %v1509
      %1638 = vst [vmem:[#allocation2 + $0x100] sm:$0xff] %v1510
      %1639 = vst [vmem:[#allocation2 + $0x108] sm:$0xff] %v1511
      %1640 = vst [vmem:[#allocation2 + $0x110] sm:$0xff] %v1512
      %1641 = vst [vmem:[#allocation2 + $0x118] sm:$0xff] %v1513
      %1642 = vst [vmem:[#allocation2 + $0x120] sm:$0xff] %v1514
      %1643 = vst [vmem:[#allocation2 + $0x128] sm:$0xff] %v1515
      %1644 = vst [vmem:[#allocation2 + $0x130] sm:$0xff] %v1516
      %1645 = vst [vmem:[#allocation2 + $0x138] sm:$0xff] %v1517
      %1646 = vst [vmem:[#allocation2 + $0x140] sm:$0xff] %v1518
      %1647 = vst [vmem:[#allocation2 + $0x148] sm:$0xff] %v1519
      %1648 = vst [vmem:[#allocation2 + $0x150] sm:$0xff] %v1520
      %1649 = vst [vmem:[#allocation2 + $0x158] sm:$0xff] %v1521
      %1650 = vst [vmem:[#allocation2 + $0x160] sm:$0xff] %v1522
      %1651 = vst [vmem:[#allocation2 + $0x168] sm:$0xff] %v1523
      %1652 = vst [vmem:[#allocation2 + $0x170] sm:$0xff] %v1524
      %1653 = vst [vmem:[#allocation2 + $0x178] sm:$0xff] %v1525
      %1654 = vst [vmem:[#allocation2 + $0x180] sm:$0xff] %v1526
      %1655 = vst [vmem:[#allocation2 + $0x188] sm:$0xff] %v1527
      %1656 = vst [vmem:[#allocation2 + $0x190] sm:$0xff] %v1528
      %1657 = vst [vmem:[#allocation2 + $0x198] sm:$0xff] %v1529
      %1658 = vst [vmem:[#allocation2 + $0x1a0] sm:$0xff] %v1530
      %1659 = vst [vmem:[#allocation2 + $0x1a8] sm:$0xff] %v1531
      %1660 = vst [vmem:[#allocation2 + $0x1b0] sm:$0xff] %v1532
      %1661 = vst [vmem:[#allocation2 + $0x1b8] sm:$0xff] %v1533
      %1662 = vst [vmem:[#allocation2 + $0x1c0] sm:$0xff] %v1534
      %1663 = vst [vmem:[#allocation2 + $0x1c8] sm:$0xff] %v1535
      %1664 = vst [vmem:[#allocation2 + $0x1d0] sm:$0xff] %v1536
      %1665 = vst [vmem:[#allocation2 + $0x1d8] sm:$0xff] %v1537
      %1666 = vst [vmem:[#allocation2 + $0x1e0] sm:$0xff] %v1538
      %1667 = vst [vmem:[#allocation2 + $0x1e8] sm:$0xff] %v1539
      %1668 = vst [vmem:[#allocation2 + $0x1f0] sm:$0xff] %v1540
      %1669 = vst [vmem:[#allocation2 + $0x1f8] sm:$0xff] %v1541
      %1670 = vst [vmem:[#allocation2 + $0x200] sm:$0xff] %v1542
      %1671 = vst [vmem:[#allocation2 + $0x208] sm:$0xff] %v1543
      %1672 = vst [vmem:[#allocation2 + $0x210] sm:$0xff] %v1544
      %1673 = vst [vmem:[#allocation2 + $0x218] sm:$0xff] %v1545
      %1674 = vst [vmem:[#allocation2 + $0x220] sm:$0xff] %v1546
      %1675 = vst [vmem:[#allocation2 + $0x228] sm:$0xff] %v1547
      %1676 = vst [vmem:[#allocation2 + $0x230] sm:$0xff] %v1548
      %1677 = vst [vmem:[#allocation2 + $0x238] sm:$0xff] %v1549
      %1678 = vst [vmem:[#allocation2 + $0x240] sm:$0xff] %v1550
      %1679 = vst [vmem:[#allocation2 + $0x248] sm:$0xff] %v1551
      %1680 = vst [vmem:[#allocation2 + $0x250] sm:$0xff] %v1552
      %1681 = vst [vmem:[#allocation2 + $0x258] sm:$0xff] %v1553
      %1682 = vst [vmem:[#allocation2 + $0x260] sm:$0xff] %v1554
      %1683 = vst [vmem:[#allocation2 + $0x268] sm:$0xff] %v1555
      %1684 = vst [vmem:[#allocation2 + $0x270] sm:$0xff] %v1556
      %1685 = vst [vmem:[#allocation2 + $0x278] sm:$0xff] %v1557
      %1686 = vst [vmem:[#allocation2 + $0x280] sm:$0xff] %v1558
      %1687 = vst [vmem:[#allocation2 + $0x288] sm:$0xff] %v1559
      %1688 = vst [vmem:[#allocation2 + $0x290] sm:$0xff] %v1560
      %1689 = vst [vmem:[#allocation2 + $0x298] sm:$0xff] %v1561
      %1690 = vst [vmem:[#allocation2 + $0x2a0] sm:$0xff] %v1562
      %1691 = vst [vmem:[#allocation2 + $0x2a8] sm:$0xff] %v1563
      %1692 = vst [vmem:[#allocation2 + $0x2b0] sm:$0xff] %v1564
      %1693 = vst [vmem:[#allocation2 + $0x2b8] sm:$0xff] %v1565
      %1694 = vst [vmem:[#allocation2 + $0x2c0] sm:$0xff] %v1566
      %1695 = vst [vmem:[#allocation2 + $0x2c8] sm:$0xff] %v1567
      %1696 = vst [vmem:[#allocation2 + $0x2d0] sm:$0xff] %v1568
      %1697 = vst [vmem:[#allocation2 + $0x2d8] sm:$0xff] %v1569
      %1698 = vst [vmem:[#allocation2 + $0x2e0] sm:$0xff] %v1570
      %1699 = vst [vmem:[#allocation2 + $0x2e8] sm:$0xff] %v1571
      %1700 = vst [vmem:[#allocation2 + $0x2f0] sm:$0xff] %v1572
      %1701 = vst [vmem:[#allocation2 + $0x2f8] sm:$0xff] %v1573
      %1702 = vst [vmem:[#allocation2 + $0x300] sm:$0xff] %v1574
      %1703 = vst [vmem:[#allocation2 + $0x308] sm:$0xff] %v1575
      %1704 = vst [vmem:[#allocation2 + $0x310] sm:$0xff] %v1576
      %1705 = vst [vmem:[#allocation2 + $0x318] sm:$0xff] %v1577
      %1706 = vst [vmem:[#allocation2 + $0x320] sm:$0xff] %v1578
      %1707 = vst [vmem:[#allocation2 + $0x328] sm:$0xff] %v1579
      %1708 = vst [vmem:[#allocation2 + $0x330] sm:$0xff] %v1580
      %1709 = vst [vmem:[#allocation2 + $0x338] sm:$0xff] %v1581
      %1710 = vst [vmem:[#allocation2 + $0x340] sm:$0xff] %v1582
      %1711 = vst [vmem:[#allocation2 + $0x348] sm:$0xff] %v1583
      %1712 = vst [vmem:[#allocation2 + $0x350] sm:$0xff] %v1584
      %1713 = vst [vmem:[#allocation2 + $0x358] sm:$0xff] %v1585
      %1714 = vst [vmem:[#allocation2 + $0x360] sm:$0xff] %v1586
      %1715 = vst [vmem:[#allocation2 + $0x368] sm:$0xff] %v1587
      %1716 = vst [vmem:[#allocation2 + $0x370] sm:$0xff] %v1588
      %1717 = vst [vmem:[#allocation2 + $0x378] sm:$0xff] %v1589
      %1718 = vst [vmem:[#allocation2 + $0x380] sm:$0xff] %v1590
      %1719 = vst [vmem:[#allocation2 + $0x388] sm:$0xff] %v1591
      %1720 = vst [vmem:[#allocation2 + $0x390] sm:$0xff] %v1592
      %1721 = vst [vmem:[#allocation2 + $0x398] sm:$0xff] %v1593
      %1722 = vst [vmem:[#allocation2 + $0x3a0] sm:$0xff] %v1594
      %1723 = vst [vmem:[#allocation2 + $0x3a8] sm:$0xff] %v1595
      %1724 = vst [vmem:[#allocation2 + $0x3b0] sm:$0xff] %v1596
      %1725 = vst [vmem:[#allocation2 + $0x3b8] sm:$0xff] %v1597
      %1726 = vst [vmem:[#allocation2 + $0x3c0] sm:$0xff] %v1598
      %1727 = vst [vmem:[#allocation2 + $0x3c8] sm:$0xff] %v1599
      %1728 = vst [vmem:[#allocation2 + $0x3d0] sm:$0xff] %v1600
      %1729 = vst [vmem:[#allocation2 + $0x3d8] sm:$0xff] %v1601
      %1730 = vst [vmem:[#allocation2 + $0x3e0] sm:$0xff] %v1602
      %1731 = vst [vmem:[#allocation2 + $0x3e8] sm:$0xff] %v1603
      %1732 = vst [vmem:[#allocation2 + $0x3f0] sm:$0xff] %v1604
      %1733 = vst [vmem:[#allocation2 + $0x3f8] sm:$0xff] %v1605
      %v1734 = vld [vmem:[%s3] sm:$0xff]
      %v1735 = vld [vmem:[%s3 + $0x8] sm:$0xff]
      %v1736 = vld [vmem:[%s3 + $0x10] sm:$0xff]
      %v1737 = vld [vmem:[%s3 + $0x18] sm:$0xff]
      %v1738 = vld [vmem:[%s3 + $0x20] sm:$0xff]
      %v1739 = vld [vmem:[%s3 + $0x28] sm:$0xff]
      %v1740 = vld [vmem:[%s3 + $0x30] sm:$0xff]
      %v1741 = vld [vmem:[%s3 + $0x38] sm:$0xff]
      %v1742 = vld [vmem:[%s3 + $0x40] sm:$0xff]
      %v1743 = vld [vmem:[%s3 + $0x48] sm:$0xff]
      %v1744 = vld [vmem:[%s3 + $0x50] sm:$0xff]
      %v1745 = vld [vmem:[%s3 + $0x58] sm:$0xff]
      %v1746 = vld [vmem:[%s3 + $0x60] sm:$0xff]
      %v1747 = vld [vmem:[%s3 + $0x68] sm:$0xff]
      %v1748 = vld [vmem:[%s3 + $0x70] sm:$0xff]
      %v1749 = vld [vmem:[%s3 + $0x78] sm:$0xff]
      %v1750 = vld [vmem:[%s3 + $0x80] sm:$0xff]
      %v1751 = vld [vmem:[%s3 + $0x88] sm:$0xff]
      %v1752 = vld [vmem:[%s3 + $0x90] sm:$0xff]
      %v1753 = vld [vmem:[%s3 + $0x98] sm:$0xff]
      %v1754 = vld [vmem:[%s3 + $0xa0] sm:$0xff]
      %v1755 = vld [vmem:[%s3 + $0xa8] sm:$0xff]
      %v1756 = vld [vmem:[%s3 + $0xb0] sm:$0xff]
      %v1757 = vld [vmem:[%s3 + $0xb8] sm:$0xff]
      %v1758 = vld [vmem:[%s3 + $0xc0] sm:$0xff]
      %v1759 = vld [vmem:[%s3 + $0xc8] sm:$0xff]
      %v1760 = vld [vmem:[%s3 + $0xd0] sm:$0xff]
      %v1761 = vld [vmem:[%s3 + $0xd8] sm:$0xff]
      %v1762 = vld [vmem:[%s3 + $0xe0] sm:$0xff]
      %v1763 = vld [vmem:[%s3 + $0xe8] sm:$0xff]
      %v1764 = vld [vmem:[%s3 + $0xf0] sm:$0xff]
      %v1765 = vld [vmem:[%s3 + $0xf8] sm:$0xff]
      %v1766 = vld [vmem:[%s3 + $0x100] sm:$0xff]
      %v1767 = vld [vmem:[%s3 + $0x108] sm:$0xff]
      %v1768 = vld [vmem:[%s3 + $0x110] sm:$0xff]
      %v1769 = vld [vmem:[%s3 + $0x118] sm:$0xff]
      %v1770 = vld [vmem:[%s3 + $0x120] sm:$0xff]
      %v1771 = vld [vmem:[%s3 + $0x128] sm:$0xff]
      %v1772 = vld [vmem:[%s3 + $0x130] sm:$0xff]
      %v1773 = vld [vmem:[%s3 + $0x138] sm:$0xff]
      %v1774 = vld [vmem:[%s3 + $0x140] sm:$0xff]
      %v1775 = vld [vmem:[%s3 + $0x148] sm:$0xff]
      %v1776 = vld [vmem:[%s3 + $0x150] sm:$0xff]
      %v1777 = vld [vmem:[%s3 + $0x158] sm:$0xff]
      %v1778 = vld [vmem:[%s3 + $0x160] sm:$0xff]
      %v1779 = vld [vmem:[%s3 + $0x168] sm:$0xff]
      %v1780 = vld [vmem:[%s3 + $0x170] sm:$0xff]
      %v1781 = vld [vmem:[%s3 + $0x178] sm:$0xff]
      %v1782 = vld [vmem:[%s3 + $0x180] sm:$0xff]
      %v1783 = vld [vmem:[%s3 + $0x188] sm:$0xff]
      %v1784 = vld [vmem:[%s3 + $0x190] sm:$0xff]
      %v1785 = vld [vmem:[%s3 + $0x198] sm:$0xff]
      %v1786 = vld [vmem:[%s3 + $0x1a0] sm:$0xff]
      %v1787 = vld [vmem:[%s3 + $0x1a8] sm:$0xff]
      %v1788 = vld [vmem:[%s3 + $0x1b0] sm:$0xff]
      %v1789 = vld [vmem:[%s3 + $0x1b8] sm:$0xff]
      %v1790 = vld [vmem:[%s3 + $0x1c0] sm:$0xff]
      %v1791 = vld [vmem:[%s3 + $0x1c8] sm:$0xff]
      %v1792 = vld [vmem:[%s3 + $0x1d0] sm:$0xff]
      %v1793 = vld [vmem:[%s3 + $0x1d8] sm:$0xff]
      %v1794 = vld [vmem:[%s3 + $0x1e0] sm:$0xff]
      %v1795 = vld [vmem:[%s3 + $0x1e8] sm:$0xff]
      %v1796 = vld [vmem:[%s3 + $0x1f0] sm:$0xff]
      %v1797 = vld [vmem:[%s3 + $0x1f8] sm:$0xff]
      %v1798 = vld [vmem:[#allocation2] sm:$0xff]
      %v1799 = vld [vmem:[#allocation2 + $0x8] sm:$0xff]
      %v1800 = vld [vmem:[#allocation2 + $0x10] sm:$0xff]
      %v1801 = vld [vmem:[#allocation2 + $0x18] sm:$0xff]
      %v1802 = vld [vmem:[#allocation2 + $0x20] sm:$0xff]
      %v1803 = vld [vmem:[#allocation2 + $0x28] sm:$0xff]
      %v1804 = vld [vmem:[#allocation2 + $0x30] sm:$0xff]
      %v1805 = vld [vmem:[#allocation2 + $0x38] sm:$0xff]
      %v1806 = vld [vmem:[#allocation2 + $0x40] sm:$0xff]
      %v1807 = vld [vmem:[#allocation2 + $0x48] sm:$0xff]
      %v1808 = vld [vmem:[#allocation2 + $0x50] sm:$0xff]
      %v1809 = vld [vmem:[#allocation2 + $0x58] sm:$0xff]
      %v1810 = vld [vmem:[#allocation2 + $0x60] sm:$0xff]
      %v1811 = vld [vmem:[#allocation2 + $0x68] sm:$0xff]
      %v1812 = vld [vmem:[#allocation2 + $0x70] sm:$0xff]
      %v1813 = vld [vmem:[#allocation2 + $0x78] sm:$0xff]
      %v1814 = vld [vmem:[#allocation2 + $0x80] sm:$0xff]
      %v1815 = vld [vmem:[#allocation2 + $0x88] sm:$0xff]
      %v1816 = vld [vmem:[#allocation2 + $0x90] sm:$0xff]
      %v1817 = vld [vmem:[#allocation2 + $0x98] sm:$0xff]
      %v1818 = vld [vmem:[#allocation2 + $0xa0] sm:$0xff]
      %v1819 = vld [vmem:[#allocation2 + $0xa8] sm:$0xff]
      %v1820 = vld [vmem:[#allocation2 + $0xb0] sm:$0xff]
      %v1821 = vld [vmem:[#allocation2 + $0xb8] sm:$0xff]
      %v1822 = vld [vmem:[#allocation2 + $0xc0] sm:$0xff]
      %v1823 = vld [vmem:[#allocation2 + $0xc8] sm:$0xff]
      %v1824 = vld [vmem:[#allocation2 + $0xd0] sm:$0xff]
      %v1825 = vld [vmem:[#allocation2 + $0xd8] sm:$0xff]
      %v1826 = vld [vmem:[#allocation2 + $0xe0] sm:$0xff]
      %v1827 = vld [vmem:[#allocation2 + $0xe8] sm:$0xff]
      %v1828 = vld [vmem:[#allocation2 + $0xf0] sm:$0xff]
      %v1829 = vld [vmem:[#allocation2 + $0xf8] sm:$0xff]
      %v1830 = vld [vmem:[#allocation2 + $0x100] sm:$0xff]
      %v1831 = vld [vmem:[#allocation2 + $0x108] sm:$0xff]
      %v1832 = vld [vmem:[#allocation2 + $0x110] sm:$0xff]
      %v1833 = vld [vmem:[#allocation2 + $0x118] sm:$0xff]
      %v1834 = vld [vmem:[#allocation2 + $0x120] sm:$0xff]
      %v1835 = vld [vmem:[#allocation2 + $0x128] sm:$0xff]
      %v1836 = vld [vmem:[#allocation2 + $0x130] sm:$0xff]
      %v1837 = vld [vmem:[#allocation2 + $0x138] sm:$0xff]
      %v1838 = vld [vmem:[#allocation2 + $0x140] sm:$0xff]
      %v1839 = vld [vmem:[#allocation2 + $0x148] sm:$0xff]
      %v1840 = vld [vmem:[#allocation2 + $0x150] sm:$0xff]
      %v1841 = vld [vmem:[#allocation2 + $0x158] sm:$0xff]
      %v1842 = vld [vmem:[#allocation2 + $0x160] sm:$0xff]
      %v1843 = vld [vmem:[#allocation2 + $0x168] sm:$0xff]
      %v1844 = vld [vmem:[#allocation2 + $0x170] sm:$0xff]
      %v1845 = vld [vmem:[#allocation2 + $0x178] sm:$0xff]
      %v1846 = vld [vmem:[#allocation2 + $0x180] sm:$0xff]
      %v1847 = vld [vmem:[#allocation2 + $0x188] sm:$0xff]
      %v1848 = vld [vmem:[#allocation2 + $0x190] sm:$0xff]
      %v1849 = vld [vmem:[#allocation2 + $0x198] sm:$0xff]
      %v1850 = vld [vmem:[#allocation2 + $0x1a0] sm:$0xff]
      %v1851 = vld [vmem:[#allocation2 + $0x1a8] sm:$0xff]
      %v1852 = vld [vmem:[#allocation2 + $0x1b0] sm:$0xff]
      %v1853 = vld [vmem:[#allocation2 + $0x1b8] sm:$0xff]
      %v1854 = vld [vmem:[#allocation2 + $0x1c0] sm:$0xff]
      %v1855 = vld [vmem:[#allocation2 + $0x1c8] sm:$0xff]
      %v1856 = vld [vmem:[#allocation2 + $0x1d0] sm:$0xff]
      %v1857 = vld [vmem:[#allocation2 + $0x1d8] sm:$0xff]
      %v1858 = vld [vmem:[#allocation2 + $0x1e0] sm:$0xff]
      %v1859 = vld [vmem:[#allocation2 + $0x1e8] sm:$0xff]
      %v1860 = vld [vmem:[#allocation2 + $0x1f0] sm:$0xff]
      %v1861 = vld [vmem:[#allocation2 + $0x1f8] sm:$0xff]
      %v1862 = vld [vmem:[#allocation2 + $0x200] sm:$0xff]
      %v1863 = vld [vmem:[#allocation2 + $0x208] sm:$0xff]
      %v1864 = vld [vmem:[#allocation2 + $0x210] sm:$0xff]
      %v1865 = vld [vmem:[#allocation2 + $0x218] sm:$0xff]
      %v1866 = vld [vmem:[#allocation2 + $0x220] sm:$0xff]
      %v1867 = vld [vmem:[#allocation2 + $0x228] sm:$0xff]
      %v1868 = vld [vmem:[#allocation2 + $0x230] sm:$0xff]
      %v1869 = vld [vmem:[#allocation2 + $0x238] sm:$0xff]
      %v1870 = vld [vmem:[#allocation2 + $0x240] sm:$0xff]
      %v1871 = vld [vmem:[#allocation2 + $0x248] sm:$0xff]
      %v1872 = vld [vmem:[#allocation2 + $0x250] sm:$0xff]
      %v1873 = vld [vmem:[#allocation2 + $0x258] sm:$0xff]
      %v1874 = vld [vmem:[#allocation2 + $0x260] sm:$0xff]
      %v1875 = vld [vmem:[#allocation2 + $0x268] sm:$0xff]
      %v1876 = vld [vmem:[#allocation2 + $0x270] sm:$0xff]
      %v1877 = vld [vmem:[#allocation2 + $0x278] sm:$0xff]
      %v1878 = vld [vmem:[#allocation2 + $0x280] sm:$0xff]
      %v1879 = vld [vmem:[#allocation2 + $0x288] sm:$0xff]
      %v1880 = vld [vmem:[#allocation2 + $0x290] sm:$0xff]
      %v1881 = vld [vmem:[#allocation2 + $0x298] sm:$0xff]
      %v1882 = vld [vmem:[#allocation2 + $0x2a0] sm:$0xff]
      %v1883 = vld [vmem:[#allocation2 + $0x2a8] sm:$0xff]
      %v1884 = vld [vmem:[#allocation2 + $0x2b0] sm:$0xff]
      %v1885 = vld [vmem:[#allocation2 + $0x2b8] sm:$0xff]
      %v1886 = vld [vmem:[#allocation2 + $0x2c0] sm:$0xff]
      %v1887 = vld [vmem:[#allocation2 + $0x2c8] sm:$0xff]
      %v1888 = vld [vmem:[#allocation2 + $0x2d0] sm:$0xff]
      %v1889 = vld [vmem:[#allocation2 + $0x2d8] sm:$0xff]
      %v1890 = vld [vmem:[#allocation2 + $0x2e0] sm:$0xff]
      %v1891 = vld [vmem:[#allocation2 + $0x2e8] sm:$0xff]
      %v1892 = vld [vmem:[#allocation2 + $0x2f0] sm:$0xff]
      %v1893 = vld [vmem:[#allocation2 + $0x2f8] sm:$0xff]
      %v1894 = vld [vmem:[#allocation2 + $0x300] sm:$0xff]
      %v1895 = vld [vmem:[#allocation2 + $0x308] sm:$0xff]
      %v1896 = vld [vmem:[#allocation2 + $0x310] sm:$0xff]
      %v1897 = vld [vmem:[#allocation2 + $0x318] sm:$0xff]
      %v1898 = vld [vmem:[#allocation2 + $0x320] sm:$0xff]
      %v1899 = vld [vmem:[#allocation2 + $0x328] sm:$0xff]
      %v1900 = vld [vmem:[#allocation2 + $0x330] sm:$0xff]
      %v1901 = vld [vmem:[#allocation2 + $0x338] sm:$0xff]
      %v1902 = vld [vmem:[#allocation2 + $0x340] sm:$0xff]
      %v1903 = vld [vmem:[#allocation2 + $0x348] sm:$0xff]
      %v1904 = vld [vmem:[#allocation2 + $0x350] sm:$0xff]
      %v1905 = vld [vmem:[#allocation2 + $0x358] sm:$0xff]
      %v1906 = vld [vmem:[#allocation2 + $0x360] sm:$0xff]
      %v1907 = vld [vmem:[#allocation2 + $0x368] sm:$0xff]
      %v1908 = vld [vmem:[#allocation2 + $0x370] sm:$0xff]
      %v1909 = vld [vmem:[#allocation2 + $0x378] sm:$0xff]
      %v1910 = vld [vmem:[#allocation2 + $0x380] sm:$0xff]
      %v1911 = vld [vmem:[#allocation2 + $0x388] sm:$0xff]
      %v1912 = vld [vmem:[#allocation2 + $0x390] sm:$0xff]
      %v1913 = vld [vmem:[#allocation2 + $0x398] sm:$0xff]
      %v1914 = vld [vmem:[#allocation2 + $0x3a0] sm:$0xff]
      %v1915 = vld [vmem:[#allocation2 + $0x3a8] sm:$0xff]
      %v1916 = vld [vmem:[#allocation2 + $0x3b0] sm:$0xff]
      %v1917 = vld [vmem:[#allocation2 + $0x3b8] sm:$0xff]
      %v1918 = vld [vmem:[#allocation2 + $0x3c0] sm:$0xff]
      %v1919 = vld [vmem:[#allocation2 + $0x3c8] sm:$0xff]
      %v1920 = vld [vmem:[#allocation2 + $0x3d0] sm:$0xff]
      %v1921 = vld [vmem:[#allocation2 + $0x3d8] sm:$0xff]
      %v1922 = vld [vmem:[#allocation2 + $0x3e0] sm:$0xff]
      %v1923 = vld [vmem:[#allocation2 + $0x3e8] sm:$0xff]
      %v1924 = vld [vmem:[#allocation2 + $0x3f0] sm:$0xff]
      %v1925 = vld [vmem:[#allocation2 + $0x3f8] sm:$0xff]
      %1926 = vmatprep.subr.mxu0 %v1829
      %1927 = vmatpush1.msra.mxu0 %v1828
      %1928 = vmatprep.subr.mxu0 %v1827
      %1929 = vmatpush1.msra.mxu0 %v1826
      %1930 = vmatprep.subr.mxu0 %v1825
      %1931 = vmatpush1.msra.mxu0 %v1824
      %1932 = vmatprep.subr.mxu0 %v1823
      %1933 = vmatpush1.msra.mxu0 %v1822
      %1934 = vmatprep.subr.mxu0 %v1821
      %1935 = vmatpush1.msra.mxu0 %v1820
      %1936 = vmatprep.subr.mxu0 %v1819
      %1937 = vmatpush1.msra.mxu0 %v1818
      %1938 = vmatprep.subr.mxu0 %v1817
      %1939 = vmatpush1.msra.mxu0 %v1816
      %1940 = vmatprep.subr.mxu0 %v1815
      %1941 = vmatpush1.msra.mxu0 %v1814
      %1942 = vmatprep.subr.mxu0 %v1813
      %1943 = vmatpush1.msra.mxu0 %v1812
      %1944 = vmatprep.subr.mxu0 %v1811
      %1945 = vmatpush1.msra.mxu0 %v1810
      %1946 = vmatprep.subr.mxu0 %v1809
      %1947 = vmatpush1.msra.mxu0 %v1808
      %1948 = vmatprep.subr.mxu0 %v1807
      %1949 = vmatpush1.msra.mxu0 %v1806
      %1950 = vmatprep.subr.mxu0 %v1805
      %1951 = vmatpush1.msra.mxu0 %v1804
      %1952 = vmatprep.subr.mxu0 %v1803
      %1953 = vmatpush1.msra.mxu0 %v1802
      %1954 = vmatprep.subr.mxu0 %v1801
      %1955 = vmatpush1.msra.mxu0 %v1800
      %1956 = vmatprep.subr.mxu0 %v1799
      %1957 = vmatpush1.msra.mxu0 %v1798
      %1958 = vmatprep.subr.mxu0 %v1861
      %1959 = vmatpush2.msra.mxu0 %v1860
      %1960 = vmatprep.subr.mxu0 %v1859
      %1961 = vmatpush2.msra.mxu0 %v1858
      %1962 = vmatprep.subr.mxu0 %v1857
      %1963 = vmatpush2.msra.mxu0 %v1856
      %1964 = vmatprep.subr.mxu0 %v1855
      %1965 = vmatpush2.msra.mxu0 %v1854
      %1966 = vmatprep.subr.mxu0 %v1853
      %1967 = vmatpush2.msra.mxu0 %v1852
      %1968 = vmatprep.subr.mxu0 %v1851
      %1969 = vmatpush2.msra.mxu0 %v1850
      %1970 = vmatprep.subr.mxu0 %v1849
      %1971 = vmatpush2.msra.mxu0 %v1848
      %1972 = vmatprep.subr.mxu0 %v1847
      %1973 = vmatpush2.msra.mxu0 %v1846
      %1974 = vmatprep.subr.mxu0 %v1845
      %1975 = vmatpush2.msra.mxu0 %v1844
      %1976 = vmatprep.subr.mxu0 %v1843
      %1977 = vmatpush2.msra.mxu0 %v1842
      %1978 = vmatprep.subr.mxu0 %v1841
      %1979 = vmatpush2.msra.mxu0 %v1840
      %1980 = vmatprep.subr.mxu0 %v1839
      %1981 = vmatpush2.msra.mxu0 %v1838
      %1982 = vmatprep.subr.mxu0 %v1837
      %1983 = vmatpush2.msra.mxu0 %v1836
      %1984 = vmatprep.subr.mxu0 %v1835
      %1985 = vmatpush2.msra.mxu0 %v1834
      %1986 = vmatprep.subr.mxu0 %v1833
      %1987 = vmatpush2.msra.mxu0 %v1832
      %1988 = vmatprep.subr.mxu0 %v1831
      %1989 = vmatpush2.msra.mxu0 %v1830
      %1990 = vmatprep.mubr.f32.mxu0 %v1735
      %1991 = vmatmul.mubr.f32.gmra.mxu0 %v1734
      %v1992 = vpop.f32.mrf.mxu0
      %v1993 = vadd.f32 0.0, %v1992
      %v1994 = vpop.f32.mrf.mxu0
      %v1995 = vadd.f32 0.0, %v1994
      %1996 = vmatprep.mubr.f32.mxu0 %v1739
      %1997 = vmatmul.mubr.f32.gmra.mxu0 %v1738
      %v1998 = vpop.f32.mrf.mxu0
      %v1999 = vadd.f32 0.0, %v1998
      %v2000 = vpop.f32.mrf.mxu0
      %v2001 = vadd.f32 0.0, %v2000
      %2002 = vmatprep.mubr.f32.mxu0 %v1743
      %2003 = vmatmul.mubr.f32.gmra.mxu0 %v1742
      %v2004 = vpop.f32.mrf.mxu0
      %v2005 = vadd.f32 0.0, %v2004
      %v2006 = vpop.f32.mrf.mxu0
      %v2007 = vadd.f32 0.0, %v2006
      %2008 = vmatprep.mubr.f32.mxu0 %v1747
      %2009 = vmatmul.mubr.f32.gmra.mxu0 %v1746
      %v2010 = vpop.f32.mrf.mxu0
      %v2011 = vadd.f32 0.0, %v2010
      %v2012 = vpop.f32.mrf.mxu0
      %v2013 = vadd.f32 0.0, %v2012
      %2014 = vmatprep.mubr.f32.mxu0 %v1751
      %2015 = vmatmul.mubr.f32.gmra.mxu0 %v1750
      %v2016 = vpop.f32.mrf.mxu0
      %v2017 = vadd.f32 0.0, %v2016
      %v2018 = vpop.f32.mrf.mxu0
      %v2019 = vadd.f32 0.0, %v2018
      %2020 = vmatprep.mubr.f32.mxu0 %v1755
      %2021 = vmatmul.mubr.f32.gmra.mxu0 %v1754
      %v2022 = vpop.f32.mrf.mxu0
      %v2023 = vadd.f32 0.0, %v2022
      %v2024 = vpop.f32.mrf.mxu0
      %v2025 = vadd.f32 0.0, %v2024
      %2026 = vmatprep.mubr.f32.mxu0 %v1759
      %2027 = vmatmul.mubr.f32.gmra.mxu0 %v1758
      %v2028 = vpop.f32.mrf.mxu0
      %v2029 = vadd.f32 0.0, %v2028
      %v2030 = vpop.f32.mrf.mxu0
      %v2031 = vadd.f32 0.0, %v2030
      %2032 = vmatprep.mubr.f32.mxu0 %v1763
      %2033 = vmatmul.mubr.f32.gmra.mxu0 %v1762
      %v2034 = vpop.f32.mrf.mxu0
      %v2035 = vadd.f32 0.0, %v2034
      %v2036 = vpop.f32.mrf.mxu0
      %v2037 = vadd.f32 0.0, %v2036
      %2038 = vmatprep.mubr.f32.mxu0 %v1767
      %2039 = vmatmul.mubr.f32.gmra.mxu0 %v1766
      %v2040 = vpop.f32.mrf.mxu0
      %v2041 = vadd.f32 0.0, %v2040
      %v2042 = vpop.f32.mrf.mxu0
      %v2043 = vadd.f32 0.0, %v2042
      %2044 = vmatprep.mubr.f32.mxu0 %v1771
      %2045 = vmatmul.mubr.f32.gmra.mxu0 %v1770
      %v2046 = vpop.f32.mrf.mxu0
      %v2047 = vadd.f32 0.0, %v2046
      %v2048 = vpop.f32.mrf.mxu0
      %v2049 = vadd.f32 0.0, %v2048
      %2050 = vmatprep.mubr.f32.mxu0 %v1775
      %2051 = vmatmul.mubr.f32.gmra.mxu0 %v1774
      %v2052 = vpop.f32.mrf.mxu0
      %v2053 = vadd.f32 0.0, %v2052
      %v2054 = vpop.f32.mrf.mxu0
      %v2055 = vadd.f32 0.0, %v2054
      %2056 = vmatprep.mubr.f32.mxu0 %v1779
      %2057 = vmatmul.mubr.f32.gmra.mxu0 %v1778
      %v2058 = vpop.f32.mrf.mxu0
      %v2059 = vadd.f32 0.0, %v2058
      %v2060 = vpop.f32.mrf.mxu0
      %v2061 = vadd.f32 0.0, %v2060
      %2062 = vmatprep.mubr.f32.mxu0 %v1783
      %2063 = vmatmul.mubr.f32.gmra.mxu0 %v1782
      %v2064 = vpop.f32.mrf.mxu0
      %v2065 = vadd.f32 0.0, %v2064
      %v2066 = vpop.f32.mrf.mxu0
      %v2067 = vadd.f32 0.0, %v2066
      %2068 = vmatprep.mubr.f32.mxu0 %v1787
      %2069 = vmatmul.mubr.f32.gmra.mxu0 %v1786
      %v2070 = vpop.f32.mrf.mxu0
      %v2071 = vadd.f32 0.0, %v2070
      %v2072 = vpop.f32.mrf.mxu0
      %v2073 = vadd.f32 0.0, %v2072
      %2074 = vmatprep.mubr.f32.mxu0 %v1791
      %2075 = vmatmul.mubr.f32.gmra.mxu0 %v1790
      %v2076 = vpop.f32.mrf.mxu0
      %v2077 = vadd.f32 0.0, %v2076
      %v2078 = vpop.f32.mrf.mxu0
      %v2079 = vadd.f32 0.0, %v2078
      %2080 = vmatprep.mubr.f32.mxu0 %v1795
      %2081 = vmatmul.mubr.f32.gmra.mxu0 %v1794
      %v2082 = vpop.f32.mrf.mxu0
      %v2083 = vadd.f32 0.0, %v2082
      %v2084 = vpop.f32.mrf.mxu0
      %v2085 = vadd.f32 0.0, %v2084
      %2086 = vdwg.mxu0
      %2087 = vmatprep.subr.mxu0 %v1893
      %2088 = vmatpush1.msra.mxu0 %v1892
      %2089 = vmatprep.subr.mxu0 %v1891
      %2090 = vmatpush1.msra.mxu0 %v1890
      %2091 = vmatprep.subr.mxu0 %v1889
      %2092 = vmatpush1.msra.mxu0 %v1888
      %2093 = vmatprep.subr.mxu0 %v1887
      %2094 = vmatpush1.msra.mxu0 %v1886
      %2095 = vmatprep.subr.mxu0 %v1885
      %2096 = vmatpush1.msra.mxu0 %v1884
      %2097 = vmatprep.subr.mxu0 %v1883
      %2098 = vmatpush1.msra.mxu0 %v1882
      %2099 = vmatprep.subr.mxu0 %v1881
      %2100 = vmatpush1.msra.mxu0 %v1880
      %2101 = vmatprep.subr.mxu0 %v1879
      %2102 = vmatpush1.msra.mxu0 %v1878
      %2103 = vmatprep.subr.mxu0 %v1877
      %2104 = vmatpush1.msra.mxu0 %v1876
      %2105 = vmatprep.subr.mxu0 %v1875
      %2106 = vmatpush1.msra.mxu0 %v1874
      %2107 = vmatprep.subr.mxu0 %v1873
      %2108 = vmatpush1.msra.mxu0 %v1872
      %2109 = vmatprep.subr.mxu0 %v1871
      %2110 = vmatpush1.msra.mxu0 %v1870
      %2111 = vmatprep.subr.mxu0 %v1869
      %2112 = vmatpush1.msra.mxu0 %v1868
      %2113 = vmatprep.subr.mxu0 %v1867
      %2114 = vmatpush1.msra.mxu0 %v1866
      %2115 = vmatprep.subr.mxu0 %v1865
      %2116 = vmatpush1.msra.mxu0 %v1864
      %2117 = vmatprep.subr.mxu0 %v1863
      %2118 = vmatpush1.msra.mxu0 %v1862
      %2119 = vmatprep.subr.mxu0 %v1925
      %2120 = vmatpush2.msra.mxu0 %v1924
      %2121 = vmatprep.subr.mxu0 %v1923
      %2122 = vmatpush2.msra.mxu0 %v1922
      %2123 = vmatprep.subr.mxu0 %v1921
      %2124 = vmatpush2.msra.mxu0 %v1920
      %2125 = vmatprep.subr.mxu0 %v1919
      %2126 = vmatpush2.msra.mxu0 %v1918
      %2127 = vmatprep.subr.mxu0 %v1917
      %2128 = vmatpush2.msra.mxu0 %v1916
      %2129 = vmatprep.subr.mxu0 %v1915
      %2130 = vmatpush2.msra.mxu0 %v1914
      %2131 = vmatprep.subr.mxu0 %v1913
      %2132 = vmatpush2.msra.mxu0 %v1912
      %2133 = vmatprep.subr.mxu0 %v1911
      %2134 = vmatpush2.msra.mxu0 %v1910
      %2135 = vmatprep.subr.mxu0 %v1909
      %2136 = vmatpush2.msra.mxu0 %v1908
      %2137 = vmatprep.subr.mxu0 %v1907
      %2138 = vmatpush2.msra.mxu0 %v1906
      %2139 = vmatprep.subr.mxu0 %v1905
      %2140 = vmatpush2.msra.mxu0 %v1904
      %2141 = vmatprep.subr.mxu0 %v1903
      %2142 = vmatpush2.msra.mxu0 %v1902
      %2143 = vmatprep.subr.mxu0 %v1901
      %2144 = vmatpush2.msra.mxu0 %v1900
      %2145 = vmatprep.subr.mxu0 %v1899
      %2146 = vmatpush2.msra.mxu0 %v1898
      %2147 = vmatprep.subr.mxu0 %v1897
      %2148 = vmatpush2.msra.mxu0 %v1896
      %2149 = vmatprep.subr.mxu0 %v1895
      %2150 = vmatpush2.msra.mxu0 %v1894
      %2151 = vmatprep.mubr.f32.mxu0 %v1737
      %2152 = vmatmul.mubr.f32.gmra.mxu0 %v1736
      %v2153 = vpop.f32.mrf.mxu0
      %v2154 = vadd.f32 %v1993, %v2153
      %v2155 = vpop.f32.mrf.mxu0
      %v2156 = vadd.f32 %v1995, %v2155
      %2157 = vmatprep.mubr.f32.mxu0 %v1741
      %2158 = vmatmul.mubr.f32.gmra.mxu0 %v1740
      %v2159 = vpop.f32.mrf.mxu0
      %v2160 = vadd.f32 %v1999, %v2159
      %v2161 = vpop.f32.mrf.mxu0
      %v2162 = vadd.f32 %v2001, %v2161
      %2163 = vmatprep.mubr.f32.mxu0 %v1745
      %2164 = vmatmul.mubr.f32.gmra.mxu0 %v1744
      %v2165 = vpop.f32.mrf.mxu0
      %v2166 = vadd.f32 %v2005, %v2165
      %v2167 = vpop.f32.mrf.mxu0
      %v2168 = vadd.f32 %v2007, %v2167
      %2169 = vmatprep.mubr.f32.mxu0 %v1749
      %2170 = vmatmul.mubr.f32.gmra.mxu0 %v1748
      %v2171 = vpop.f32.mrf.mxu0
      %v2172 = vadd.f32 %v2011, %v2171
      %v2173 = vpop.f32.mrf.mxu0
      %v2174 = vadd.f32 %v2013, %v2173
      %2175 = vmatprep.mubr.f32.mxu0 %v1753
      %2176 = vmatmul.mubr.f32.gmra.mxu0 %v1752
      %v2177 = vpop.f32.mrf.mxu0
      %v2178 = vadd.f32 %v2017, %v2177
      %v2179 = vpop.f32.mrf.mxu0
      %v2180 = vadd.f32 %v2019, %v2179
      %2181 = vmatprep.mubr.f32.mxu0 %v1757
      %2182 = vmatmul.mubr.f32.gmra.mxu0 %v1756
      %v2183 = vpop.f32.mrf.mxu0
      %v2184 = vadd.f32 %v2023, %v2183
      %v2185 = vpop.f32.mrf.mxu0
      %v2186 = vadd.f32 %v2025, %v2185
      %2187 = vmatprep.mubr.f32.mxu0 %v1761
      %2188 = vmatmul.mubr.f32.gmra.mxu0 %v1760
      %v2189 = vpop.f32.mrf.mxu0
      %v2190 = vadd.f32 %v2029, %v2189
      %v2191 = vpop.f32.mrf.mxu0
      %v2192 = vadd.f32 %v2031, %v2191
      %2193 = vmatprep.mubr.f32.mxu0 %v1765
      %2194 = vmatmul.mubr.f32.gmra.mxu0 %v1764
      %v2195 = vpop.f32.mrf.mxu0
      %v2196 = vadd.f32 %v2035, %v2195
      %v2197 = vpop.f32.mrf.mxu0
      %v2198 = vadd.f32 %v2037, %v2197
      %2199 = vmatprep.mubr.f32.mxu0 %v1769
      %2200 = vmatmul.mubr.f32.gmra.mxu0 %v1768
      %v2201 = vpop.f32.mrf.mxu0
      %v2202 = vadd.f32 %v2041, %v2201
      %v2203 = vpop.f32.mrf.mxu0
      %v2204 = vadd.f32 %v2043, %v2203
      %2205 = vmatprep.mubr.f32.mxu0 %v1773
      %2206 = vmatmul.mubr.f32.gmra.mxu0 %v1772
      %v2207 = vpop.f32.mrf.mxu0
      %v2208 = vadd.f32 %v2047, %v2207
      %v2209 = vpop.f32.mrf.mxu0
      %v2210 = vadd.f32 %v2049, %v2209
      %2211 = vmatprep.mubr.f32.mxu0 %v1777
      %2212 = vmatmul.mubr.f32.gmra.mxu0 %v1776
      %v2213 = vpop.f32.mrf.mxu0
      %v2214 = vadd.f32 %v2053, %v2213
      %v2215 = vpop.f32.mrf.mxu0
      %v2216 = vadd.f32 %v2055, %v2215
      %2217 = vmatprep.mubr.f32.mxu0 %v1781
      %2218 = vmatmul.mubr.f32.gmra.mxu0 %v1780
      %v2219 = vpop.f32.mrf.mxu0
      %v2220 = vadd.f32 %v2059, %v2219
      %v2221 = vpop.f32.mrf.mxu0
      %v2222 = vadd.f32 %v2061, %v2221
      %2223 = vmatprep.mubr.f32.mxu0 %v1785
      %2224 = vmatmul.mubr.f32.gmra.mxu0 %v1784
      %v2225 = vpop.f32.mrf.mxu0
      %v2226 = vadd.f32 %v2065, %v2225
      %v2227 = vpop.f32.mrf.mxu0
      %v2228 = vadd.f32 %v2067, %v2227
      %2229 = vmatprep.mubr.f32.mxu0 %v1789
      %2230 = vmatmul.mubr.f32.gmra.mxu0 %v1788
      %v2231 = vpop.f32.mrf.mxu0
      %v2232 = vadd.f32 %v2071, %v2231
      %v2233 = vpop.f32.mrf.mxu0
      %v2234 = vadd.f32 %v2073, %v2233
      %2235 = vmatprep.mubr.f32.mxu0 %v1793
      %2236 = vmatmul.mubr.f32.gmra.mxu0 %v1792
      %v2237 = vpop.f32.mrf.mxu0
      %v2238 = vadd.f32 %v2077, %v2237
      %v2239 = vpop.f32.mrf.mxu0
      %v2240 = vadd.f32 %v2079, %v2239
      %2241 = vmatprep.mubr.f32.mxu0 %v1797
      %2242 = vmatmul.mubr.f32.gmra.mxu0 %v1796
      %v2243 = vpop.f32.mrf.mxu0
      %v2244 = vadd.f32 %v2083, %v2243
      %v2245 = vpop.f32.mrf.mxu0
      %v2246 = vadd.f32 %v2085, %v2245
      %2247 = vdwg.mxu0
      %v2248 = vld [vmem:[%s4] sm:$0xff]
      %v2249 = vld [vmem:[%s4 + $0x8] sm:$0xff]
      %v2250 = vld [vmem:[%s4 + $0x10] sm:$0xff]
      %v2251 = vld [vmem:[%s4 + $0x18] sm:$0xff]
      %v2252 = vld [vmem:[%s4 + $0x20] sm:$0xff]
      %v2253 = vld [vmem:[%s4 + $0x28] sm:$0xff]
      %v2254 = vld [vmem:[%s4 + $0x30] sm:$0xff]
      %v2255 = vld [vmem:[%s4 + $0x38] sm:$0xff]
      %v2256 = vld [vmem:[%s4 + $0x40] sm:$0xff]
      %v2257 = vld [vmem:[%s4 + $0x48] sm:$0xff]
      %v2258 = vld [vmem:[%s4 + $0x50] sm:$0xff]
      %v2259 = vld [vmem:[%s4 + $0x58] sm:$0xff]
      %v2260 = vld [vmem:[%s4 + $0x60] sm:$0xff]
      %v2261 = vld [vmem:[%s4 + $0x68] sm:$0xff]
      %v2262 = vld [vmem:[%s4 + $0x70] sm:$0xff]
      %v2263 = vld [vmem:[%s4 + $0x78] sm:$0xff]
      %2265 = vset.pattern.permute.xlu0 0
      %2266 = vperm.xlu0 %2265, %v2248
      %v2267 = vpop.permute.xlu0 %2266
      %2270 = vset.pattern.permute.xlu0 0
      %2271 = vperm.xlu0 %2270, %v2249
      %v2272 = vpop.permute.xlu0 %2271
      %2275 = vset.pattern.permute.xlu0 0
      %2276 = vperm.xlu0 %2275, %v2250
      %v2277 = vpop.permute.xlu0 %2276
      %2280 = vset.pattern.permute.xlu0 0
      %2281 = vperm.xlu0 %2280, %v2251
      %v2282 = vpop.permute.xlu0 %2281
      %2285 = vset.pattern.permute.xlu0 0
      %2286 = vperm.xlu0 %2285, %v2252
      %v2287 = vpop.permute.xlu0 %2286
      %2290 = vset.pattern.permute.xlu0 0
      %2291 = vperm.xlu0 %2290, %v2253
      %v2292 = vpop.permute.xlu0 %2291
      %2295 = vset.pattern.permute.xlu0 0
      %2296 = vperm.xlu0 %2295, %v2254
      %v2297 = vpop.permute.xlu0 %2296
      %2300 = vset.pattern.permute.xlu0 0
      %2301 = vperm.xlu0 %2300, %v2255
      %v2302 = vpop.permute.xlu0 %2301
      %2305 = vset.pattern.permute.xlu0 0
      %2306 = vperm.xlu0 %2305, %v2256
      %v2307 = vpop.permute.xlu0 %2306
      %2310 = vset.pattern.permute.xlu0 0
      %2311 = vperm.xlu0 %2310, %v2257
      %v2312 = vpop.permute.xlu0 %2311
      %2315 = vset.pattern.permute.xlu0 0
      %2316 = vperm.xlu0 %2315, %v2258
      %v2317 = vpop.permute.xlu0 %2316
      %2320 = vset.pattern.permute.xlu0 0
      %2321 = vperm.xlu0 %2320, %v2259
      %v2322 = vpop.permute.xlu0 %2321
      %2325 = vset.pattern.permute.xlu0 0
      %2326 = vperm.xlu0 %2325, %v2260
      %v2327 = vpop.permute.xlu0 %2326
      %2330 = vset.pattern.permute.xlu0 0
      %2331 = vperm.xlu0 %2330, %v2261
      %v2332 = vpop.permute.xlu0 %2331
      %2335 = vset.pattern.permute.xlu0 0
      %2336 = vperm.xlu0 %2335, %v2262
      %v2337 = vpop.permute.xlu0 %2336
      %2340 = vset.pattern.permute.xlu0 0
      %2341 = vperm.xlu0 %2340, %v2263
      %v2342 = vpop.permute.xlu0 %2341
      %v2344 = vmul.f32 %v2154, %v2267
      %v2345 = vmul.f32 %v2156, %v2267
      %v2346 = vmul.f32 %v2160, %v2272
      %v2347 = vmul.f32 %v2162, %v2272
      %v2348 = vmul.f32 %v2166, %v2277
      %v2349 = vmul.f32 %v2168, %v2277
      %v2350 = vmul.f32 %v2172, %v2282
      %v2351 = vmul.f32 %v2174, %v2282
      %v2352 = vmul.f32 %v2178, %v2287
      %v2353 = vmul.f32 %v2180, %v2287
      %v2354 = vmul.f32 %v2184, %v2292
      %v2355 = vmul.f32 %v2186, %v2292
      %v2356 = vmul.f32 %v2190, %v2297
      %v2357 = vmul.f32 %v2192, %v2297
      %v2358 = vmul.f32 %v2196, %v2302
      %v2359 = vmul.f32 %v2198, %v2302
      %v2360 = vmul.f32 %v2202, %v2307
      %v2361 = vmul.f32 %v2204, %v2307
      %v2362 = vmul.f32 %v2208, %v2312
      %v2363 = vmul.f32 %v2210, %v2312
      %v2364 = vmul.f32 %v2214, %v2317
      %v2365 = vmul.f32 %v2216, %v2317
      %v2366 = vmul.f32 %v2220, %v2322
      %v2367 = vmul.f32 %v2222, %v2322
      %v2368 = vmul.f32 %v2226, %v2327
      %v2369 = vmul.f32 %v2228, %v2327
      %v2370 = vmul.f32 %v2232, %v2332
      %v2371 = vmul.f32 %v2234, %v2332
      %v2372 = vmul.f32 %v2238, %v2337
      %v2373 = vmul.f32 %v2240, %v2337
      %v2374 = vmul.f32 %v2244, %v2342
      %v2375 = vmul.f32 %v2246, %v2342
      %v2376 = vld [vmem:[%s5] sm:$0xff]
      %v2377 = vld [vmem:[%s5 + $0x8] sm:$0xff]
      %v2378 = vld [vmem:[%s5 + $0x10] sm:$0xff]
      %v2379 = vld [vmem:[%s5 + $0x18] sm:$0xff]
      %v2380 = vld [vmem:[%s5 + $0x20] sm:$0xff]
      %v2381 = vld [vmem:[%s5 + $0x28] sm:$0xff]
      %v2382 = vld [vmem:[%s5 + $0x30] sm:$0xff]
      %v2383 = vld [vmem:[%s5 + $0x38] sm:$0xff]
      %v2384 = vld [vmem:[%s5 + $0x40] sm:$0xff]
      %v2385 = vld [vmem:[%s5 + $0x48] sm:$0xff]
      %v2386 = vld [vmem:[%s5 + $0x50] sm:$0xff]
      %v2387 = vld [vmem:[%s5 + $0x58] sm:$0xff]
      %v2388 = vld [vmem:[%s5 + $0x60] sm:$0xff]
      %v2389 = vld [vmem:[%s5 + $0x68] sm:$0xff]
      %v2390 = vld [vmem:[%s5 + $0x70] sm:$0xff]
      %v2391 = vld [vmem:[%s5 + $0x78] sm:$0xff]
      %2393 = vset.pattern.permute.xlu0 0
      %2394 = vperm.xlu0 %2393, %v2376
      %v2395 = vpop.permute.xlu0 %2394
      %2398 = vset.pattern.permute.xlu0 0
      %2399 = vperm.xlu0 %2398, %v2377
      %v2400 = vpop.permute.xlu0 %2399
      %2403 = vset.pattern.permute.xlu0 0
      %2404 = vperm.xlu0 %2403, %v2378
      %v2405 = vpop.permute.xlu0 %2404
      %2408 = vset.pattern.permute.xlu0 0
      %2409 = vperm.xlu0 %2408, %v2379
      %v2410 = vpop.permute.xlu0 %2409
      %2413 = vset.pattern.permute.xlu0 0
      %2414 = vperm.xlu0 %2413, %v2380
      %v2415 = vpop.permute.xlu0 %2414
      %2418 = vset.pattern.permute.xlu0 0
      %2419 = vperm.xlu0 %2418, %v2381
      %v2420 = vpop.permute.xlu0 %2419
      %2423 = vset.pattern.permute.xlu0 0
      %2424 = vperm.xlu0 %2423, %v2382
      %v2425 = vpop.permute.xlu0 %2424
      %2428 = vset.pattern.permute.xlu0 0
      %2429 = vperm.xlu0 %2428, %v2383
      %v2430 = vpop.permute.xlu0 %2429
      %2433 = vset.pattern.permute.xlu0 0
      %2434 = vperm.xlu0 %2433, %v2384
      %v2435 = vpop.permute.xlu0 %2434
      %2438 = vset.pattern.permute.xlu0 0
      %2439 = vperm.xlu0 %2438, %v2385
      %v2440 = vpop.permute.xlu0 %2439
      %2443 = vset.pattern.permute.xlu0 0
      %2444 = vperm.xlu0 %2443, %v2386
      %v2445 = vpop.permute.xlu0 %2444
      %2448 = vset.pattern.permute.xlu0 0
      %2449 = vperm.xlu0 %2448, %v2387
      %v2450 = vpop.permute.xlu0 %2449
      %2453 = vset.pattern.permute.xlu0 0
      %2454 = vperm.xlu0 %2453, %v2388
      %v2455 = vpop.permute.xlu0 %2454
      %2458 = vset.pattern.permute.xlu0 0
      %2459 = vperm.xlu0 %2458, %v2389
      %v2460 = vpop.permute.xlu0 %2459
      %2463 = vset.pattern.permute.xlu0 0
      %2464 = vperm.xlu0 %2463, %v2390
      %v2465 = vpop.permute.xlu0 %2464
      %2468 = vset.pattern.permute.xlu0 0
      %2469 = vperm.xlu0 %2468, %v2391
      %v2470 = vpop.permute.xlu0 %2469
      %v2472 = vadd.f32 %v2344, %v2395
      %v2473 = vadd.f32 %v2345, %v2395
      %v2474 = vadd.f32 %v2346, %v2400
      %v2475 = vadd.f32 %v2347, %v2400
      %v2476 = vadd.f32 %v2348, %v2405
      %v2477 = vadd.f32 %v2349, %v2405
      %v2478 = vadd.f32 %v2350, %v2410
      %v2479 = vadd.f32 %v2351, %v2410
      %v2480 = vadd.f32 %v2352, %v2415
      %v2481 = vadd.f32 %v2353, %v2415
      %v2482 = vadd.f32 %v2354, %v2420
      %v2483 = vadd.f32 %v2355, %v2420
      %v2484 = vadd.f32 %v2356, %v2425
      %v2485 = vadd.f32 %v2357, %v2425
      %v2486 = vadd.f32 %v2358, %v2430
      %v2487 = vadd.f32 %v2359, %v2430
      %v2488 = vadd.f32 %v2360, %v2435
      %v2489 = vadd.f32 %v2361, %v2435
      %v2490 = vadd.f32 %v2362, %v2440
      %v2491 = vadd.f32 %v2363, %v2440
      %v2492 = vadd.f32 %v2364, %v2445
      %v2493 = vadd.f32 %v2365, %v2445
      %v2494 = vadd.f32 %v2366, %v2450
      %v2495 = vadd.f32 %v2367, %v2450
      %v2496 = vadd.f32 %v2368, %v2455
      %v2497 = vadd.f32 %v2369, %v2455
      %v2498 = vadd.f32 %v2370, %v2460
      %v2499 = vadd.f32 %v2371, %v2460
      %v2500 = vadd.f32 %v2372, %v2465
      %v2501 = vadd.f32 %v2373, %v2465
      %v2502 = vadd.f32 %v2374, %v2470
      %v2503 = vadd.f32 %v2375, %v2470
      %v2504 = vmax.f32 %v2472, 0.0
      %v2505 = vmax.f32 %v2473, 0.0
      %v2506 = vmax.f32 %v2474, 0.0
      %v2507 = vmax.f32 %v2475, 0.0
      %v2508 = vmax.f32 %v2476, 0.0
      %v2509 = vmax.f32 %v2477, 0.0
      %v2510 = vmax.f32 %v2478, 0.0
      %v2511 = vmax.f32 %v2479, 0.0
      %v2512 = vmax.f32 %v2480, 0.0
      %v2513 = vmax.f32 %v2481, 0.0
      %v2514 = vmax.f32 %v2482, 0.0
      %v2515 = vmax.f32 %v2483, 0.0
      %v2516 = vmax.f32 %v2484, 0.0
      %v2517 = vmax.f32 %v2485, 0.0
      %v2518 = vmax.f32 %v2486, 0.0
      %v2519 = vmax.f32 %v2487, 0.0
      %v2520 = vmax.f32 %v2488, 0.0
      %v2521 = vmax.f32 %v2489, 0.0
      %v2522 = vmax.f32 %v2490, 0.0
      %v2523 = vmax.f32 %v2491, 0.0
      %v2524 = vmax.f32 %v2492, 0.0
      %v2525 = vmax.f32 %v2493, 0.0
      %v2526 = vmax.f32 %v2494, 0.0
      %v2527 = vmax.f32 %v2495, 0.0
      %v2528 = vmax.f32 %v2496, 0.0
      %v2529 = vmax.f32 %v2497, 0.0
      %v2530 = vmax.f32 %v2498, 0.0
      %v2531 = vmax.f32 %v2499, 0.0
      %v2532 = vmax.f32 %v2500, 0.0
      %v2533 = vmax.f32 %v2501, 0.0
      %v2534 = vmax.f32 %v2502, 0.0
      %v2535 = vmax.f32 %v2503, 0.0
      %2536 = vst [vmem:[#allocation3] sm:$0xff] 0.0
      %2537 = vst [vmem:[#allocation3 + $0x8] sm:$0xff] 0.0
      %2538 = vst [vmem:[#allocation3 + $0x10] sm:$0xff] 0.0
      %2539 = vst [vmem:[#allocation3 + $0x18] sm:$0xff] 0.0
      %2540 = vst [vmem:[#allocation3 + $0x20] sm:$0xff] 0.0
      %2541 = vst [vmem:[#allocation3 + $0x28] sm:$0xff] 0.0
      %2542 = vst [vmem:[#allocation3 + $0x30] sm:$0xff] 0.0
      %2543 = vst [vmem:[#allocation3 + $0x38] sm:$0xff] 0.0
      %2544 = vst [vmem:[#allocation3 + $0x40] sm:$0xff] 0.0
      %2545 = vst [vmem:[#allocation3 + $0x48] sm:$0xff] 0.0
      %2546 = vst [vmem:[#allocation3 + $0x50] sm:$0xff] 0.0
      %2547 = vst [vmem:[#allocation3 + $0x58] sm:$0xff] 0.0
      %2548 = vst [vmem:[#allocation3 + $0x60] sm:$0xff] 0.0
      %2549 = vst [vmem:[#allocation3 + $0x68] sm:$0xff] 0.0
      %2550 = vst [vmem:[#allocation3 + $0x70] sm:$0xff] 0.0
      %2551 = vst [vmem:[#allocation3 + $0x78] sm:$0xff] 0.0
      %2552 = vst [vmem:[#allocation3 + $0x80] sm:$0xff] 0.0
      %2553 = vst [vmem:[#allocation3 + $0x88] sm:$0xff] 0.0
      %2554 = vst [vmem:[#allocation3 + $0x90] sm:$0xff] 0.0
      %2555 = vst [vmem:[#allocation3 + $0x98] sm:$0xff] 0.0
      %2556 = vst [vmem:[#allocation3 + $0xa0] sm:$0xff] 0.0
      %2557 = vst [vmem:[#allocation3 + $0xa8] sm:$0xff] 0.0
      %2558 = vst [vmem:[#allocation3 + $0xb0] sm:$0xff] 0.0
      %2559 = vst [vmem:[#allocation3 + $0xb8] sm:$0xff] 0.0
      %2560 = vst [vmem:[#allocation3 + $0xc0] sm:$0xff] 0.0
      %2561 = vst [vmem:[#allocation3 + $0xc8] sm:$0xff] 0.0
      %2562 = vst [vmem:[#allocation3 + $0xd0] sm:$0xff] 0.0
      %2563 = vst [vmem:[#allocation3 + $0xd8] sm:$0xff] 0.0
      %2564 = vst [vmem:[#allocation3 + $0xe0] sm:$0xff] 0.0
      %2565 = vst [vmem:[#allocation3 + $0xe8] sm:$0xff] 0.0
      %2566 = vst [vmem:[#allocation3 + $0xf0] sm:$0xff] 0.0
      %2567 = vst [vmem:[#allocation3 + $0xf8] sm:$0xff] 0.0
      %2568 = vst [vmem:[#allocation3 + $0x100] sm:$0xff] 0.0
      %2569 = vst [vmem:[#allocation3 + $0x108] sm:$0xff] 0.0
      %2570 = vst [vmem:[#allocation3 + $0x110] sm:$0xff] 0.0
      %2571 = vst [vmem:[#allocation3 + $0x118] sm:$0xff] 0.0
      %2572 = vst [vmem:[#allocation3 + $0x120] sm:$0xff] 0.0
      %2573 = vst [vmem:[#allocation3 + $0x128] sm:$0xff] 0.0
      %2574 = vst [vmem:[#allocation3 + $0x130] sm:$0xff] 0.0
      %2575 = vst [vmem:[#allocation3 + $0x138] sm:$0xff] 0.0
      %2576 = vst [vmem:[#allocation3 + $0x140] sm:$0xff] 0.0
      %2577 = vst [vmem:[#allocation3 + $0x148] sm:$0xff] 0.0
      %2578 = vst [vmem:[#allocation3 + $0x150] sm:$0xff] 0.0
      %2579 = vst [vmem:[#allocation3 + $0x158] sm:$0xff] 0.0
      %2580 = vst [vmem:[#allocation3 + $0x160] sm:$0xff] 0.0
      %2581 = vst [vmem:[#allocation3 + $0x168] sm:$0xff] 0.0
      %2582 = vst [vmem:[#allocation3 + $0x170] sm:$0xff] 0.0
      %2583 = vst [vmem:[#allocation3 + $0x178] sm:$0xff] 0.0
      %2584 = vst [vmem:[#allocation3 + $0x180] sm:$0xff] 0.0
      %2585 = vst [vmem:[#allocation3 + $0x188] sm:$0xff] 0.0
      %2586 = vst [vmem:[#allocation3 + $0x190] sm:$0xff] 0.0
      %2587 = vst [vmem:[#allocation3 + $0x198] sm:$0xff] 0.0
      %2588 = vst [vmem:[#allocation3 + $0x1a0] sm:$0xff] 0.0
      %2589 = vst [vmem:[#allocation3 + $0x1a8] sm:$0xff] 0.0
      %2590 = vst [vmem:[#allocation3 + $0x1b0] sm:$0xff] 0.0
      %2591 = vst [vmem:[#allocation3 + $0x1b8] sm:$0xff] 0.0
      %2592 = vst [vmem:[#allocation3 + $0x1c0] sm:$0xff] 0.0
      %2593 = vst [vmem:[#allocation3 + $0x1c8] sm:$0xff] 0.0
      %2594 = vst [vmem:[#allocation3 + $0x1d0] sm:$0xff] 0.0
      %2595 = vst [vmem:[#allocation3 + $0x1d8] sm:$0xff] 0.0
      %2596 = vst [vmem:[#allocation3 + $0x1e0] sm:$0xff] 0.0
      %2597 = vst [vmem:[#allocation3 + $0x1e8] sm:$0xff] 0.0
      %2598 = vst [vmem:[#allocation3 + $0x1f0] sm:$0xff] 0.0
      %2599 = vst [vmem:[#allocation3 + $0x1f8] sm:$0xff] 0.0
      %2600 = vst [vmem:[#allocation3 + $0x8] sm:$0xff] %v2504
      %2601 = vst [vmem:[#allocation3 + $0x10] sm:$0xff] %v2505
      %2602 = vst [vmem:[#allocation3 + $0x28] sm:$0xff] %v2506
      %2603 = vst [vmem:[#allocation3 + $0x30] sm:$0xff] %v2507
      %2604 = vst [vmem:[#allocation3 + $0x48] sm:$0xff] %v2508
      %2605 = vst [vmem:[#allocation3 + $0x50] sm:$0xff] %v2509
      %2606 = vst [vmem:[#allocation3 + $0x68] sm:$0xff] %v2510
      %2607 = vst [vmem:[#allocation3 + $0x70] sm:$0xff] %v2511
      %2608 = vst [vmem:[#allocation3 + $0x88] sm:$0xff] %v2512
      %2609 = vst [vmem:[#allocation3 + $0x90] sm:$0xff] %v2513
      %2610 = vst [vmem:[#allocation3 + $0xa8] sm:$0xff] %v2514
      %2611 = vst [vmem:[#allocation3 + $0xb0] sm:$0xff] %v2515
      %2612 = vst [vmem:[#allocation3 + $0xc8] sm:$0xff] %v2516
      %2613 = vst [vmem:[#allocation3 + $0xd0] sm:$0xff] %v2517
      %2614 = vst [vmem:[#allocation3 + $0xe8] sm:$0xff] %v2518
      %2615 = vst [vmem:[#allocation3 + $0xf0] sm:$0xff] %v2519
      %2616 = vst [vmem:[#allocation3 + $0x108] sm:$0xff] %v2520
      %2617 = vst [vmem:[#allocation3 + $0x110] sm:$0xff] %v2521
      %2618 = vst [vmem:[#allocation3 + $0x128] sm:$0xff] %v2522
      %2619 = vst [vmem:[#allocation3 + $0x130] sm:$0xff] %v2523
      %2620 = vst [vmem:[#allocation3 + $0x148] sm:$0xff] %v2524
      %2621 = vst [vmem:[#allocation3 + $0x150] sm:$0xff] %v2525
      %2622 = vst [vmem:[#allocation3 + $0x168] sm:$0xff] %v2526
      %2623 = vst [vmem:[#allocation3 + $0x170] sm:$0xff] %v2527
      %2624 = vst [vmem:[#allocation3 + $0x188] sm:$0xff] %v2528
      %2625 = vst [vmem:[#allocation3 + $0x190] sm:$0xff] %v2529
      %2626 = vst [vmem:[#allocation3 + $0x1a8] sm:$0xff] %v2530
      %2627 = vst [vmem:[#allocation3 + $0x1b0] sm:$0xff] %v2531
      %2628 = vst [vmem:[#allocation3 + $0x1c8] sm:$0xff] %v2532
      %2629 = vst [vmem:[#allocation3 + $0x1d0] sm:$0xff] %v2533
      %2630 = vst [vmem:[#allocation3 + $0x1e8] sm:$0xff] %v2534
      %2631 = vst [vmem:[#allocation3 + $0x1f0] sm:$0xff] %v2535
      %v2632 = vlaneseq
      %v2633 = vand.u32 %v2632, 127
      %v2634 = vadd.s32 %v2633, 128
      %vm2635 = vcmp.lt.s32.totalorder %v2633, 0
      %v2636 = vsub.s32 0, %v2633
      %v2637 = vsel %vm2635, %v2636, %v2633
      %v2638 = vshrl.u32 %v2637, 4
      %v2639 = vand.u32 %v2637, 15
      %v2640 = vsub.s32 0, %v2639
      %v2641 = vsel %vm2635, %v2640, %v2639
      %vm2642 = vcmp.lt.s32.totalorder %v2634, 0
      %v2643 = vsub.s32 0, %v2634
      %v2644 = vsel %vm2642, %v2643, %v2634
      %v2645 = vshrl.u32 %v2644, 4
      %v2646 = vand.u32 %v2644, 15
      %v2647 = vsub.s32 0, %v2646
      %v2648 = vsel %vm2642, %v2647, %v2646
      %vm2649 = vcmp.ne.s32.totalorder %v2641, 0
      %vm2650 = vcmp.ne.s32.totalorder %v2648, 0
      %vm2651 = vcmp.lt.s32.totalorder %v2641, 0
      %vm2652 = vcmp.lt.s32.totalorder %v2648, 0
      %vm2653 = vmand %vm2651, %vm2649
      %vm2654 = vmand %vm2652, %vm2650
      %v2655 = vadd.s32 %v2641, 16
      %v2656 = vadd.s32 %v2648, 16
      %v2657 = vsel %vm2653, %v2655, %v2641
      %v2658 = vsel %vm2654, %v2656, %v2648
      %vm2659 = vcmp.ge.s32.totalorder %v2657, 1
      %vm2660 = vcmp.ge.s32.totalorder %v2658, 1
      %vm2661 = vcmp.le.s32.totalorder %v2657, 14
      %vm2662 = vcmp.le.s32.totalorder %v2658, 14
      %v2663 = vld [vmem:[#allocation3] sm:$0xff]
      %v2664 = vld [vmem:[#allocation3 + $0x8] sm:$0xff]
      %v2665 = vld [vmem:[#allocation3 + $0x10] sm:$0xff]
      %v2666 = vld [vmem:[#allocation3 + $0x20] sm:$0xff]
      %v2667 = vld [vmem:[#allocation3 + $0x28] sm:$0xff]
      %v2668 = vld [vmem:[#allocation3 + $0x30] sm:$0xff]
      %v2669 = vld [vmem:[#allocation3 + $0x40] sm:$0xff]
      %v2670 = vld [vmem:[#allocation3 + $0x48] sm:$0xff]
      %v2671 = vld [vmem:[#allocation3 + $0x50] sm:$0xff]
      %v2672 = vld [vmem:[#allocation3 + $0x60] sm:$0xff]
      %v2673 = vld [vmem:[#allocation3 + $0x68] sm:$0xff]
      %v2674 = vld [vmem:[#allocation3 + $0x70] sm:$0xff]
      %v2675 = vld [vmem:[#allocation3 + $0x80] sm:$0xff]
      %v2676 = vld [vmem:[#allocation3 + $0x88] sm:$0xff]
      %v2677 = vld [vmem:[#allocation3 + $0x90] sm:$0xff]
      %v2678 = vld [vmem:[#allocation3 + $0xa0] sm:$0xff]
      %v2679 = vld [vmem:[#allocation3 + $0xa8] sm:$0xff]
      %v2680 = vld [vmem:[#allocation3 + $0xb0] sm:$0xff]
      %v2681 = vld [vmem:[#allocation3 + $0xc0] sm:$0xff]
      %v2682 = vld [vmem:[#allocation3 + $0xc8] sm:$0xff]
      %v2683 = vld [vmem:[#allocation3 + $0xd0] sm:$0xff]
      %v2684 = vld [vmem:[#allocation3 + $0xe0] sm:$0xff]
      %v2685 = vld [vmem:[#allocation3 + $0xe8] sm:$0xff]
      %v2686 = vld [vmem:[#allocation3 + $0xf0] sm:$0xff]
      %v2687 = vld [vmem:[#allocation3 + $0x100] sm:$0xff]
      %v2688 = vld [vmem:[#allocation3 + $0x108] sm:$0xff]
      %v2689 = vld [vmem:[#allocation3 + $0x110] sm:$0xff]
      %v2690 = vld [vmem:[#allocation3 + $0x120] sm:$0xff]
      %v2691 = vld [vmem:[#allocation3 + $0x128] sm:$0xff]
      %v2692 = vld [vmem:[#allocation3 + $0x130] sm:$0xff]
      %v2693 = vld [vmem:[#allocation3 + $0x140] sm:$0xff]
      %v2694 = vld [vmem:[#allocation3 + $0x148] sm:$0xff]
      %v2695 = vld [vmem:[#allocation3 + $0x150] sm:$0xff]
      %v2696 = vld [vmem:[#allocation3 + $0x160] sm:$0xff]
      %v2697 = vld [vmem:[#allocation3 + $0x168] sm:$0xff]
      %v2698 = vld [vmem:[#allocation3 + $0x170] sm:$0xff]
      %v2699 = vld [vmem:[#allocation3 + $0x180] sm:$0xff]
      %v2700 = vld [vmem:[#allocation3 + $0x188] sm:$0xff]
      %v2701 = vld [vmem:[#allocation3 + $0x190] sm:$0xff]
      %v2702 = vld [vmem:[#allocation3 + $0x1a0] sm:$0xff]
      %v2703 = vld [vmem:[#allocation3 + $0x1a8] sm:$0xff]
      %v2704 = vld [vmem:[#allocation3 + $0x1b0] sm:$0xff]
      %v2705 = vld [vmem:[#allocation3 + $0x1c0] sm:$0xff]
      %v2706 = vld [vmem:[#allocation3 + $0x1c8] sm:$0xff]
      %v2707 = vld [vmem:[#allocation3 + $0x1d0] sm:$0xff]
      %v2708 = vld [vmem:[#allocation3 + $0x1e0] sm:$0xff]
      %v2709 = vld [vmem:[#allocation3 + $0x1e8] sm:$0xff]
      %v2710 = vld [vmem:[#allocation3 + $0x1f0] sm:$0xff]
      %v2711 = vsel %vm2659, 1, 0
      %v2712 = vsel %vm2660, 1, 0
      %vm2713 = vcmp.eq.s32.totalorder %v2711, 1
      %vm2714 = vcmp.eq.s32.totalorder %v2712, 1
      %2763 = vrot.lane.b32.xlu0 %v2663, 17
      %v2764 = vpop.permute.xlu0 %2763
      %2765 = vrot.lane.b32.xlu0 %v2664, 17
      %v2766 = vpop.permute.xlu0 %2765
      %2767 = vrot.lane.b32.xlu0 %v2665, 17
      %v2768 = vpop.permute.xlu0 %2767
      %2769 = vrot.lane.b32.xlu0 %v2666, 17
      %v2770 = vpop.permute.xlu0 %2769
      %2771 = vrot.lane.b32.xlu0 %v2667, 17
      %v2772 = vpop.permute.xlu0 %2771
      %2773 = vrot.lane.b32.xlu0 %v2668, 17
      %v2774 = vpop.permute.xlu0 %2773
      %2775 = vrot.lane.b32.xlu0 %v2669, 17
      %v2776 = vpop.permute.xlu0 %2775
      %2777 = vrot.lane.b32.xlu0 %v2670, 17
      %v2778 = vpop.permute.xlu0 %2777
      %2779 = vrot.lane.b32.xlu0 %v2671, 17
      %v2780 = vpop.permute.xlu0 %2779
      %2781 = vrot.lane.b32.xlu0 %v2672, 17
      %v2782 = vpop.permute.xlu0 %2781
      %2783 = vrot.lane.b32.xlu0 %v2673, 17
      %v2784 = vpop.permute.xlu0 %2783
      %2785 = vrot.lane.b32.xlu0 %v2674, 17
      %v2786 = vpop.permute.xlu0 %2785
      %2787 = vrot.lane.b32.xlu0 %v2675, 17
      %v2788 = vpop.permute.xlu0 %2787
      %2789 = vrot.lane.b32.xlu0 %v2676, 17
      %v2790 = vpop.permute.xlu0 %2789
      %2791 = vrot.lane.b32.xlu0 %v2677, 17
      %v2792 = vpop.permute.xlu0 %2791
      %2793 = vrot.lane.b32.xlu0 %v2678, 17
      %v2794 = vpop.permute.xlu0 %2793
      %2795 = vrot.lane.b32.xlu0 %v2679, 17
      %v2796 = vpop.permute.xlu0 %2795
      %2797 = vrot.lane.b32.xlu0 %v2680, 17
      %v2798 = vpop.permute.xlu0 %2797
      %2799 = vrot.lane.b32.xlu0 %v2681, 17
      %v2800 = vpop.permute.xlu0 %2799
      %2801 = vrot.lane.b32.xlu0 %v2682, 17
      %v2802 = vpop.permute.xlu0 %2801
      %2803 = vrot.lane.b32.xlu0 %v2683, 17
      %v2804 = vpop.permute.xlu0 %2803
      %2805 = vrot.lane.b32.xlu0 %v2684, 17
      %v2806 = vpop.permute.xlu0 %2805
      %2807 = vrot.lane.b32.xlu0 %v2685, 17
      %v2808 = vpop.permute.xlu0 %2807
      %2809 = vrot.lane.b32.xlu0 %v2686, 17
      %v2810 = vpop.permute.xlu0 %2809
      %2811 = vrot.lane.b32.xlu0 %v2687, 17
      %v2812 = vpop.permute.xlu0 %2811
      %2813 = vrot.lane.b32.xlu0 %v2688, 17
      %v2814 = vpop.permute.xlu0 %2813
      %2815 = vrot.lane.b32.xlu0 %v2689, 17
      %v2816 = vpop.permute.xlu0 %2815
      %2817 = vrot.lane.b32.xlu0 %v2690, 17
      %v2818 = vpop.permute.xlu0 %2817
      %2819 = vrot.lane.b32.xlu0 %v2691, 17
      %v2820 = vpop.permute.xlu0 %2819
      %2821 = vrot.lane.b32.xlu0 %v2692, 17
      %v2822 = vpop.permute.xlu0 %2821
      %2823 = vrot.lane.b32.xlu0 %v2693, 17
      %v2824 = vpop.permute.xlu0 %2823
      %2825 = vrot.lane.b32.xlu0 %v2694, 17
      %v2826 = vpop.permute.xlu0 %2825
      %2827 = vrot.lane.b32.xlu0 %v2695, 17
      %v2828 = vpop.permute.xlu0 %2827
      %2829 = vrot.lane.b32.xlu0 %v2696, 17
      %v2830 = vpop.permute.xlu0 %2829
      %2831 = vrot.lane.b32.xlu0 %v2697, 17
      %v2832 = vpop.permute.xlu0 %2831
      %2833 = vrot.lane.b32.xlu0 %v2698, 17
      %v2834 = vpop.permute.xlu0 %2833
      %2835 = vrot.lane.b32.xlu0 %v2699, 17
      %v2836 = vpop.permute.xlu0 %2835
      %2837 = vrot.lane.b32.xlu0 %v2700, 17
      %v2838 = vpop.permute.xlu0 %2837
      %2839 = vrot.lane.b32.xlu0 %v2701, 17
      %v2840 = vpop.permute.xlu0 %2839
      %2841 = vrot.lane.b32.xlu0 %v2702, 17
      %v2842 = vpop.permute.xlu0 %2841
      %2843 = vrot.lane.b32.xlu0 %v2703, 17
      %v2844 = vpop.permute.xlu0 %2843
      %2845 = vrot.lane.b32.xlu0 %v2704, 17
      %v2846 = vpop.permute.xlu0 %2845
      %2847 = vrot.lane.b32.xlu0 %v2705, 17
      %v2848 = vpop.permute.xlu0 %2847
      %2849 = vrot.lane.b32.xlu0 %v2706, 17
      %v2850 = vpop.permute.xlu0 %2849
      %2851 = vrot.lane.b32.xlu0 %v2707, 17
      %v2852 = vpop.permute.xlu0 %2851
      %2853 = vrot.lane.b32.xlu0 %v2708, 17
      %v2854 = vpop.permute.xlu0 %2853
      %2855 = vrot.lane.b32.xlu0 %v2709, 17
      %v2856 = vpop.permute.xlu0 %2855
      %2857 = vrot.lane.b32.xlu0 %v2710, 17
      %v2858 = vpop.permute.xlu0 %2857
      %vm2859 = vcmask 138240
      %v2860 = vsel %vm2859, %v2764, %v2766
      %v2861 = vsel %vm2859, %v2766, %v2768
      %v2862 = vsel %vm2859, %v2770, %v2772
      %v2863 = vsel %vm2859, %v2772, %v2774
      %v2864 = vsel %vm2859, %v2776, %v2778
      %v2865 = vsel %vm2859, %v2778, %v2780
      %v2866 = vsel %vm2859, %v2782, %v2784
      %v2867 = vsel %vm2859, %v2784, %v2786
      %v2868 = vsel %vm2859, %v2788, %v2790
      %v2869 = vsel %vm2859, %v2790, %v2792
      %v2870 = vsel %vm2859, %v2794, %v2796
      %v2871 = vsel %vm2859, %v2796, %v2798
      %v2872 = vsel %vm2859, %v2800, %v2802
      %v2873 = vsel %vm2859, %v2802, %v2804
      %v2874 = vsel %vm2859, %v2806, %v2808
      %v2875 = vsel %vm2859, %v2808, %v2810
      %v2876 = vsel %vm2859, %v2812, %v2814
      %v2877 = vsel %vm2859, %v2814, %v2816
      %v2878 = vsel %vm2859, %v2818, %v2820
      %v2879 = vsel %vm2859, %v2820, %v2822
      %v2880 = vsel %vm2859, %v2824, %v2826
      %v2881 = vsel %vm2859, %v2826, %v2828
      %v2882 = vsel %vm2859, %v2830, %v2832
      %v2883 = vsel %vm2859, %v2832, %v2834
      %v2884 = vsel %vm2859, %v2836, %v2838
      %v2885 = vsel %vm2859, %v2838, %v2840
      %v2886 = vsel %vm2859, %v2842, %v2844
      %v2887 = vsel %vm2859, %v2844, %v2846
      %v2888 = vsel %vm2859, %v2848, %v2850
      %v2889 = vsel %vm2859, %v2850, %v2852
      %v2890 = vsel %vm2859, %v2854, %v2856
      %v2891 = vsel %vm2859, %v2856, %v2858
      %v2924 = vsel %vm2713, %v2860, 0.0
      %v2925 = vsel %vm2714, %v2861, 0.0
      %v2926 = vsel %vm2713, %v2862, 0.0
      %v2927 = vsel %vm2714, %v2863, 0.0
      %v2928 = vsel %vm2713, %v2864, 0.0
      %v2929 = vsel %vm2714, %v2865, 0.0
      %v2930 = vsel %vm2713, %v2866, 0.0
      %v2931 = vsel %vm2714, %v2867, 0.0
      %v2932 = vsel %vm2713, %v2868, 0.0
      %v2933 = vsel %vm2714, %v2869, 0.0
      %v2934 = vsel %vm2713, %v2870, 0.0
      %v2935 = vsel %vm2714, %v2871, 0.0
      %v2936 = vsel %vm2713, %v2872, 0.0
      %v2937 = vsel %vm2714, %v2873, 0.0
      %v2938 = vsel %vm2713, %v2874, 0.0
      %v2939 = vsel %vm2714, %v2875, 0.0
      %v2940 = vsel %vm2713, %v2876, 0.0
      %v2941 = vsel %vm2714, %v2877, 0.0
      %v2942 = vsel %vm2713, %v2878, 0.0
      %v2943 = vsel %vm2714, %v2879, 0.0
      %v2944 = vsel %vm2713, %v2880, 0.0
      %v2945 = vsel %vm2714, %v2881, 0.0
      %v2946 = vsel %vm2713, %v2882, 0.0
      %v2947 = vsel %vm2714, %v2883, 0.0
      %v2948 = vsel %vm2713, %v2884, 0.0
      %v2949 = vsel %vm2714, %v2885, 0.0
      %v2950 = vsel %vm2713, %v2886, 0.0
      %v2951 = vsel %vm2714, %v2887, 0.0
      %v2952 = vsel %vm2713, %v2888, 0.0
      %v2953 = vsel %vm2714, %v2889, 0.0
      %v2954 = vsel %vm2713, %v2890, 0.0
      %v2955 = vsel %vm2714, %v2891, 0.0
      %2956 = vst [vmem:[#allocation4] sm:$0xff] %v2924
      %2957 = vst [vmem:[#allocation4 + $0x8] sm:$0xff] %v2925
      %2958 = vst [vmem:[#allocation4 + $0x10] sm:$0xff] %v2926
      %2959 = vst [vmem:[#allocation4 + $0x18] sm:$0xff] %v2927
      %2960 = vst [vmem:[#allocation4 + $0x20] sm:$0xff] %v2928
      %2961 = vst [vmem:[#allocation4 + $0x28] sm:$0xff] %v2929
      %2962 = vst [vmem:[#allocation4 + $0x30] sm:$0xff] %v2930
      %2963 = vst [vmem:[#allocation4 + $0x38] sm:$0xff] %v2931
      %2964 = vst [vmem:[#allocation4 + $0x40] sm:$0xff] %v2932
      %2965 = vst [vmem:[#allocation4 + $0x48] sm:$0xff] %v2933
      %2966 = vst [vmem:[#allocation4 + $0x50] sm:$0xff] %v2934
      %2967 = vst [vmem:[#allocation4 + $0x58] sm:$0xff] %v2935
      %2968 = vst [vmem:[#allocation4 + $0x60] sm:$0xff] %v2936
      %2969 = vst [vmem:[#allocation4 + $0x68] sm:$0xff] %v2937
      %2970 = vst [vmem:[#allocation4 + $0x70] sm:$0xff] %v2938
      %2971 = vst [vmem:[#allocation4 + $0x78] sm:$0xff] %v2939
      %2972 = vst [vmem:[#allocation4 + $0x80] sm:$0xff] %v2940
      %2973 = vst [vmem:[#allocation4 + $0x88] sm:$0xff] %v2941
      %2974 = vst [vmem:[#allocation4 + $0x90] sm:$0xff] %v2942
      %2975 = vst [vmem:[#allocation4 + $0x98] sm:$0xff] %v2943
      %2976 = vst [vmem:[#allocation4 + $0xa0] sm:$0xff] %v2944
      %2977 = vst [vmem:[#allocation4 + $0xa8] sm:$0xff] %v2945
      %2978 = vst [vmem:[#allocation4 + $0xb0] sm:$0xff] %v2946
      %2979 = vst [vmem:[#allocation4 + $0xb8] sm:$0xff] %v2947
      %2980 = vst [vmem:[#allocation4 + $0xc0] sm:$0xff] %v2948
      %2981 = vst [vmem:[#allocation4 + $0xc8] sm:$0xff] %v2949
      %2982 = vst [vmem:[#allocation4 + $0xd0] sm:$0xff] %v2950
      %2983 = vst [vmem:[#allocation4 + $0xd8] sm:$0xff] %v2951
      %2984 = vst [vmem:[#allocation4 + $0xe0] sm:$0xff] %v2952
      %2985 = vst [vmem:[#allocation4 + $0xe8] sm:$0xff] %v2953
      %2986 = vst [vmem:[#allocation4 + $0xf0] sm:$0xff] %v2954
      %2987 = vst [vmem:[#allocation4 + $0xf8] sm:$0xff] %v2955
      %v2988 = vld [vmem:[#allocation3] sm:$0xff]
      %v2989 = vld [vmem:[#allocation3 + $0x8] sm:$0xff]
      %v2990 = vld [vmem:[#allocation3 + $0x10] sm:$0xff]
      %v2991 = vld [vmem:[#allocation3 + $0x20] sm:$0xff]
      %v2992 = vld [vmem:[#allocation3 + $0x28] sm:$0xff]
      %v2993 = vld [vmem:[#allocation3 + $0x30] sm:$0xff]
      %v2994 = vld [vmem:[#allocation3 + $0x40] sm:$0xff]
      %v2995 = vld [vmem:[#allocation3 + $0x48] sm:$0xff]
      %v2996 = vld [vmem:[#allocation3 + $0x50] sm:$0xff]
      %v2997 = vld [vmem:[#allocation3 + $0x60] sm:$0xff]
      %v2998 = vld [vmem:[#allocation3 + $0x68] sm:$0xff]
      %v2999 = vld [vmem:[#allocation3 + $0x70] sm:$0xff]
      %v3000 = vld [vmem:[#allocation3 + $0x80] sm:$0xff]
      %v3001 = vld [vmem:[#allocation3 + $0x88] sm:$0xff]
      %v3002 = vld [vmem:[#allocation3 + $0x90] sm:$0xff]
      %v3003 = vld [vmem:[#allocation3 + $0xa0] sm:$0xff]
      %v3004 = vld [vmem:[#allocation3 + $0xa8] sm:$0xff]
      %v3005 = vld [vmem:[#allocation3 + $0xb0] sm:$0xff]
      %v3006 = vld [vmem:[#allocation3 + $0xc0] sm:$0xff]
      %v3007 = vld [vmem:[#allocation3 + $0xc8] sm:$0xff]
      %v3008 = vld [vmem:[#allocation3 + $0xd0] sm:$0xff]
      %v3009 = vld [vmem:[#allocation3 + $0xe0] sm:$0xff]
      %v3010 = vld [vmem:[#allocation3 + $0xe8] sm:$0xff]
      %v3011 = vld [vmem:[#allocation3 + $0xf0] sm:$0xff]
      %v3012 = vld [vmem:[#allocation3 + $0x100] sm:$0xff]
      %v3013 = vld [vmem:[#allocation3 + $0x108] sm:$0xff]
      %v3014 = vld [vmem:[#allocation3 + $0x110] sm:$0xff]
      %v3015 = vld [vmem:[#allocation3 + $0x120] sm:$0xff]
      %v3016 = vld [vmem:[#allocation3 + $0x128] sm:$0xff]
      %v3017 = vld [vmem:[#allocation3 + $0x130] sm:$0xff]
      %v3018 = vld [vmem:[#allocation3 + $0x140] sm:$0xff]
      %v3019 = vld [vmem:[#allocation3 + $0x148] sm:$0xff]
      %v3020 = vld [vmem:[#allocation3 + $0x150] sm:$0xff]
      %v3021 = vld [vmem:[#allocation3 + $0x160] sm:$0xff]
      %v3022 = vld [vmem:[#allocation3 + $0x168] sm:$0xff]
      %v3023 = vld [vmem:[#allocation3 + $0x170] sm:$0xff]
      %v3024 = vld [vmem:[#allocation3 + $0x180] sm:$0xff]
      %v3025 = vld [vmem:[#allocation3 + $0x188] sm:$0xff]
      %v3026 = vld [vmem:[#allocation3 + $0x190] sm:$0xff]
      %v3027 = vld [vmem:[#allocation3 + $0x1a0] sm:$0xff]
      %v3028 = vld [vmem:[#allocation3 + $0x1a8] sm:$0xff]
      %v3029 = vld [vmem:[#allocation3 + $0x1b0] sm:$0xff]
      %v3030 = vld [vmem:[#allocation3 + $0x1c0] sm:$0xff]
      %v3031 = vld [vmem:[#allocation3 + $0x1c8] sm:$0xff]
      %v3032 = vld [vmem:[#allocation3 + $0x1d0] sm:$0xff]
      %v3033 = vld [vmem:[#allocation3 + $0x1e0] sm:$0xff]
      %v3034 = vld [vmem:[#allocation3 + $0x1e8] sm:$0xff]
      %v3035 = vld [vmem:[#allocation3 + $0x1f0] sm:$0xff]
      %3084 = vrot.lane.b32.xlu0 %v2988, 16
      %v3085 = vpop.permute.xlu0 %3084
      %3086 = vrot.lane.b32.xlu0 %v2989, 16
      %v3087 = vpop.permute.xlu0 %3086
      %3088 = vrot.lane.b32.xlu0 %v2990, 16
      %v3089 = vpop.permute.xlu0 %3088
      %3090 = vrot.lane.b32.xlu0 %v2991, 16
      %v3091 = vpop.permute.xlu0 %3090
      %3092 = vrot.lane.b32.xlu0 %v2992, 16
      %v3093 = vpop.permute.xlu0 %3092
      %3094 = vrot.lane.b32.xlu0 %v2993, 16
      %v3095 = vpop.permute.xlu0 %3094
      %3096 = vrot.lane.b32.xlu0 %v2994, 16
      %v3097 = vpop.permute.xlu0 %3096
      %3098 = vrot.lane.b32.xlu0 %v2995, 16
      %v3099 = vpop.permute.xlu0 %3098
      %3100 = vrot.lane.b32.xlu0 %v2996, 16
      %v3101 = vpop.permute.xlu0 %3100
      %3102 = vrot.lane.b32.xlu0 %v2997, 16
      %v3103 = vpop.permute.xlu0 %3102
      %3104 = vrot.lane.b32.xlu0 %v2998, 16
      %v3105 = vpop.permute.xlu0 %3104
      %3106 = vrot.lane.b32.xlu0 %v2999, 16
      %v3107 = vpop.permute.xlu0 %3106
      %3108 = vrot.lane.b32.xlu0 %v3000, 16
      %v3109 = vpop.permute.xlu0 %3108
      %3110 = vrot.lane.b32.xlu0 %v3001, 16
      %v3111 = vpop.permute.xlu0 %3110
      %3112 = vrot.lane.b32.xlu0 %v3002, 16
      %v3113 = vpop.permute.xlu0 %3112
      %3114 = vrot.lane.b32.xlu0 %v3003, 16
      %v3115 = vpop.permute.xlu0 %3114
      %3116 = vrot.lane.b32.xlu0 %v3004, 16
      %v3117 = vpop.permute.xlu0 %3116
      %3118 = vrot.lane.b32.xlu0 %v3005, 16
      %v3119 = vpop.permute.xlu0 %3118
      %3120 = vrot.lane.b32.xlu0 %v3006, 16
      %v3121 = vpop.permute.xlu0 %3120
      %3122 = vrot.lane.b32.xlu0 %v3007, 16
      %v3123 = vpop.permute.xlu0 %3122
      %3124 = vrot.lane.b32.xlu0 %v3008, 16
      %v3125 = vpop.permute.xlu0 %3124
      %3126 = vrot.lane.b32.xlu0 %v3009, 16
      %v3127 = vpop.permute.xlu0 %3126
      %3128 = vrot.lane.b32.xlu0 %v3010, 16
      %v3129 = vpop.permute.xlu0 %3128
      %3130 = vrot.lane.b32.xlu0 %v3011, 16
      %v3131 = vpop.permute.xlu0 %3130
      %3132 = vrot.lane.b32.xlu0 %v3012, 16
      %v3133 = vpop.permute.xlu0 %3132
      %3134 = vrot.lane.b32.xlu0 %v3013, 16
      %v3135 = vpop.permute.xlu0 %3134
      %3136 = vrot.lane.b32.xlu0 %v3014, 16
      %v3137 = vpop.permute.xlu0 %3136
      %3138 = vrot.lane.b32.xlu0 %v3015, 16
      %v3139 = vpop.permute.xlu0 %3138
      %3140 = vrot.lane.b32.xlu0 %v3016, 16
      %v3141 = vpop.permute.xlu0 %3140
      %3142 = vrot.lane.b32.xlu0 %v3017, 16
      %v3143 = vpop.permute.xlu0 %3142
      %3144 = vrot.lane.b32.xlu0 %v3018, 16
      %v3145 = vpop.permute.xlu0 %3144
      %3146 = vrot.lane.b32.xlu0 %v3019, 16
      %v3147 = vpop.permute.xlu0 %3146
      %3148 = vrot.lane.b32.xlu0 %v3020, 16
      %v3149 = vpop.permute.xlu0 %3148
      %3150 = vrot.lane.b32.xlu0 %v3021, 16
      %v3151 = vpop.permute.xlu0 %3150
      %3152 = vrot.lane.b32.xlu0 %v3022, 16
      %v3153 = vpop.permute.xlu0 %3152
      %3154 = vrot.lane.b32.xlu0 %v3023, 16
      %v3155 = vpop.permute.xlu0 %3154
      %3156 = vrot.lane.b32.xlu0 %v3024, 16
      %v3157 = vpop.permute.xlu0 %3156
      %3158 = vrot.lane.b32.xlu0 %v3025, 16
      %v3159 = vpop.permute.xlu0 %3158
      %3160 = vrot.lane.b32.xlu0 %v3026, 16
      %v3161 = vpop.permute.xlu0 %3160
      %3162 = vrot.lane.b32.xlu0 %v3027, 16
      %v3163 = vpop.permute.xlu0 %3162
      %3164 = vrot.lane.b32.xlu0 %v3028, 16
      %v3165 = vpop.permute.xlu0 %3164
      %3166 = vrot.lane.b32.xlu0 %v3029, 16
      %v3167 = vpop.permute.xlu0 %3166
      %3168 = vrot.lane.b32.xlu0 %v3030, 16
      %v3169 = vpop.permute.xlu0 %3168
      %3170 = vrot.lane.b32.xlu0 %v3031, 16
      %v3171 = vpop.permute.xlu0 %3170
      %3172 = vrot.lane.b32.xlu0 %v3032, 16
      %v3173 = vpop.permute.xlu0 %3172
      %3174 = vrot.lane.b32.xlu0 %v3033, 16
      %v3175 = vpop.permute.xlu0 %3174
      %3176 = vrot.lane.b32.xlu0 %v3034, 16
      %v3177 = vpop.permute.xlu0 %3176
      %3178 = vrot.lane.b32.xlu0 %v3035, 16
      %v3179 = vpop.permute.xlu0 %3178
      %vm3180 = vcmask 130048
      %v3181 = vsel %vm3180, %v3085, %v3087
      %v3182 = vsel %vm3180, %v3087, %v3089
      %v3183 = vsel %vm3180, %v3091, %v3093
      %v3184 = vsel %vm3180, %v3093, %v3095
      %v3185 = vsel %vm3180, %v3097, %v3099
      %v3186 = vsel %vm3180, %v3099, %v3101
      %v3187 = vsel %vm3180, %v3103, %v3105
      %v3188 = vsel %vm3180, %v3105, %v3107
      %v3189 = vsel %vm3180, %v3109, %v3111
      %v3190 = vsel %vm3180, %v3111, %v3113
      %v3191 = vsel %vm3180, %v3115, %v3117
      %v3192 = vsel %vm3180, %v3117, %v3119
      %v3193 = vsel %vm3180, %v3121, %v3123
      %v3194 = vsel %vm3180, %v3123, %v3125
      %v3195 = vsel %vm3180, %v3127, %v3129
      %v3196 = vsel %vm3180, %v3129, %v3131
      %v3197 = vsel %vm3180, %v3133, %v3135
      %v3198 = vsel %vm3180, %v3135, %v3137
      %v3199 = vsel %vm3180, %v3139, %v3141
      %v3200 = vsel %vm3180, %v3141, %v3143
      %v3201 = vsel %vm3180, %v3145, %v3147
      %v3202 = vsel %vm3180, %v3147, %v3149
      %v3203 = vsel %vm3180, %v3151, %v3153
      %v3204 = vsel %vm3180, %v3153, %v3155
      %v3205 = vsel %vm3180, %v3157, %v3159
      %v3206 = vsel %vm3180, %v3159, %v3161
      %v3207 = vsel %vm3180, %v3163, %v3165
      %v3208 = vsel %vm3180, %v3165, %v3167
      %v3209 = vsel %vm3180, %v3169, %v3171
      %v3210 = vsel %vm3180, %v3171, %v3173
      %v3211 = vsel %vm3180, %v3175, %v3177
      %v3212 = vsel %vm3180, %v3177, %v3179
      %3245 = vst [vmem:[#allocation4 + $0x100] sm:$0xff] %v3181
      %3246 = vst [vmem:[#allocation4 + $0x108] sm:$0xff] %v3182
      %3247 = vst [vmem:[#allocation4 + $0x110] sm:$0xff] %v3183
      %3248 = vst [vmem:[#allocation4 + $0x118] sm:$0xff] %v3184
      %3249 = vst [vmem:[#allocation4 + $0x120] sm:$0xff] %v3185
      %3250 = vst [vmem:[#allocation4 + $0x128] sm:$0xff] %v3186
      %3251 = vst [vmem:[#allocation4 + $0x130] sm:$0xff] %v3187
      %3252 = vst [vmem:[#allocation4 + $0x138] sm:$0xff] %v3188
      %3253 = vst [vmem:[#allocation4 + $0x140] sm:$0xff] %v3189
      %3254 = vst [vmem:[#allocation4 + $0x148] sm:$0xff] %v3190
      %3255 = vst [vmem:[#allocation4 + $0x150] sm:$0xff] %v3191
      %3256 = vst [vmem:[#allocation4 + $0x158] sm:$0xff] %v3192
      %3257 = vst [vmem:[#allocation4 + $0x160] sm:$0xff] %v3193
      %3258 = vst [vmem:[#allocation4 + $0x168] sm:$0xff] %v3194
      %3259 = vst [vmem:[#allocation4 + $0x170] sm:$0xff] %v3195
      %3260 = vst [vmem:[#allocation4 + $0x178] sm:$0xff] %v3196
      %3261 = vst [vmem:[#allocation4 + $0x180] sm:$0xff] %v3197
      %3262 = vst [vmem:[#allocation4 + $0x188] sm:$0xff] %v3198
      %3263 = vst [vmem:[#allocation4 + $0x190] sm:$0xff] %v3199
      %3264 = vst [vmem:[#allocation4 + $0x198] sm:$0xff] %v3200
      %3265 = vst [vmem:[#allocation4 + $0x1a0] sm:$0xff] %v3201
      %3266 = vst [vmem:[#allocation4 + $0x1a8] sm:$0xff] %v3202
      %3267 = vst [vmem:[#allocation4 + $0x1b0] sm:$0xff] %v3203
      %3268 = vst [vmem:[#allocation4 + $0x1b8] sm:$0xff] %v3204
      %3269 = vst [vmem:[#allocation4 + $0x1c0] sm:$0xff] %v3205
      %3270 = vst [vmem:[#allocation4 + $0x1c8] sm:$0xff] %v3206
      %3271 = vst [vmem:[#allocation4 + $0x1d0] sm:$0xff] %v3207
      %3272 = vst [vmem:[#allocation4 + $0x1d8] sm:$0xff] %v3208
      %3273 = vst [vmem:[#allocation4 + $0x1e0] sm:$0xff] %v3209
      %3274 = vst [vmem:[#allocation4 + $0x1e8] sm:$0xff] %v3210
      %3275 = vst [vmem:[#allocation4 + $0x1f0] sm:$0xff] %v3211
      %3276 = vst [vmem:[#allocation4 + $0x1f8] sm:$0xff] %v3212
      %v3277 = vld [vmem:[#allocation3] sm:$0xff]
      %v3278 = vld [vmem:[#allocation3 + $0x8] sm:$0xff]
      %v3279 = vld [vmem:[#allocation3 + $0x10] sm:$0xff]
      %v3280 = vld [vmem:[#allocation3 + $0x20] sm:$0xff]
      %v3281 = vld [vmem:[#allocation3 + $0x28] sm:$0xff]
      %v3282 = vld [vmem:[#allocation3 + $0x30] sm:$0xff]
      %v3283 = vld [vmem:[#allocation3 + $0x40] sm:$0xff]
      %v3284 = vld [vmem:[#allocation3 + $0x48] sm:$0xff]
      %v3285 = vld [vmem:[#allocation3 + $0x50] sm:$0xff]
      %v3286 = vld [vmem:[#allocation3 + $0x60] sm:$0xff]
      %v3287 = vld [vmem:[#allocation3 + $0x68] sm:$0xff]
      %v3288 = vld [vmem:[#allocation3 + $0x70] sm:$0xff]
      %v3289 = vld [vmem:[#allocation3 + $0x80] sm:$0xff]
      %v3290 = vld [vmem:[#allocation3 + $0x88] sm:$0xff]
      %v3291 = vld [vmem:[#allocation3 + $0x90] sm:$0xff]
      %v3292 = vld [vmem:[#allocation3 + $0xa0] sm:$0xff]
      %v3293 = vld [vmem:[#allocation3 + $0xa8] sm:$0xff]
      %v3294 = vld [vmem:[#allocation3 + $0xb0] sm:$0xff]
      %v3295 = vld [vmem:[#allocation3 + $0xc0] sm:$0xff]
      %v3296 = vld [vmem:[#allocation3 + $0xc8] sm:$0xff]
      %v3297 = vld [vmem:[#allocation3 + $0xd0] sm:$0xff]
      %v3298 = vld [vmem:[#allocation3 + $0xe0] sm:$0xff]
      %v3299 = vld [vmem:[#allocation3 + $0xe8] sm:$0xff]
      %v3300 = vld [vmem:[#allocation3 + $0xf0] sm:$0xff]
      %v3301 = vld [vmem:[#allocation3 + $0x100] sm:$0xff]
      %v3302 = vld [vmem:[#allocation3 + $0x108] sm:$0xff]
      %v3303 = vld [vmem:[#allocation3 + $0x110] sm:$0xff]
      %v3304 = vld [vmem:[#allocation3 + $0x120] sm:$0xff]
      %v3305 = vld [vmem:[#allocation3 + $0x128] sm:$0xff]
      %v3306 = vld [vmem:[#allocation3 + $0x130] sm:$0xff]
      %v3307 = vld [vmem:[#allocation3 + $0x140] sm:$0xff]
      %v3308 = vld [vmem:[#allocation3 + $0x148] sm:$0xff]
      %v3309 = vld [vmem:[#allocation3 + $0x150] sm:$0xff]
      %v3310 = vld [vmem:[#allocation3 + $0x160] sm:$0xff]
      %v3311 = vld [vmem:[#allocation3 + $0x168] sm:$0xff]
      %v3312 = vld [vmem:[#allocation3 + $0x170] sm:$0xff]
      %v3313 = vld [vmem:[#allocation3 + $0x180] sm:$0xff]
      %v3314 = vld [vmem:[#allocation3 + $0x188] sm:$0xff]
      %v3315 = vld [vmem:[#allocation3 + $0x190] sm:$0xff]
      %v3316 = vld [vmem:[#allocation3 + $0x1a0] sm:$0xff]
      %v3317 = vld [vmem:[#allocation3 + $0x1a8] sm:$0xff]
      %v3318 = vld [vmem:[#allocation3 + $0x1b0] sm:$0xff]
      %v3319 = vld [vmem:[#allocation3 + $0x1c0] sm:$0xff]
      %v3320 = vld [vmem:[#allocation3 + $0x1c8] sm:$0xff]
      %v3321 = vld [vmem:[#allocation3 + $0x1d0] sm:$0xff]
      %v3322 = vld [vmem:[#allocation3 + $0x1e0] sm:$0xff]
      %v3323 = vld [vmem:[#allocation3 + $0x1e8] sm:$0xff]
      %v3324 = vld [vmem:[#allocation3 + $0x1f0] sm:$0xff]
      %v3325 = vsel %vm2661, 1, 0
      %v3326 = vsel %vm2662, 1, 0
      %vm3327 = vcmp.eq.s32.totalorder %v3325, 1
      %vm3328 = vcmp.eq.s32.totalorder %v3326, 1
      %3377 = vrot.lane.b32.xlu0 %v3277, 15
      %v3378 = vpop.permute.xlu0 %3377
      %3379 = vrot.lane.b32.xlu0 %v3278, 15
      %v3380 = vpop.permute.xlu0 %3379
      %3381 = vrot.lane.b32.xlu0 %v3279, 15
      %v3382 = vpop.permute.xlu0 %3381
      %3383 = vrot.lane.b32.xlu0 %v3280, 15
      %v3384 = vpop.permute.xlu0 %3383
      %3385 = vrot.lane.b32.xlu0 %v3281, 15
      %v3386 = vpop.permute.xlu0 %3385
      %3387 = vrot.lane.b32.xlu0 %v3282, 15
      %v3388 = vpop.permute.xlu0 %3387
      %3389 = vrot.lane.b32.xlu0 %v3283, 15
      %v3390 = vpop.permute.xlu0 %3389
      %3391 = vrot.lane.b32.xlu0 %v3284, 15
      %v3392 = vpop.permute.xlu0 %3391
      %3393 = vrot.lane.b32.xlu0 %v3285, 15
      %v3394 = vpop.permute.xlu0 %3393
      %3395 = vrot.lane.b32.xlu0 %v3286, 15
      %v3396 = vpop.permute.xlu0 %3395
      %3397 = vrot.lane.b32.xlu0 %v3287, 15
      %v3398 = vpop.permute.xlu0 %3397
      %3399 = vrot.lane.b32.xlu0 %v3288, 15
      %v3400 = vpop.permute.xlu0 %3399
      %3401 = vrot.lane.b32.xlu0 %v3289, 15
      %v3402 = vpop.permute.xlu0 %3401
      %3403 = vrot.lane.b32.xlu0 %v3290, 15
      %v3404 = vpop.permute.xlu0 %3403
      %3405 = vrot.lane.b32.xlu0 %v3291, 15
      %v3406 = vpop.permute.xlu0 %3405
      %3407 = vrot.lane.b32.xlu0 %v3292, 15
      %v3408 = vpop.permute.xlu0 %3407
      %3409 = vrot.lane.b32.xlu0 %v3293, 15
      %v3410 = vpop.permute.xlu0 %3409
      %3411 = vrot.lane.b32.xlu0 %v3294, 15
      %v3412 = vpop.permute.xlu0 %3411
      %3413 = vrot.lane.b32.xlu0 %v3295, 15
      %v3414 = vpop.permute.xlu0 %3413
      %3415 = vrot.lane.b32.xlu0 %v3296, 15
      %v3416 = vpop.permute.xlu0 %3415
      %3417 = vrot.lane.b32.xlu0 %v3297, 15
      %v3418 = vpop.permute.xlu0 %3417
      %3419 = vrot.lane.b32.xlu0 %v3298, 15
      %v3420 = vpop.permute.xlu0 %3419
      %3421 = vrot.lane.b32.xlu0 %v3299, 15
      %v3422 = vpop.permute.xlu0 %3421
      %3423 = vrot.lane.b32.xlu0 %v3300, 15
      %v3424 = vpop.permute.xlu0 %3423
      %3425 = vrot.lane.b32.xlu0 %v3301, 15
      %v3426 = vpop.permute.xlu0 %3425
      %3427 = vrot.lane.b32.xlu0 %v3302, 15
      %v3428 = vpop.permute.xlu0 %3427
      %3429 = vrot.lane.b32.xlu0 %v3303, 15
      %v3430 = vpop.permute.xlu0 %3429
      %3431 = vrot.lane.b32.xlu0 %v3304, 15
      %v3432 = vpop.permute.xlu0 %3431
      %3433 = vrot.lane.b32.xlu0 %v3305, 15
      %v3434 = vpop.permute.xlu0 %3433
      %3435 = vrot.lane.b32.xlu0 %v3306, 15
      %v3436 = vpop.permute.xlu0 %3435
      %3437 = vrot.lane.b32.xlu0 %v3307, 15
      %v3438 = vpop.permute.xlu0 %3437
      %3439 = vrot.lane.b32.xlu0 %v3308, 15
      %v3440 = vpop.permute.xlu0 %3439
      %3441 = vrot.lane.b32.xlu0 %v3309, 15
      %v3442 = vpop.permute.xlu0 %3441
      %3443 = vrot.lane.b32.xlu0 %v3310, 15
      %v3444 = vpop.permute.xlu0 %3443
      %3445 = vrot.lane.b32.xlu0 %v3311, 15
      %v3446 = vpop.permute.xlu0 %3445
      %3447 = vrot.lane.b32.xlu0 %v3312, 15
      %v3448 = vpop.permute.xlu0 %3447
      %3449 = vrot.lane.b32.xlu0 %v3313, 15
      %v3450 = vpop.permute.xlu0 %3449
      %3451 = vrot.lane.b32.xlu0 %v3314, 15
      %v3452 = vpop.permute.xlu0 %3451
      %3453 = vrot.lane.b32.xlu0 %v3315, 15
      %v3454 = vpop.permute.xlu0 %3453
      %3455 = vrot.lane.b32.xlu0 %v3316, 15
      %v3456 = vpop.permute.xlu0 %3455
      %3457 = vrot.lane.b32.xlu0 %v3317, 15
      %v3458 = vpop.permute.xlu0 %3457
      %3459 = vrot.lane.b32.xlu0 %v3318, 15
      %v3460 = vpop.permute.xlu0 %3459
      %3461 = vrot.lane.b32.xlu0 %v3319, 15
      %v3462 = vpop.permute.xlu0 %3461
      %3463 = vrot.lane.b32.xlu0 %v3320, 15
      %v3464 = vpop.permute.xlu0 %3463
      %3465 = vrot.lane.b32.xlu0 %v3321, 15
      %v3466 = vpop.permute.xlu0 %3465
      %3467 = vrot.lane.b32.xlu0 %v3322, 15
      %v3468 = vpop.permute.xlu0 %3467
      %3469 = vrot.lane.b32.xlu0 %v3323, 15
      %v3470 = vpop.permute.xlu0 %3469
      %3471 = vrot.lane.b32.xlu0 %v3324, 15
      %v3472 = vpop.permute.xlu0 %3471
      %vm3473 = vcmask 121856
      %v3474 = vsel %vm3473, %v3378, %v3380
      %v3475 = vsel %vm3473, %v3380, %v3382
      %v3476 = vsel %vm3473, %v3384, %v3386
      %v3477 = vsel %vm3473, %v3386, %v3388
      %v3478 = vsel %vm3473, %v3390, %v3392
      %v3479 = vsel %vm3473, %v3392, %v3394
      %v3480 = vsel %vm3473, %v3396, %v3398
      %v3481 = vsel %vm3473, %v3398, %v3400
      %v3482 = vsel %vm3473, %v3402, %v3404
      %v3483 = vsel %vm3473, %v3404, %v3406
      %v3484 = vsel %vm3473, %v3408, %v3410
      %v3485 = vsel %vm3473, %v3410, %v3412
      %v3486 = vsel %vm3473, %v3414, %v3416
      %v3487 = vsel %vm3473, %v3416, %v3418
      %v3488 = vsel %vm3473, %v3420, %v3422
      %v3489 = vsel %vm3473, %v3422, %v3424
      %v3490 = vsel %vm3473, %v3426, %v3428
      %v3491 = vsel %vm3473, %v3428, %v3430
      %v3492 = vsel %vm3473, %v3432, %v3434
      %v3493 = vsel %vm3473, %v3434, %v3436
      %v3494 = vsel %vm3473, %v3438, %v3440
      %v3495 = vsel %vm3473, %v3440, %v3442
      %v3496 = vsel %vm3473, %v3444, %v3446
      %v3497 = vsel %vm3473, %v3446, %v3448
      %v3498 = vsel %vm3473, %v3450, %v3452
      %v3499 = vsel %vm3473, %v3452, %v3454
      %v3500 = vsel %vm3473, %v3456, %v3458
      %v3501 = vsel %vm3473, %v3458, %v3460
      %v3502 = vsel %vm3473, %v3462, %v3464
      %v3503 = vsel %vm3473, %v3464, %v3466
      %v3504 = vsel %vm3473, %v3468, %v3470
      %v3505 = vsel %vm3473, %v3470, %v3472
      %v3538 = vsel %vm3327, %v3474, 0.0
      %v3539 = vsel %vm3328, %v3475, 0.0
      %v3540 = vsel %vm3327, %v3476, 0.0
      %v3541 = vsel %vm3328, %v3477, 0.0
      %v3542 = vsel %vm3327, %v3478, 0.0
      %v3543 = vsel %vm3328, %v3479, 0.0
      %v3544 = vsel %vm3327, %v3480, 0.0
      %v3545 = vsel %vm3328, %v3481, 0.0
      %v3546 = vsel %vm3327, %v3482, 0.0
      %v3547 = vsel %vm3328, %v3483, 0.0
      %v3548 = vsel %vm3327, %v3484, 0.0
      %v3549 = vsel %vm3328, %v3485, 0.0
      %v3550 = vsel %vm3327, %v3486, 0.0
      %v3551 = vsel %vm3328, %v3487, 0.0
      %v3552 = vsel %vm3327, %v3488, 0.0
      %v3553 = vsel %vm3328, %v3489, 0.0
      %v3554 = vsel %vm3327, %v3490, 0.0
      %v3555 = vsel %vm3328, %v3491, 0.0
      %v3556 = vsel %vm3327, %v3492, 0.0
      %v3557 = vsel %vm3328, %v3493, 0.0
      %v3558 = vsel %vm3327, %v3494, 0.0
      %v3559 = vsel %vm3328, %v3495, 0.0
      %v3560 = vsel %vm3327, %v3496, 0.0
      %v3561 = vsel %vm3328, %v3497, 0.0
      %v3562 = vsel %vm3327, %v3498, 0.0
      %v3563 = vsel %vm3328, %v3499, 0.0
      %v3564 = vsel %vm3327, %v3500, 0.0
      %v3565 = vsel %vm3328, %v3501, 0.0
      %v3566 = vsel %vm3327, %v3502, 0.0
      %v3567 = vsel %vm3328, %v3503, 0.0
      %v3568 = vsel %vm3327, %v3504, 0.0
      %v3569 = vsel %vm3328, %v3505, 0.0
      %3570 = vst [vmem:[#allocation4 + $0x200] sm:$0xff] %v3538
      %3571 = vst [vmem:[#allocation4 + $0x208] sm:$0xff] %v3539
      %3572 = vst [vmem:[#allocation4 + $0x210] sm:$0xff] %v3540
      %3573 = vst [vmem:[#allocation4 + $0x218] sm:$0xff] %v3541
      %3574 = vst [vmem:[#allocation4 + $0x220] sm:$0xff] %v3542
      %3575 = vst [vmem:[#allocation4 + $0x228] sm:$0xff] %v3543
      %3576 = vst [vmem:[#allocation4 + $0x230] sm:$0xff] %v3544
      %3577 = vst [vmem:[#allocation4 + $0x238] sm:$0xff] %v3545
      %3578 = vst [vmem:[#allocation4 + $0x240] sm:$0xff] %v3546
      %3579 = vst [vmem:[#allocation4 + $0x248] sm:$0xff] %v3547
      %3580 = vst [vmem:[#allocation4 + $0x250] sm:$0xff] %v3548
      %3581 = vst [vmem:[#allocation4 + $0x258] sm:$0xff] %v3549
      %3582 = vst [vmem:[#allocation4 + $0x260] sm:$0xff] %v3550
      %3583 = vst [vmem:[#allocation4 + $0x268] sm:$0xff] %v3551
      %3584 = vst [vmem:[#allocation4 + $0x270] sm:$0xff] %v3552
      %3585 = vst [vmem:[#allocation4 + $0x278] sm:$0xff] %v3553
      %3586 = vst [vmem:[#allocation4 + $0x280] sm:$0xff] %v3554
      %3587 = vst [vmem:[#allocation4 + $0x288] sm:$0xff] %v3555
      %3588 = vst [vmem:[#allocation4 + $0x290] sm:$0xff] %v3556
      %3589 = vst [vmem:[#allocation4 + $0x298] sm:$0xff] %v3557
      %3590 = vst [vmem:[#allocation4 + $0x2a0] sm:$0xff] %v3558
      %3591 = vst [vmem:[#allocation4 + $0x2a8] sm:$0xff] %v3559
      %3592 = vst [vmem:[#allocation4 + $0x2b0] sm:$0xff] %v3560
      %3593 = vst [vmem:[#allocation4 + $0x2b8] sm:$0xff] %v3561
      %3594 = vst [vmem:[#allocation4 + $0x2c0] sm:$0xff] %v3562
      %3595 = vst [vmem:[#allocation4 + $0x2c8] sm:$0xff] %v3563
      %3596 = vst [vmem:[#allocation4 + $0x2d0] sm:$0xff] %v3564
      %3597 = vst [vmem:[#allocation4 + $0x2d8] sm:$0xff] %v3565
      %3598 = vst [vmem:[#allocation4 + $0x2e0] sm:$0xff] %v3566
      %3599 = vst [vmem:[#allocation4 + $0x2e8] sm:$0xff] %v3567
      %3600 = vst [vmem:[#allocation4 + $0x2f0] sm:$0xff] %v3568
      %3601 = vst [vmem:[#allocation4 + $0x2f8] sm:$0xff] %v3569
      %v3602 = vld [vmem:[#allocation3] sm:$0xff]
      %v3603 = vld [vmem:[#allocation3 + $0x8] sm:$0xff]
      %v3604 = vld [vmem:[#allocation3 + $0x10] sm:$0xff]
      %v3605 = vld [vmem:[#allocation3 + $0x20] sm:$0xff]
      %v3606 = vld [vmem:[#allocation3 + $0x28] sm:$0xff]
      %v3607 = vld [vmem:[#allocation3 + $0x30] sm:$0xff]
      %v3608 = vld [vmem:[#allocation3 + $0x40] sm:$0xff]
      %v3609 = vld [vmem:[#allocation3 + $0x48] sm:$0xff]
      %v3610 = vld [vmem:[#allocation3 + $0x50] sm:$0xff]
      %v3611 = vld [vmem:[#allocation3 + $0x60] sm:$0xff]
      %v3612 = vld [vmem:[#allocation3 + $0x68] sm:$0xff]
      %v3613 = vld [vmem:[#allocation3 + $0x70] sm:$0xff]
      %v3614 = vld [vmem:[#allocation3 + $0x80] sm:$0xff]
      %v3615 = vld [vmem:[#allocation3 + $0x88] sm:$0xff]
      %v3616 = vld [vmem:[#allocation3 + $0x90] sm:$0xff]
      %v3617 = vld [vmem:[#allocation3 + $0xa0] sm:$0xff]
      %v3618 = vld [vmem:[#allocation3 + $0xa8] sm:$0xff]
      %v3619 = vld [vmem:[#allocation3 + $0xb0] sm:$0xff]
      %v3620 = vld [vmem:[#allocation3 + $0xc0] sm:$0xff]
      %v3621 = vld [vmem:[#allocation3 + $0xc8] sm:$0xff]
      %v3622 = vld [vmem:[#allocation3 + $0xd0] sm:$0xff]
      %v3623 = vld [vmem:[#allocation3 + $0xe0] sm:$0xff]
      %v3624 = vld [vmem:[#allocation3 + $0xe8] sm:$0xff]
      %v3625 = vld [vmem:[#allocation3 + $0xf0] sm:$0xff]
      %v3626 = vld [vmem:[#allocation3 + $0x100] sm:$0xff]
      %v3627 = vld [vmem:[#allocation3 + $0x108] sm:$0xff]
      %v3628 = vld [vmem:[#allocation3 + $0x110] sm:$0xff]
      %v3629 = vld [vmem:[#allocation3 + $0x120] sm:$0xff]
      %v3630 = vld [vmem:[#allocation3 + $0x128] sm:$0xff]
      %v3631 = vld [vmem:[#allocation3 + $0x130] sm:$0xff]
      %v3632 = vld [vmem:[#allocation3 + $0x140] sm:$0xff]
      %v3633 = vld [vmem:[#allocation3 + $0x148] sm:$0xff]
      %v3634 = vld [vmem:[#allocation3 + $0x150] sm:$0xff]
      %v3635 = vld [vmem:[#allocation3 + $0x160] sm:$0xff]
      %v3636 = vld [vmem:[#allocation3 + $0x168] sm:$0xff]
      %v3637 = vld [vmem:[#allocation3 + $0x170] sm:$0xff]
      %v3638 = vld [vmem:[#allocation3 + $0x180] sm:$0xff]
      %v3639 = vld [vmem:[#allocation3 + $0x188] sm:$0xff]
      %v3640 = vld [vmem:[#allocation3 + $0x190] sm:$0xff]
      %v3641 = vld [vmem:[#allocation3 + $0x1a0] sm:$0xff]
      %v3642 = vld [vmem:[#allocation3 + $0x1a8] sm:$0xff]
      %v3643 = vld [vmem:[#allocation3 + $0x1b0] sm:$0xff]
      %v3644 = vld [vmem:[#allocation3 + $0x1c0] sm:$0xff]
      %v3645 = vld [vmem:[#allocation3 + $0x1c8] sm:$0xff]
      %v3646 = vld [vmem:[#allocation3 + $0x1d0] sm:$0xff]
      %v3647 = vld [vmem:[#allocation3 + $0x1e0] sm:$0xff]
      %v3648 = vld [vmem:[#allocation3 + $0x1e8] sm:$0xff]
      %v3649 = vld [vmem:[#allocation3 + $0x1f0] sm:$0xff]
      %3698 = vrot.lane.b32.xlu0 %v3602, 1
      %v3699 = vpop.permute.xlu0 %3698
      %3700 = vrot.lane.b32.xlu0 %v3603, 1
      %v3701 = vpop.permute.xlu0 %3700
      %3702 = vrot.lane.b32.xlu0 %v3604, 1
      %v3703 = vpop.permute.xlu0 %3702
      %3704 = vrot.lane.b32.xlu0 %v3605, 1
      %v3705 = vpop.permute.xlu0 %3704
      %3706 = vrot.lane.b32.xlu0 %v3606, 1
      %v3707 = vpop.permute.xlu0 %3706
      %3708 = vrot.lane.b32.xlu0 %v3607, 1
      %v3709 = vpop.permute.xlu0 %3708
      %3710 = vrot.lane.b32.xlu0 %v3608, 1
      %v3711 = vpop.permute.xlu0 %3710
      %3712 = vrot.lane.b32.xlu0 %v3609, 1
      %v3713 = vpop.permute.xlu0 %3712
      %3714 = vrot.lane.b32.xlu0 %v3610, 1
      %v3715 = vpop.permute.xlu0 %3714
      %3716 = vrot.lane.b32.xlu0 %v3611, 1
      %v3717 = vpop.permute.xlu0 %3716
      %3718 = vrot.lane.b32.xlu0 %v3612, 1
      %v3719 = vpop.permute.xlu0 %3718
      %3720 = vrot.lane.b32.xlu0 %v3613, 1
      %v3721 = vpop.permute.xlu0 %3720
      %3722 = vrot.lane.b32.xlu0 %v3614, 1
      %v3723 = vpop.permute.xlu0 %3722
      %3724 = vrot.lane.b32.xlu0 %v3615, 1
      %v3725 = vpop.permute.xlu0 %3724
      %3726 = vrot.lane.b32.xlu0 %v3616, 1
      %v3727 = vpop.permute.xlu0 %3726
      %3728 = vrot.lane.b32.xlu0 %v3617, 1
      %v3729 = vpop.permute.xlu0 %3728
      %3730 = vrot.lane.b32.xlu0 %v3618, 1
      %v3731 = vpop.permute.xlu0 %3730
      %3732 = vrot.lane.b32.xlu0 %v3619, 1
      %v3733 = vpop.permute.xlu0 %3732
      %3734 = vrot.lane.b32.xlu0 %v3620, 1
      %v3735 = vpop.permute.xlu0 %3734
      %3736 = vrot.lane.b32.xlu0 %v3621, 1
      %v3737 = vpop.permute.xlu0 %3736
      %3738 = vrot.lane.b32.xlu0 %v3622, 1
      %v3739 = vpop.permute.xlu0 %3738
      %3740 = vrot.lane.b32.xlu0 %v3623, 1
      %v3741 = vpop.permute.xlu0 %3740
      %3742 = vrot.lane.b32.xlu0 %v3624, 1
      %v3743 = vpop.permute.xlu0 %3742
      %3744 = vrot.lane.b32.xlu0 %v3625, 1
      %v3745 = vpop.permute.xlu0 %3744
      %3746 = vrot.lane.b32.xlu0 %v3626, 1
      %v3747 = vpop.permute.xlu0 %3746
      %3748 = vrot.lane.b32.xlu0 %v3627, 1
      %v3749 = vpop.permute.xlu0 %3748
      %3750 = vrot.lane.b32.xlu0 %v3628, 1
      %v3751 = vpop.permute.xlu0 %3750
      %3752 = vrot.lane.b32.xlu0 %v3629, 1
      %v3753 = vpop.permute.xlu0 %3752
      %3754 = vrot.lane.b32.xlu0 %v3630, 1
      %v3755 = vpop.permute.xlu0 %3754
      %3756 = vrot.lane.b32.xlu0 %v3631, 1
      %v3757 = vpop.permute.xlu0 %3756
      %3758 = vrot.lane.b32.xlu0 %v3632, 1
      %v3759 = vpop.permute.xlu0 %3758
      %3760 = vrot.lane.b32.xlu0 %v3633, 1
      %v3761 = vpop.permute.xlu0 %3760
      %3762 = vrot.lane.b32.xlu0 %v3634, 1
      %v3763 = vpop.permute.xlu0 %3762
      %3764 = vrot.lane.b32.xlu0 %v3635, 1
      %v3765 = vpop.permute.xlu0 %3764
      %3766 = vrot.lane.b32.xlu0 %v3636, 1
      %v3767 = vpop.permute.xlu0 %3766
      %3768 = vrot.lane.b32.xlu0 %v3637, 1
      %v3769 = vpop.permute.xlu0 %3768
      %3770 = vrot.lane.b32.xlu0 %v3638, 1
      %v3771 = vpop.permute.xlu0 %3770
      %3772 = vrot.lane.b32.xlu0 %v3639, 1
      %v3773 = vpop.permute.xlu0 %3772
      %3774 = vrot.lane.b32.xlu0 %v3640, 1
      %v3775 = vpop.permute.xlu0 %3774
      %3776 = vrot.lane.b32.xlu0 %v3641, 1
      %v3777 = vpop.permute.xlu0 %3776
      %3778 = vrot.lane.b32.xlu0 %v3642, 1
      %v3779 = vpop.permute.xlu0 %3778
      %3780 = vrot.lane.b32.xlu0 %v3643, 1
      %v3781 = vpop.permute.xlu0 %3780
      %3782 = vrot.lane.b32.xlu0 %v3644, 1
      %v3783 = vpop.permute.xlu0 %3782
      %3784 = vrot.lane.b32.xlu0 %v3645, 1
      %v3785 = vpop.permute.xlu0 %3784
      %3786 = vrot.lane.b32.xlu0 %v3646, 1
      %v3787 = vpop.permute.xlu0 %3786
      %3788 = vrot.lane.b32.xlu0 %v3647, 1
      %v3789 = vpop.permute.xlu0 %3788
      %3790 = vrot.lane.b32.xlu0 %v3648, 1
      %v3791 = vpop.permute.xlu0 %3790
      %3792 = vrot.lane.b32.xlu0 %v3649, 1
      %v3793 = vpop.permute.xlu0 %3792
      %vm3794 = vcmask 7168
      %v3795 = vsel %vm3794, %v3699, %v3701
      %v3796 = vsel %vm3794, %v3701, %v3703
      %v3797 = vsel %vm3794, %v3705, %v3707
      %v3798 = vsel %vm3794, %v3707, %v3709
      %v3799 = vsel %vm3794, %v3711, %v3713
      %v3800 = vsel %vm3794, %v3713, %v3715
      %v3801 = vsel %vm3794, %v3717, %v3719
      %v3802 = vsel %vm3794, %v3719, %v3721
      %v3803 = vsel %vm3794, %v3723, %v3725
      %v3804 = vsel %vm3794, %v3725, %v3727
      %v3805 = vsel %vm3794, %v3729, %v3731
      %v3806 = vsel %vm3794, %v3731, %v3733
      %v3807 = vsel %vm3794, %v3735, %v3737
      %v3808 = vsel %vm3794, %v3737, %v3739
      %v3809 = vsel %vm3794, %v3741, %v3743
      %v3810 = vsel %vm3794, %v3743, %v3745
      %v3811 = vsel %vm3794, %v3747, %v3749
      %v3812 = vsel %vm3794, %v3749, %v3751
      %v3813 = vsel %vm3794, %v3753, %v3755
      %v3814 = vsel %vm3794, %v3755, %v3757
      %v3815 = vsel %vm3794, %v3759, %v3761
      %v3816 = vsel %vm3794, %v3761, %v3763
      %v3817 = vsel %vm3794, %v3765, %v3767
      %v3818 = vsel %vm3794, %v3767, %v3769
      %v3819 = vsel %vm3794, %v3771, %v3773
      %v3820 = vsel %vm3794, %v3773, %v3775
      %v3821 = vsel %vm3794, %v3777, %v3779
      %v3822 = vsel %vm3794, %v3779, %v3781
      %v3823 = vsel %vm3794, %v3783, %v3785
      %v3824 = vsel %vm3794, %v3785, %v3787
      %v3825 = vsel %vm3794, %v3789, %v3791
      %v3826 = vsel %vm3794, %v3791, %v3793
      %v3859 = vsel %vm2713, %v3795, 0.0
      %v3860 = vsel %vm2714, %v3796, 0.0
      %v3861 = vsel %vm2713, %v3797, 0.0
      %v3862 = vsel %vm2714, %v3798, 0.0
      %v3863 = vsel %vm2713, %v3799, 0.0
      %v3864 = vsel %vm2714, %v3800, 0.0
      %v3865 = vsel %vm2713, %v3801, 0.0
      %v3866 = vsel %vm2714, %v3802, 0.0
      %v3867 = vsel %vm2713, %v3803, 0.0
      %v3868 = vsel %vm2714, %v3804, 0.0
      %v3869 = vsel %vm2713, %v3805, 0.0
      %v3870 = vsel %vm2714, %v3806, 0.0
      %v3871 = vsel %vm2713, %v3807, 0.0
      %v3872 = vsel %vm2714, %v3808, 0.0
      %v3873 = vsel %vm2713, %v3809, 0.0
      %v3874 = vsel %vm2714, %v3810, 0.0
      %v3875 = vsel %vm2713, %v3811, 0.0
      %v3876 = vsel %vm2714, %v3812, 0.0
      %v3877 = vsel %vm2713, %v3813, 0.0
      %v3878 = vsel %vm2714, %v3814, 0.0
      %v3879 = vsel %vm2713, %v3815, 0.0
      %v3880 = vsel %vm2714, %v3816, 0.0
      %v3881 = vsel %vm2713, %v3817, 0.0
      %v3882 = vsel %vm2714, %v3818, 0.0
      %v3883 = vsel %vm2713, %v3819, 0.0
      %v3884 = vsel %vm2714, %v3820, 0.0
      %v3885 = vsel %vm2713, %v3821, 0.0
      %v3886 = vsel %vm2714, %v3822, 0.0
      %v3887 = vsel %vm2713, %v3823, 0.0
      %v3888 = vsel %vm2714, %v3824, 0.0
      %v3889 = vsel %vm2713, %v3825, 0.0
      %v3890 = vsel %vm2714, %v3826, 0.0
      %3891 = vst [vmem:[#allocation4 + $0x300] sm:$0xff] %v3859
      %3892 = vst [vmem:[#allocation4 + $0x308] sm:$0xff] %v3860
      %3893 = vst [vmem:[#allocation4 + $0x310] sm:$0xff] %v3861
      %3894 = vst [vmem:[#allocation4 + $0x318] sm:$0xff] %v3862
      %3895 = vst [vmem:[#allocation4 + $0x320] sm:$0xff] %v3863
      %3896 = vst [vmem:[#allocation4 + $0x328] sm:$0xff] %v3864
      %3897 = vst [vmem:[#allocation4 + $0x330] sm:$0xff] %v3865
      %3898 = vst [vmem:[#allocation4 + $0x338] sm:$0xff] %v3866
      %3899 = vst [vmem:[#allocation4 + $0x340] sm:$0xff] %v3867
      %3900 = vst [vmem:[#allocation4 + $0x348] sm:$0xff] %v3868
      %3901 = vst [vmem:[#allocation4 + $0x350] sm:$0xff] %v3869
      %3902 = vst [vmem:[#allocation4 + $0x358] sm:$0xff] %v3870
      %3903 = vst [vmem:[#allocation4 + $0x360] sm:$0xff] %v3871
      %3904 = vst [vmem:[#allocation4 + $0x368] sm:$0xff] %v3872
      %3905 = vst [vmem:[#allocation4 + $0x370] sm:$0xff] %v3873
      %3906 = vst [vmem:[#allocation4 + $0x378] sm:$0xff] %v3874
      %3907 = vst [vmem:[#allocation4 + $0x380] sm:$0xff] %v3875
      %3908 = vst [vmem:[#allocation4 + $0x388] sm:$0xff] %v3876
      %3909 = vst [vmem:[#allocation4 + $0x390] sm:$0xff] %v3877
      %3910 = vst [vmem:[#allocation4 + $0x398] sm:$0xff] %v3878
      %3911 = vst [vmem:[#allocation4 + $0x3a0] sm:$0xff] %v3879
      %3912 = vst [vmem:[#allocation4 + $0x3a8] sm:$0xff] %v3880
      %3913 = vst [vmem:[#allocation4 + $0x3b0] sm:$0xff] %v3881
      %3914 = vst [vmem:[#allocation4 + $0x3b8] sm:$0xff] %v3882
      %3915 = vst [vmem:[#allocation4 + $0x3c0] sm:$0xff] %v3883
      %3916 = vst [vmem:[#allocation4 + $0x3c8] sm:$0xff] %v3884
      %3917 = vst [vmem:[#allocation4 + $0x3d0] sm:$0xff] %v3885
      %3918 = vst [vmem:[#allocation4 + $0x3d8] sm:$0xff] %v3886
      %3919 = vst [vmem:[#allocation4 + $0x3e0] sm:$0xff] %v3887
      %3920 = vst [vmem:[#allocation4 + $0x3e8] sm:$0xff] %v3888
      %3921 = vst [vmem:[#allocation4 + $0x3f0] sm:$0xff] %v3889
      %3922 = vst [vmem:[#allocation4 + $0x3f8] sm:$0xff] %v3890
      %v3923 = vld [vmem:[#allocation3 + $0x8] sm:$0xff]
      %v3924 = vld [vmem:[#allocation3 + $0x10] sm:$0xff]
      %v3925 = vld [vmem:[#allocation3 + $0x28] sm:$0xff]
      %v3926 = vld [vmem:[#allocation3 + $0x30] sm:$0xff]
      %v3927 = vld [vmem:[#allocation3 + $0x48] sm:$0xff]
      %v3928 = vld [vmem:[#allocation3 + $0x50] sm:$0xff]
      %v3929 = vld [vmem:[#allocation3 + $0x68] sm:$0xff]
      %v3930 = vld [vmem:[#allocation3 + $0x70] sm:$0xff]
      %v3931 = vld [vmem:[#allocation3 + $0x88] sm:$0xff]
      %v3932 = vld [vmem:[#allocation3 + $0x90] sm:$0xff]
      %v3933 = vld [vmem:[#allocation3 + $0xa8] sm:$0xff]
      %v3934 = vld [vmem:[#allocation3 + $0xb0] sm:$0xff]
      %v3935 = vld [vmem:[#allocation3 + $0xc8] sm:$0xff]
      %v3936 = vld [vmem:[#allocation3 + $0xd0] sm:$0xff]
      %v3937 = vld [vmem:[#allocation3 + $0xe8] sm:$0xff]
      %v3938 = vld [vmem:[#allocation3 + $0xf0] sm:$0xff]
      %v3939 = vld [vmem:[#allocation3 + $0x108] sm:$0xff]
      %v3940 = vld [vmem:[#allocation3 + $0x110] sm:$0xff]
      %v3941 = vld [vmem:[#allocation3 + $0x128] sm:$0xff]
      %v3942 = vld [vmem:[#allocation3 + $0x130] sm:$0xff]
      %v3943 = vld [vmem:[#allocation3 + $0x148] sm:$0xff]
      %v3944 = vld [vmem:[#allocation3 + $0x150] sm:$0xff]
      %v3945 = vld [vmem:[#allocation3 + $0x168] sm:$0xff]
      %v3946 = vld [vmem:[#allocation3 + $0x170] sm:$0xff]
      %v3947 = vld [vmem:[#allocation3 + $0x188] sm:$0xff]
      %v3948 = vld [vmem:[#allocation3 + $0x190] sm:$0xff]
      %v3949 = vld [vmem:[#allocation3 + $0x1a8] sm:$0xff]
      %v3950 = vld [vmem:[#allocation3 + $0x1b0] sm:$0xff]
      %v3951 = vld [vmem:[#allocation3 + $0x1c8] sm:$0xff]
      %v3952 = vld [vmem:[#allocation3 + $0x1d0] sm:$0xff]
      %v3953 = vld [vmem:[#allocation3 + $0x1e8] sm:$0xff]
      %v3954 = vld [vmem:[#allocation3 + $0x1f0] sm:$0xff]
      %3955 = vst [vmem:[#allocation4 + $0x400] sm:$0xff] %v3923
      %3956 = vst [vmem:[#allocation4 + $0x408] sm:$0xff] %v3924
      %3957 = vst [vmem:[#allocation4 + $0x410] sm:$0xff] %v3925
      %3958 = vst [vmem:[#allocation4 + $0x418] sm:$0xff] %v3926
      %3959 = vst [vmem:[#allocation4 + $0x420] sm:$0xff] %v3927
      %3960 = vst [vmem:[#allocation4 + $0x428] sm:$0xff] %v3928
      %3961 = vst [vmem:[#allocation4 + $0x430] sm:$0xff] %v3929
      %3962 = vst [vmem:[#allocation4 + $0x438] sm:$0xff] %v3930
      %3963 = vst [vmem:[#allocation4 + $0x440] sm:$0xff] %v3931
      %3964 = vst [vmem:[#allocation4 + $0x448] sm:$0xff] %v3932
      %3965 = vst [vmem:[#allocation4 + $0x450] sm:$0xff] %v3933
      %3966 = vst [vmem:[#allocation4 + $0x458] sm:$0xff] %v3934
      %3967 = vst [vmem:[#allocation4 + $0x460] sm:$0xff] %v3935
      %3968 = vst [vmem:[#allocation4 + $0x468] sm:$0xff] %v3936
      %3969 = vst [vmem:[#allocation4 + $0x470] sm:$0xff] %v3937
      %3970 = vst [vmem:[#allocation4 + $0x478] sm:$0xff] %v3938
      %3971 = vst [vmem:[#allocation4 + $0x480] sm:$0xff] %v3939
      %3972 = vst [vmem:[#allocation4 + $0x488] sm:$0xff] %v3940
      %3973 = vst [vmem:[#allocation4 + $0x490] sm:$0xff] %v3941
      %3974 = vst [vmem:[#allocation4 + $0x498] sm:$0xff] %v3942
      %3975 = vst [vmem:[#allocation4 + $0x4a0] sm:$0xff] %v3943
      %3976 = vst [vmem:[#allocation4 + $0x4a8] sm:$0xff] %v3944
      %3977 = vst [vmem:[#allocation4 + $0x4b0] sm:$0xff] %v3945
      %3978 = vst [vmem:[#allocation4 + $0x4b8] sm:$0xff] %v3946
      %3979 = vst [vmem:[#allocation4 + $0x4c0] sm:$0xff] %v3947
      %3980 = vst [vmem:[#allocation4 + $0x4c8] sm:$0xff] %v3948
      %3981 = vst [vmem:[#allocation4 + $0x4d0] sm:$0xff] %v3949
      %3982 = vst [vmem:[#allocation4 + $0x4d8] sm:$0xff] %v3950
      %3983 = vst [vmem:[#allocation4 + $0x4e0] sm:$0xff] %v3951
      %3984 = vst [vmem:[#allocation4 + $0x4e8] sm:$0xff] %v3952
      %3985 = vst [vmem:[#allocation4 + $0x4f0] sm:$0xff] %v3953
      %3986 = vst [vmem:[#allocation4 + $0x4f8] sm:$0xff] %v3954
      %v3987 = vld [vmem:[#allocation3 + $0x8] sm:$0xff]
      %v3988 = vld [vmem:[#allocation3 + $0x10] sm:$0xff]
      %v3989 = vld [vmem:[#allocation3 + $0x18] sm:$0xff]
      %v3990 = vld [vmem:[#allocation3 + $0x28] sm:$0xff]
      %v3991 = vld [vmem:[#allocation3 + $0x30] sm:$0xff]
      %v3992 = vld [vmem:[#allocation3 + $0x38] sm:$0xff]
      %v3993 = vld [vmem:[#allocation3 + $0x48] sm:$0xff]
      %v3994 = vld [vmem:[#allocation3 + $0x50] sm:$0xff]
      %v3995 = vld [vmem:[#allocation3 + $0x58] sm:$0xff]
      %v3996 = vld [vmem:[#allocation3 + $0x68] sm:$0xff]
      %v3997 = vld [vmem:[#allocation3 + $0x70] sm:$0xff]
      %v3998 = vld [vmem:[#allocation3 + $0x78] sm:$0xff]
      %v3999 = vld [vmem:[#allocation3 + $0x88] sm:$0xff]
      %v4000 = vld [vmem:[#allocation3 + $0x90] sm:$0xff]
      %v4001 = vld [vmem:[#allocation3 + $0x98] sm:$0xff]
      %v4002 = vld [vmem:[#allocation3 + $0xa8] sm:$0xff]
      %v4003 = vld [vmem:[#allocation3 + $0xb0] sm:$0xff]
      %v4004 = vld [vmem:[#allocation3 + $0xb8] sm:$0xff]
      %v4005 = vld [vmem:[#allocation3 + $0xc8] sm:$0xff]
      %v4006 = vld [vmem:[#allocation3 + $0xd0] sm:$0xff]
      %v4007 = vld [vmem:[#allocation3 + $0xd8] sm:$0xff]
      %v4008 = vld [vmem:[#allocation3 + $0xe8] sm:$0xff]
      %v4009 = vld [vmem:[#allocation3 + $0xf0] sm:$0xff]
      %v4010 = vld [vmem:[#allocation3 + $0xf8] sm:$0xff]
      %v4011 = vld [vmem:[#allocation3 + $0x108] sm:$0xff]
      %v4012 = vld [vmem:[#allocation3 + $0x110] sm:$0xff]
      %v4013 = vld [vmem:[#allocation3 + $0x118] sm:$0xff]
      %v4014 = vld [vmem:[#allocation3 + $0x128] sm:$0xff]
      %v4015 = vld [vmem:[#allocation3 + $0x130] sm:$0xff]
      %v4016 = vld [vmem:[#allocation3 + $0x138] sm:$0xff]
      %v4017 = vld [vmem:[#allocation3 + $0x148] sm:$0xff]
      %v4018 = vld [vmem:[#allocation3 + $0x150] sm:$0xff]
      %v4019 = vld [vmem:[#allocation3 + $0x158] sm:$0xff]
      %v4020 = vld [vmem:[#allocation3 + $0x168] sm:$0xff]
      %v4021 = vld [vmem:[#allocation3 + $0x170] sm:$0xff]
      %v4022 = vld [vmem:[#allocation3 + $0x178] sm:$0xff]
      %v4023 = vld [vmem:[#allocation3 + $0x188] sm:$0xff]
      %v4024 = vld [vmem:[#allocation3 + $0x190] sm:$0xff]
      %v4025 = vld [vmem:[#allocation3 + $0x198] sm:$0xff]
      %v4026 = vld [vmem:[#allocation3 + $0x1a8] sm:$0xff]
      %v4027 = vld [vmem:[#allocation3 + $0x1b0] sm:$0xff]
      %v4028 = vld [vmem:[#allocation3 + $0x1b8] sm:$0xff]
      %v4029 = vld [vmem:[#allocation3 + $0x1c8] sm:$0xff]
      %v4030 = vld [vmem:[#allocation3 + $0x1d0] sm:$0xff]
      %v4031 = vld [vmem:[#allocation3 + $0x1d8] sm:$0xff]
      %v4032 = vld [vmem:[#allocation3 + $0x1e8] sm:$0xff]
      %v4033 = vld [vmem:[#allocation3 + $0x1f0] sm:$0xff]
      %v4034 = vld [vmem:[#allocation3 + $0x1f8] sm:$0xff]
      %4083 = vrot.lane.b32.xlu0 %v3987, 127
      %v4084 = vpop.permute.xlu0 %4083
      %4085 = vrot.lane.b32.xlu0 %v3988, 127
      %v4086 = vpop.permute.xlu0 %4085
      %4087 = vrot.lane.b32.xlu0 %v3989, 127
      %v4088 = vpop.permute.xlu0 %4087
      %4089 = vrot.lane.b32.xlu0 %v3990, 127
      %v4090 = vpop.permute.xlu0 %4089
      %4091 = vrot.lane.b32.xlu0 %v3991, 127
      %v4092 = vpop.permute.xlu0 %4091
      %4093 = vrot.lane.b32.xlu0 %v3992, 127
      %v4094 = vpop.permute.xlu0 %4093
      %4095 = vrot.lane.b32.xlu0 %v3993, 127
      %v4096 = vpop.permute.xlu0 %4095
      %4097 = vrot.lane.b32.xlu0 %v3994, 127
      %v4098 = vpop.permute.xlu0 %4097
      %4099 = vrot.lane.b32.xlu0 %v3995, 127
      %v4100 = vpop.permute.xlu0 %4099
      %4101 = vrot.lane.b32.xlu0 %v3996, 127
      %v4102 = vpop.permute.xlu0 %4101
      %4103 = vrot.lane.b32.xlu0 %v3997, 127
      %v4104 = vpop.permute.xlu0 %4103
      %4105 = vrot.lane.b32.xlu0 %v3998, 127
      %v4106 = vpop.permute.xlu0 %4105
      %4107 = vrot.lane.b32.xlu0 %v3999, 127
      %v4108 = vpop.permute.xlu0 %4107
      %4109 = vrot.lane.b32.xlu0 %v4000, 127
      %v4110 = vpop.permute.xlu0 %4109
      %4111 = vrot.lane.b32.xlu0 %v4001, 127
      %v4112 = vpop.permute.xlu0 %4111
      %4113 = vrot.lane.b32.xlu0 %v4002, 127
      %v4114 = vpop.permute.xlu0 %4113
      %4115 = vrot.lane.b32.xlu0 %v4003, 127
      %v4116 = vpop.permute.xlu0 %4115
      %4117 = vrot.lane.b32.xlu0 %v4004, 127
      %v4118 = vpop.permute.xlu0 %4117
      %4119 = vrot.lane.b32.xlu0 %v4005, 127
      %v4120 = vpop.permute.xlu0 %4119
      %4121 = vrot.lane.b32.xlu0 %v4006, 127
      %v4122 = vpop.permute.xlu0 %4121
      %4123 = vrot.lane.b32.xlu0 %v4007, 127
      %v4124 = vpop.permute.xlu0 %4123
      %4125 = vrot.lane.b32.xlu0 %v4008, 127
      %v4126 = vpop.permute.xlu0 %4125
      %4127 = vrot.lane.b32.xlu0 %v4009, 127
      %v4128 = vpop.permute.xlu0 %4127
      %4129 = vrot.lane.b32.xlu0 %v4010, 127
      %v4130 = vpop.permute.xlu0 %4129
      %4131 = vrot.lane.b32.xlu0 %v4011, 127
      %v4132 = vpop.permute.xlu0 %4131
      %4133 = vrot.lane.b32.xlu0 %v4012, 127
      %v4134 = vpop.permute.xlu0 %4133
      %4135 = vrot.lane.b32.xlu0 %v4013, 127
      %v4136 = vpop.permute.xlu0 %4135
      %4137 = vrot.lane.b32.xlu0 %v4014, 127
      %v4138 = vpop.permute.xlu0 %4137
      %4139 = vrot.lane.b32.xlu0 %v4015, 127
      %v4140 = vpop.permute.xlu0 %4139
      %4141 = vrot.lane.b32.xlu0 %v4016, 127
      %v4142 = vpop.permute.xlu0 %4141
      %4143 = vrot.lane.b32.xlu0 %v4017, 127
      %v4144 = vpop.permute.xlu0 %4143
      %4145 = vrot.lane.b32.xlu0 %v4018, 127
      %v4146 = vpop.permute.xlu0 %4145
      %4147 = vrot.lane.b32.xlu0 %v4019, 127
      %v4148 = vpop.permute.xlu0 %4147
      %4149 = vrot.lane.b32.xlu0 %v4020, 127
      %v4150 = vpop.permute.xlu0 %4149
      %4151 = vrot.lane.b32.xlu0 %v4021, 127
      %v4152 = vpop.permute.xlu0 %4151
      %4153 = vrot.lane.b32.xlu0 %v4022, 127
      %v4154 = vpop.permute.xlu0 %4153
      %4155 = vrot.lane.b32.xlu0 %v4023, 127
      %v4156 = vpop.permute.xlu0 %4155
      %4157 = vrot.lane.b32.xlu0 %v4024, 127
      %v4158 = vpop.permute.xlu0 %4157
      %4159 = vrot.lane.b32.xlu0 %v4025, 127
      %v4160 = vpop.permute.xlu0 %4159
      %4161 = vrot.lane.b32.xlu0 %v4026, 127
      %v4162 = vpop.permute.xlu0 %4161
      %4163 = vrot.lane.b32.xlu0 %v4027, 127
      %v4164 = vpop.permute.xlu0 %4163
      %4165 = vrot.lane.b32.xlu0 %v4028, 127
      %v4166 = vpop.permute.xlu0 %4165
      %4167 = vrot.lane.b32.xlu0 %v4029, 127
      %v4168 = vpop.permute.xlu0 %4167
      %4169 = vrot.lane.b32.xlu0 %v4030, 127
      %v4170 = vpop.permute.xlu0 %4169
      %4171 = vrot.lane.b32.xlu0 %v4031, 127
      %v4172 = vpop.permute.xlu0 %4171
      %4173 = vrot.lane.b32.xlu0 %v4032, 127
      %v4174 = vpop.permute.xlu0 %4173
      %4175 = vrot.lane.b32.xlu0 %v4033, 127
      %v4176 = vpop.permute.xlu0 %4175
      %4177 = vrot.lane.b32.xlu0 %v4034, 127
      %v4178 = vpop.permute.xlu0 %4177
      %vm4179 = vcmask 1039360
      %v4180 = vsel %vm4179, %v4084, %v4086
      %v4181 = vsel %vm4179, %v4086, %v4088
      %v4182 = vsel %vm4179, %v4090, %v4092
      %v4183 = vsel %vm4179, %v4092, %v4094
      %v4184 = vsel %vm4179, %v4096, %v4098
      %v4185 = vsel %vm4179, %v4098, %v4100
      %v4186 = vsel %vm4179, %v4102, %v4104
      %v4187 = vsel %vm4179, %v4104, %v4106
      %v4188 = vsel %vm4179, %v4108, %v4110
      %v4189 = vsel %vm4179, %v4110, %v4112
      %v4190 = vsel %vm4179, %v4114, %v4116
      %v4191 = vsel %vm4179, %v4116, %v4118
      %v4192 = vsel %vm4179, %v4120, %v4122
      %v4193 = vsel %vm4179, %v4122, %v4124
      %v4194 = vsel %vm4179, %v4126, %v4128
      %v4195 = vsel %vm4179, %v4128, %v4130
      %v4196 = vsel %vm4179, %v4132, %v4134
      %v4197 = vsel %vm4179, %v4134, %v4136
      %v4198 = vsel %vm4179, %v4138, %v4140
      %v4199 = vsel %vm4179, %v4140, %v4142
      %v4200 = vsel %vm4179, %v4144, %v4146
      %v4201 = vsel %vm4179, %v4146, %v4148
      %v4202 = vsel %vm4179, %v4150, %v4152
      %v4203 = vsel %vm4179, %v4152, %v4154
      %v4204 = vsel %vm4179, %v4156, %v4158
      %v4205 = vsel %vm4179, %v4158, %v4160
      %v4206 = vsel %vm4179, %v4162, %v4164
      %v4207 = vsel %vm4179, %v4164, %v4166
      %v4208 = vsel %vm4179, %v4168, %v4170
      %v4209 = vsel %vm4179, %v4170, %v4172
      %v4210 = vsel %vm4179, %v4174, %v4176
      %v4211 = vsel %vm4179, %v4176, %v4178
      %v4244 = vsel %vm3327, %v4180, 0.0
      %v4245 = vsel %vm3328, %v4181, 0.0
      %v4246 = vsel %vm3327, %v4182, 0.0
      %v4247 = vsel %vm3328, %v4183, 0.0
      %v4248 = vsel %vm3327, %v4184, 0.0
      %v4249 = vsel %vm3328, %v4185, 0.0
      %v4250 = vsel %vm3327, %v4186, 0.0
      %v4251 = vsel %vm3328, %v4187, 0.0
      %v4252 = vsel %vm3327, %v4188, 0.0
      %v4253 = vsel %vm3328, %v4189, 0.0
      %v4254 = vsel %vm3327, %v4190, 0.0
      %v4255 = vsel %vm3328, %v4191, 0.0
      %v4256 = vsel %vm3327, %v4192, 0.0
      %v4257 = vsel %vm3328, %v4193, 0.0
      %v4258 = vsel %vm3327, %v4194, 0.0
      %v4259 = vsel %vm3328, %v4195, 0.0
      %v4260 = vsel %vm3327, %v4196, 0.0
      %v4261 = vsel %vm3328, %v4197, 0.0
      %v4262 = vsel %vm3327, %v4198, 0.0
      %v4263 = vsel %vm3328, %v4199, 0.0
      %v4264 = vsel %vm3327, %v4200, 0.0
      %v4265 = vsel %vm3328, %v4201, 0.0
      %v4266 = vsel %vm3327, %v4202, 0.0
      %v4267 = vsel %vm3328, %v4203, 0.0
      %v4268 = vsel %vm3327, %v4204, 0.0
      %v4269 = vsel %vm3328, %v4205, 0.0
      %v4270 = vsel %vm3327, %v4206, 0.0
      %v4271 = vsel %vm3328, %v4207, 0.0
      %v4272 = vsel %vm3327, %v4208, 0.0
      %v4273 = vsel %vm3328, %v4209, 0.0
      %v4274 = vsel %vm3327, %v4210, 0.0
      %v4275 = vsel %vm3328, %v4211, 0.0
      %4276 = vst [vmem:[#allocation4 + $0x500] sm:$0xff] %v4244
      %4277 = vst [vmem:[#allocation4 + $0x508] sm:$0xff] %v4245
      %4278 = vst [vmem:[#allocation4 + $0x510] sm:$0xff] %v4246
      %4279 = vst [vmem:[#allocation4 + $0x518] sm:$0xff] %v4247
      %4280 = vst [vmem:[#allocation4 + $0x520] sm:$0xff] %v4248
      %4281 = vst [vmem:[#allocation4 + $0x528] sm:$0xff] %v4249
      %4282 = vst [vmem:[#allocation4 + $0x530] sm:$0xff] %v4250
      %4283 = vst [vmem:[#allocation4 + $0x538] sm:$0xff] %v4251
      %4284 = vst [vmem:[#allocation4 + $0x540] sm:$0xff] %v4252
      %4285 = vst [vmem:[#allocation4 + $0x548] sm:$0xff] %v4253
      %4286 = vst [vmem:[#allocation4 + $0x550] sm:$0xff] %v4254
      %4287 = vst [vmem:[#allocation4 + $0x558] sm:$0xff] %v4255
      %4288 = vst [vmem:[#allocation4 + $0x560] sm:$0xff] %v4256
      %4289 = vst [vmem:[#allocation4 + $0x568] sm:$0xff] %v4257
      %4290 = vst [vmem:[#allocation4 + $0x570] sm:$0xff] %v4258
      %4291 = vst [vmem:[#allocation4 + $0x578] sm:$0xff] %v4259
      %4292 = vst [vmem:[#allocation4 + $0x580] sm:$0xff] %v4260
      %4293 = vst [vmem:[#allocation4 + $0x588] sm:$0xff] %v4261
      %4294 = vst [vmem:[#allocation4 + $0x590] sm:$0xff] %v4262
      %4295 = vst [vmem:[#allocation4 + $0x598] sm:$0xff] %v4263
      %4296 = vst [vmem:[#allocation4 + $0x5a0] sm:$0xff] %v4264
      %4297 = vst [vmem:[#allocation4 + $0x5a8] sm:$0xff] %v4265
      %4298 = vst [vmem:[#allocation4 + $0x5b0] sm:$0xff] %v4266
      %4299 = vst [vmem:[#allocation4 + $0x5b8] sm:$0xff] %v4267
      %4300 = vst [vmem:[#allocation4 + $0x5c0] sm:$0xff] %v4268
      %4301 = vst [vmem:[#allocation4 + $0x5c8] sm:$0xff] %v4269
      %4302 = vst [vmem:[#allocation4 + $0x5d0] sm:$0xff] %v4270
      %4303 = vst [vmem:[#allocation4 + $0x5d8] sm:$0xff] %v4271
      %4304 = vst [vmem:[#allocation4 + $0x5e0] sm:$0xff] %v4272
      %4305 = vst [vmem:[#allocation4 + $0x5e8] sm:$0xff] %v4273
      %4306 = vst [vmem:[#allocation4 + $0x5f0] sm:$0xff] %v4274
      %4307 = vst [vmem:[#allocation4 + $0x5f8] sm:$0xff] %v4275
      %v4308 = vld [vmem:[#allocation3 + $0x8] sm:$0xff]
      %v4309 = vld [vmem:[#allocation3 + $0x10] sm:$0xff]
      %v4310 = vld [vmem:[#allocation3 + $0x18] sm:$0xff]
      %v4311 = vld [vmem:[#allocation3 + $0x28] sm:$0xff]
      %v4312 = vld [vmem:[#allocation3 + $0x30] sm:$0xff]
      %v4313 = vld [vmem:[#allocation3 + $0x38] sm:$0xff]
      %v4314 = vld [vmem:[#allocation3 + $0x48] sm:$0xff]
      %v4315 = vld [vmem:[#allocation3 + $0x50] sm:$0xff]
      %v4316 = vld [vmem:[#allocation3 + $0x58] sm:$0xff]
      %v4317 = vld [vmem:[#allocation3 + $0x68] sm:$0xff]
      %v4318 = vld [vmem:[#allocation3 + $0x70] sm:$0xff]
      %v4319 = vld [vmem:[#allocation3 + $0x78] sm:$0xff]
      %v4320 = vld [vmem:[#allocation3 + $0x88] sm:$0xff]
      %v4321 = vld [vmem:[#allocation3 + $0x90] sm:$0xff]
      %v4322 = vld [vmem:[#allocation3 + $0x98] sm:$0xff]
      %v4323 = vld [vmem:[#allocation3 + $0xa8] sm:$0xff]
      %v4324 = vld [vmem:[#allocation3 + $0xb0] sm:$0xff]
      %v4325 = vld [vmem:[#allocation3 + $0xb8] sm:$0xff]
      %v4326 = vld [vmem:[#allocation3 + $0xc8] sm:$0xff]
      %v4327 = vld [vmem:[#allocation3 + $0xd0] sm:$0xff]
      %v4328 = vld [vmem:[#allocation3 + $0xd8] sm:$0xff]
      %v4329 = vld [vmem:[#allocation3 + $0xe8] sm:$0xff]
      %v4330 = vld [vmem:[#allocation3 + $0xf0] sm:$0xff]
      %v4331 = vld [vmem:[#allocation3 + $0xf8] sm:$0xff]
      %v4332 = vld [vmem:[#allocation3 + $0x108] sm:$0xff]
      %v4333 = vld [vmem:[#allocation3 + $0x110] sm:$0xff]
      %v4334 = vld [vmem:[#allocation3 + $0x118] sm:$0xff]
      %v4335 = vld [vmem:[#allocation3 + $0x128] sm:$0xff]
      %v4336 = vld [vmem:[#allocation3 + $0x130] sm:$0xff]
      %v4337 = vld [vmem:[#allocation3 + $0x138] sm:$0xff]
      %v4338 = vld [vmem:[#allocation3 + $0x148] sm:$0xff]
      %v4339 = vld [vmem:[#allocation3 + $0x150] sm:$0xff]
      %v4340 = vld [vmem:[#allocation3 + $0x158] sm:$0xff]
      %v4341 = vld [vmem:[#allocation3 + $0x168] sm:$0xff]
      %v4342 = vld [vmem:[#allocation3 + $0x170] sm:$0xff]
      %v4343 = vld [vmem:[#allocation3 + $0x178] sm:$0xff]
      %v4344 = vld [vmem:[#allocation3 + $0x188] sm:$0xff]
      %v4345 = vld [vmem:[#allocation3 + $0x190] sm:$0xff]
      %v4346 = vld [vmem:[#allocation3 + $0x198] sm:$0xff]
      %v4347 = vld [vmem:[#allocation3 + $0x1a8] sm:$0xff]
      %v4348 = vld [vmem:[#allocation3 + $0x1b0] sm:$0xff]
      %v4349 = vld [vmem:[#allocation3 + $0x1b8] sm:$0xff]
      %v4350 = vld [vmem:[#allocation3 + $0x1c8] sm:$0xff]
      %v4351 = vld [vmem:[#allocation3 + $0x1d0] sm:$0xff]
      %v4352 = vld [vmem:[#allocation3 + $0x1d8] sm:$0xff]
      %v4353 = vld [vmem:[#allocation3 + $0x1e8] sm:$0xff]
      %v4354 = vld [vmem:[#allocation3 + $0x1f0] sm:$0xff]
      %v4355 = vld [vmem:[#allocation3 + $0x1f8] sm:$0xff]
      %4404 = vrot.lane.b32.xlu0 %v4308, 113
      %v4405 = vpop.permute.xlu0 %4404
      %4406 = vrot.lane.b32.xlu0 %v4309, 113
      %v4407 = vpop.permute.xlu0 %4406
      %4408 = vrot.lane.b32.xlu0 %v4310, 113
      %v4409 = vpop.permute.xlu0 %4408
      %4410 = vrot.lane.b32.xlu0 %v4311, 113
      %v4411 = vpop.permute.xlu0 %4410
      %4412 = vrot.lane.b32.xlu0 %v4312, 113
      %v4413 = vpop.permute.xlu0 %4412
      %4414 = vrot.lane.b32.xlu0 %v4313, 113
      %v4415 = vpop.permute.xlu0 %4414
      %4416 = vrot.lane.b32.xlu0 %v4314, 113
      %v4417 = vpop.permute.xlu0 %4416
      %4418 = vrot.lane.b32.xlu0 %v4315, 113
      %v4419 = vpop.permute.xlu0 %4418
      %4420 = vrot.lane.b32.xlu0 %v4316, 113
      %v4421 = vpop.permute.xlu0 %4420
      %4422 = vrot.lane.b32.xlu0 %v4317, 113
      %v4423 = vpop.permute.xlu0 %4422
      %4424 = vrot.lane.b32.xlu0 %v4318, 113
      %v4425 = vpop.permute.xlu0 %4424
      %4426 = vrot.lane.b32.xlu0 %v4319, 113
      %v4427 = vpop.permute.xlu0 %4426
      %4428 = vrot.lane.b32.xlu0 %v4320, 113
      %v4429 = vpop.permute.xlu0 %4428
      %4430 = vrot.lane.b32.xlu0 %v4321, 113
      %v4431 = vpop.permute.xlu0 %4430
      %4432 = vrot.lane.b32.xlu0 %v4322, 113
      %v4433 = vpop.permute.xlu0 %4432
      %4434 = vrot.lane.b32.xlu0 %v4323, 113
      %v4435 = vpop.permute.xlu0 %4434
      %4436 = vrot.lane.b32.xlu0 %v4324, 113
      %v4437 = vpop.permute.xlu0 %4436
      %4438 = vrot.lane.b32.xlu0 %v4325, 113
      %v4439 = vpop.permute.xlu0 %4438
      %4440 = vrot.lane.b32.xlu0 %v4326, 113
      %v4441 = vpop.permute.xlu0 %4440
      %4442 = vrot.lane.b32.xlu0 %v4327, 113
      %v4443 = vpop.permute.xlu0 %4442
      %4444 = vrot.lane.b32.xlu0 %v4328, 113
      %v4445 = vpop.permute.xlu0 %4444
      %4446 = vrot.lane.b32.xlu0 %v4329, 113
      %v4447 = vpop.permute.xlu0 %4446
      %4448 = vrot.lane.b32.xlu0 %v4330, 113
      %v4449 = vpop.permute.xlu0 %4448
      %4450 = vrot.lane.b32.xlu0 %v4331, 113
      %v4451 = vpop.permute.xlu0 %4450
      %4452 = vrot.lane.b32.xlu0 %v4332, 113
      %v4453 = vpop.permute.xlu0 %4452
      %4454 = vrot.lane.b32.xlu0 %v4333, 113
      %v4455 = vpop.permute.xlu0 %4454
      %4456 = vrot.lane.b32.xlu0 %v4334, 113
      %v4457 = vpop.permute.xlu0 %4456
      %4458 = vrot.lane.b32.xlu0 %v4335, 113
      %v4459 = vpop.permute.xlu0 %4458
      %4460 = vrot.lane.b32.xlu0 %v4336, 113
      %v4461 = vpop.permute.xlu0 %4460
      %4462 = vrot.lane.b32.xlu0 %v4337, 113
      %v4463 = vpop.permute.xlu0 %4462
      %4464 = vrot.lane.b32.xlu0 %v4338, 113
      %v4465 = vpop.permute.xlu0 %4464
      %4466 = vrot.lane.b32.xlu0 %v4339, 113
      %v4467 = vpop.permute.xlu0 %4466
      %4468 = vrot.lane.b32.xlu0 %v4340, 113
      %v4469 = vpop.permute.xlu0 %4468
      %4470 = vrot.lane.b32.xlu0 %v4341, 113
      %v4471 = vpop.permute.xlu0 %4470
      %4472 = vrot.lane.b32.xlu0 %v4342, 113
      %v4473 = vpop.permute.xlu0 %4472
      %4474 = vrot.lane.b32.xlu0 %v4343, 113
      %v4475 = vpop.permute.xlu0 %4474
      %4476 = vrot.lane.b32.xlu0 %v4344, 113
      %v4477 = vpop.permute.xlu0 %4476
      %4478 = vrot.lane.b32.xlu0 %v4345, 113
      %v4479 = vpop.permute.xlu0 %4478
      %4480 = vrot.lane.b32.xlu0 %v4346, 113
      %v4481 = vpop.permute.xlu0 %4480
      %4482 = vrot.lane.b32.xlu0 %v4347, 113
      %v4483 = vpop.permute.xlu0 %4482
      %4484 = vrot.lane.b32.xlu0 %v4348, 113
      %v4485 = vpop.permute.xlu0 %4484
      %4486 = vrot.lane.b32.xlu0 %v4349, 113
      %v4487 = vpop.permute.xlu0 %4486
      %4488 = vrot.lane.b32.xlu0 %v4350, 113
      %v4489 = vpop.permute.xlu0 %4488
      %4490 = vrot.lane.b32.xlu0 %v4351, 113
      %v4491 = vpop.permute.xlu0 %4490
      %4492 = vrot.lane.b32.xlu0 %v4352, 113
      %v4493 = vpop.permute.xlu0 %4492
      %4494 = vrot.lane.b32.xlu0 %v4353, 113
      %v4495 = vpop.permute.xlu0 %4494
      %4496 = vrot.lane.b32.xlu0 %v4354, 113
      %v4497 = vpop.permute.xlu0 %4496
      %4498 = vrot.lane.b32.xlu0 %v4355, 113
      %v4499 = vpop.permute.xlu0 %4498
      %vm4500 = vcmask 924672
      %v4501 = vsel %vm4500, %v4405, %v4407
      %v4502 = vsel %vm4500, %v4407, %v4409
      %v4503 = vsel %vm4500, %v4411, %v4413
      %v4504 = vsel %vm4500, %v4413, %v4415
      %v4505 = vsel %vm4500, %v4417, %v4419
      %v4506 = vsel %vm4500, %v4419, %v4421
      %v4507 = vsel %vm4500, %v4423, %v4425
      %v4508 = vsel %vm4500, %v4425, %v4427
      %v4509 = vsel %vm4500, %v4429, %v4431
      %v4510 = vsel %vm4500, %v4431, %v4433
      %v4511 = vsel %vm4500, %v4435, %v4437
      %v4512 = vsel %vm4500, %v4437, %v4439
      %v4513 = vsel %vm4500, %v4441, %v4443
      %v4514 = vsel %vm4500, %v4443, %v4445
      %v4515 = vsel %vm4500, %v4447, %v4449
      %v4516 = vsel %vm4500, %v4449, %v4451
      %v4517 = vsel %vm4500, %v4453, %v4455
      %v4518 = vsel %vm4500, %v4455, %v4457
      %v4519 = vsel %vm4500, %v4459, %v4461
      %v4520 = vsel %vm4500, %v4461, %v4463
      %v4521 = vsel %vm4500, %v4465, %v4467
      %v4522 = vsel %vm4500, %v4467, %v4469
      %v4523 = vsel %vm4500, %v4471, %v4473
      %v4524 = vsel %vm4500, %v4473, %v4475
      %v4525 = vsel %vm4500, %v4477, %v4479
      %v4526 = vsel %vm4500, %v4479, %v4481
      %v4527 = vsel %vm4500, %v4483, %v4485
      %v4528 = vsel %vm4500, %v4485, %v4487
      %v4529 = vsel %vm4500, %v4489, %v4491
      %v4530 = vsel %vm4500, %v4491, %v4493
      %v4531 = vsel %vm4500, %v4495, %v4497
      %v4532 = vsel %vm4500, %v4497, %v4499
      %v4565 = vsel %vm2713, %v4501, 0.0
      %v4566 = vsel %vm2714, %v4502, 0.0
      %v4567 = vsel %vm2713, %v4503, 0.0
      %v4568 = vsel %vm2714, %v4504, 0.0
      %v4569 = vsel %vm2713, %v4505, 0.0
      %v4570 = vsel %vm2714, %v4506, 0.0
      %v4571 = vsel %vm2713, %v4507, 0.0
      %v4572 = vsel %vm2714, %v4508, 0.0
      %v4573 = vsel %vm2713, %v4509, 0.0
      %v4574 = vsel %vm2714, %v4510, 0.0
      %v4575 = vsel %vm2713, %v4511, 0.0
      %v4576 = vsel %vm2714, %v4512, 0.0
      %v4577 = vsel %vm2713, %v4513, 0.0
      %v4578 = vsel %vm2714, %v4514, 0.0
      %v4579 = vsel %vm2713, %v4515, 0.0
      %v4580 = vsel %vm2714, %v4516, 0.0
      %v4581 = vsel %vm2713, %v4517, 0.0
      %v4582 = vsel %vm2714, %v4518, 0.0
      %v4583 = vsel %vm2713, %v4519, 0.0
      %v4584 = vsel %vm2714, %v4520, 0.0
      %v4585 = vsel %vm2713, %v4521, 0.0
      %v4586 = vsel %vm2714, %v4522, 0.0
      %v4587 = vsel %vm2713, %v4523, 0.0
      %v4588 = vsel %vm2714, %v4524, 0.0
      %v4589 = vsel %vm2713, %v4525, 0.0
      %v4590 = vsel %vm2714, %v4526, 0.0
      %v4591 = vsel %vm2713, %v4527, 0.0
      %v4592 = vsel %vm2714, %v4528, 0.0
      %v4593 = vsel %vm2713, %v4529, 0.0
      %v4594 = vsel %vm2714, %v4530, 0.0
      %v4595 = vsel %vm2713, %v4531, 0.0
      %v4596 = vsel %vm2714, %v4532, 0.0
      %4597 = vst [vmem:[#allocation4 + $0x600] sm:$0xff] %v4565
      %4598 = vst [vmem:[#allocation4 + $0x608] sm:$0xff] %v4566
      %4599 = vst [vmem:[#allocation4 + $0x610] sm:$0xff] %v4567
      %4600 = vst [vmem:[#allocation4 + $0x618] sm:$0xff] %v4568
      %4601 = vst [vmem:[#allocation4 + $0x620] sm:$0xff] %v4569
      %4602 = vst [vmem:[#allocation4 + $0x628] sm:$0xff] %v4570
      %4603 = vst [vmem:[#allocation4 + $0x630] sm:$0xff] %v4571
      %4604 = vst [vmem:[#allocation4 + $0x638] sm:$0xff] %v4572
      %4605 = vst [vmem:[#allocation4 + $0x640] sm:$0xff] %v4573
      %4606 = vst [vmem:[#allocation4 + $0x648] sm:$0xff] %v4574
      %4607 = vst [vmem:[#allocation4 + $0x650] sm:$0xff] %v4575
      %4608 = vst [vmem:[#allocation4 + $0x658] sm:$0xff] %v4576
      %4609 = vst [vmem:[#allocation4 + $0x660] sm:$0xff] %v4577
      %4610 = vst [vmem:[#allocation4 + $0x668] sm:$0xff] %v4578
      %4611 = vst [vmem:[#allocation4 + $0x670] sm:$0xff] %v4579
      %4612 = vst [vmem:[#allocation4 + $0x678] sm:$0xff] %v4580
      %4613 = vst [vmem:[#allocation4 + $0x680] sm:$0xff] %v4581
      %4614 = vst [vmem:[#allocation4 + $0x688] sm:$0xff] %v4582
      %4615 = vst [vmem:[#allocation4 + $0x690] sm:$0xff] %v4583
      %4616 = vst [vmem:[#allocation4 + $0x698] sm:$0xff] %v4584
      %4617 = vst [vmem:[#allocation4 + $0x6a0] sm:$0xff] %v4585
      %4618 = vst [vmem:[#allocation4 + $0x6a8] sm:$0xff] %v4586
      %4619 = vst [vmem:[#allocation4 + $0x6b0] sm:$0xff] %v4587
      %4620 = vst [vmem:[#allocation4 + $0x6b8] sm:$0xff] %v4588
      %4621 = vst [vmem:[#allocation4 + $0x6c0] sm:$0xff] %v4589
      %4622 = vst [vmem:[#allocation4 + $0x6c8] sm:$0xff] %v4590
      %4623 = vst [vmem:[#allocation4 + $0x6d0] sm:$0xff] %v4591
      %4624 = vst [vmem:[#allocation4 + $0x6d8] sm:$0xff] %v4592
      %4625 = vst [vmem:[#allocation4 + $0x6e0] sm:$0xff] %v4593
      %4626 = vst [vmem:[#allocation4 + $0x6e8] sm:$0xff] %v4594
      %4627 = vst [vmem:[#allocation4 + $0x6f0] sm:$0xff] %v4595
      %4628 = vst [vmem:[#allocation4 + $0x6f8] sm:$0xff] %v4596
      %v4629 = vld [vmem:[#allocation3 + $0x8] sm:$0xff]
      %v4630 = vld [vmem:[#allocation3 + $0x10] sm:$0xff]
      %v4631 = vld [vmem:[#allocation3 + $0x18] sm:$0xff]
      %v4632 = vld [vmem:[#allocation3 + $0x28] sm:$0xff]
      %v4633 = vld [vmem:[#allocation3 + $0x30] sm:$0xff]
      %v4634 = vld [vmem:[#allocation3 + $0x38] sm:$0xff]
      %v4635 = vld [vmem:[#allocation3 + $0x48] sm:$0xff]
      %v4636 = vld [vmem:[#allocation3 + $0x50] sm:$0xff]
      %v4637 = vld [vmem:[#allocation3 + $0x58] sm:$0xff]
      %v4638 = vld [vmem:[#allocation3 + $0x68] sm:$0xff]
      %v4639 = vld [vmem:[#allocation3 + $0x70] sm:$0xff]
      %v4640 = vld [vmem:[#allocation3 + $0x78] sm:$0xff]
      %v4641 = vld [vmem:[#allocation3 + $0x88] sm:$0xff]
      %v4642 = vld [vmem:[#allocation3 + $0x90] sm:$0xff]
      %v4643 = vld [vmem:[#allocation3 + $0x98] sm:$0xff]
      %v4644 = vld [vmem:[#allocation3 + $0xa8] sm:$0xff]
      %v4645 = vld [vmem:[#allocation3 + $0xb0] sm:$0xff]
      %v4646 = vld [vmem:[#allocation3 + $0xb8] sm:$0xff]
      %v4647 = vld [vmem:[#allocation3 + $0xc8] sm:$0xff]
      %v4648 = vld [vmem:[#allocation3 + $0xd0] sm:$0xff]
      %v4649 = vld [vmem:[#allocation3 + $0xd8] sm:$0xff]
      %v4650 = vld [vmem:[#allocation3 + $0xe8] sm:$0xff]
      %v4651 = vld [vmem:[#allocation3 + $0xf0] sm:$0xff]
      %v4652 = vld [vmem:[#allocation3 + $0xf8] sm:$0xff]
      %v4653 = vld [vmem:[#allocation3 + $0x108] sm:$0xff]
      %v4654 = vld [vmem:[#allocation3 + $0x110] sm:$0xff]
      %v4655 = vld [vmem:[#allocation3 + $0x118] sm:$0xff]
      %v4656 = vld [vmem:[#allocation3 + $0x128] sm:$0xff]
      %v4657 = vld [vmem:[#allocation3 + $0x130] sm:$0xff]
      %v4658 = vld [vmem:[#allocation3 + $0x138] sm:$0xff]
      %v4659 = vld [vmem:[#allocation3 + $0x148] sm:$0xff]
      %v4660 = vld [vmem:[#allocation3 + $0x150] sm:$0xff]
      %v4661 = vld [vmem:[#allocation3 + $0x158] sm:$0xff]
      %v4662 = vld [vmem:[#allocation3 + $0x168] sm:$0xff]
      %v4663 = vld [vmem:[#allocation3 + $0x170] sm:$0xff]
      %v4664 = vld [vmem:[#allocation3 + $0x178] sm:$0xff]
      %v4665 = vld [vmem:[#allocation3 + $0x188] sm:$0xff]
      %v4666 = vld [vmem:[#allocation3 + $0x190] sm:$0xff]
      %v4667 = vld [vmem:[#allocation3 + $0x198] sm:$0xff]
      %v4668 = vld [vmem:[#allocation3 + $0x1a8] sm:$0xff]
      %v4669 = vld [vmem:[#allocation3 + $0x1b0] sm:$0xff]
      %v4670 = vld [vmem:[#allocation3 + $0x1b8] sm:$0xff]
      %v4671 = vld [vmem:[#allocation3 + $0x1c8] sm:$0xff]
      %v4672 = vld [vmem:[#allocation3 + $0x1d0] sm:$0xff]
      %v4673 = vld [vmem:[#allocation3 + $0x1d8] sm:$0xff]
      %v4674 = vld [vmem:[#allocation3 + $0x1e8] sm:$0xff]
      %v4675 = vld [vmem:[#allocation3 + $0x1f0] sm:$0xff]
      %v4676 = vld [vmem:[#allocation3 + $0x1f8] sm:$0xff]
      %4725 = vrot.lane.b32.xlu0 %v4629, 112
      %v4726 = vpop.permute.xlu0 %4725
      %4727 = vrot.lane.b32.xlu0 %v4630, 112
      %v4728 = vpop.permute.xlu0 %4727
      %4729 = vrot.lane.b32.xlu0 %v4631, 112
      %v4730 = vpop.permute.xlu0 %4729
      %4731 = vrot.lane.b32.xlu0 %v4632, 112
      %v4732 = vpop.permute.xlu0 %4731
      %4733 = vrot.lane.b32.xlu0 %v4633, 112
      %v4734 = vpop.permute.xlu0 %4733
      %4735 = vrot.lane.b32.xlu0 %v4634, 112
      %v4736 = vpop.permute.xlu0 %4735
      %4737 = vrot.lane.b32.xlu0 %v4635, 112
      %v4738 = vpop.permute.xlu0 %4737
      %4739 = vrot.lane.b32.xlu0 %v4636, 112
      %v4740 = vpop.permute.xlu0 %4739
      %4741 = vrot.lane.b32.xlu0 %v4637, 112
      %v4742 = vpop.permute.xlu0 %4741
      %4743 = vrot.lane.b32.xlu0 %v4638, 112
      %v4744 = vpop.permute.xlu0 %4743
      %4745 = vrot.lane.b32.xlu0 %v4639, 112
      %v4746 = vpop.permute.xlu0 %4745
      %4747 = vrot.lane.b32.xlu0 %v4640, 112
      %v4748 = vpop.permute.xlu0 %4747
      %4749 = vrot.lane.b32.xlu0 %v4641, 112
      %v4750 = vpop.permute.xlu0 %4749
      %4751 = vrot.lane.b32.xlu0 %v4642, 112
      %v4752 = vpop.permute.xlu0 %4751
      %4753 = vrot.lane.b32.xlu0 %v4643, 112
      %v4754 = vpop.permute.xlu0 %4753
      %4755 = vrot.lane.b32.xlu0 %v4644, 112
      %v4756 = vpop.permute.xlu0 %4755
      %4757 = vrot.lane.b32.xlu0 %v4645, 112
      %v4758 = vpop.permute.xlu0 %4757
      %4759 = vrot.lane.b32.xlu0 %v4646, 112
      %v4760 = vpop.permute.xlu0 %4759
      %4761 = vrot.lane.b32.xlu0 %v4647, 112
      %v4762 = vpop.permute.xlu0 %4761
      %4763 = vrot.lane.b32.xlu0 %v4648, 112
      %v4764 = vpop.permute.xlu0 %4763
      %4765 = vrot.lane.b32.xlu0 %v4649, 112
      %v4766 = vpop.permute.xlu0 %4765
      %4767 = vrot.lane.b32.xlu0 %v4650, 112
      %v4768 = vpop.permute.xlu0 %4767
      %4769 = vrot.lane.b32.xlu0 %v4651, 112
      %v4770 = vpop.permute.xlu0 %4769
      %4771 = vrot.lane.b32.xlu0 %v4652, 112
      %v4772 = vpop.permute.xlu0 %4771
      %4773 = vrot.lane.b32.xlu0 %v4653, 112
      %v4774 = vpop.permute.xlu0 %4773
      %4775 = vrot.lane.b32.xlu0 %v4654, 112
      %v4776 = vpop.permute.xlu0 %4775
      %4777 = vrot.lane.b32.xlu0 %v4655, 112
      %v4778 = vpop.permute.xlu0 %4777
      %4779 = vrot.lane.b32.xlu0 %v4656, 112
      %v4780 = vpop.permute.xlu0 %4779
      %4781 = vrot.lane.b32.xlu0 %v4657, 112
      %v4782 = vpop.permute.xlu0 %4781
      %4783 = vrot.lane.b32.xlu0 %v4658, 112
      %v4784 = vpop.permute.xlu0 %4783
      %4785 = vrot.lane.b32.xlu0 %v4659, 112
      %v4786 = vpop.permute.xlu0 %4785
      %4787 = vrot.lane.b32.xlu0 %v4660, 112
      %v4788 = vpop.permute.xlu0 %4787
      %4789 = vrot.lane.b32.xlu0 %v4661, 112
      %v4790 = vpop.permute.xlu0 %4789
      %4791 = vrot.lane.b32.xlu0 %v4662, 112
      %v4792 = vpop.permute.xlu0 %4791
      %4793 = vrot.lane.b32.xlu0 %v4663, 112
      %v4794 = vpop.permute.xlu0 %4793
      %4795 = vrot.lane.b32.xlu0 %v4664, 112
      %v4796 = vpop.permute.xlu0 %4795
      %4797 = vrot.lane.b32.xlu0 %v4665, 112
      %v4798 = vpop.permute.xlu0 %4797
      %4799 = vrot.lane.b32.xlu0 %v4666, 112
      %v4800 = vpop.permute.xlu0 %4799
      %4801 = vrot.lane.b32.xlu0 %v4667, 112
      %v4802 = vpop.permute.xlu0 %4801
      %4803 = vrot.lane.b32.xlu0 %v4668, 112
      %v4804 = vpop.permute.xlu0 %4803
      %4805 = vrot.lane.b32.xlu0 %v4669, 112
      %v4806 = vpop.permute.xlu0 %4805
      %4807 = vrot.lane.b32.xlu0 %v4670, 112
      %v4808 = vpop.permute.xlu0 %4807
      %4809 = vrot.lane.b32.xlu0 %v4671, 112
      %v4810 = vpop.permute.xlu0 %4809
      %4811 = vrot.lane.b32.xlu0 %v4672, 112
      %v4812 = vpop.permute.xlu0 %4811
      %4813 = vrot.lane.b32.xlu0 %v4673, 112
      %v4814 = vpop.permute.xlu0 %4813
      %4815 = vrot.lane.b32.xlu0 %v4674, 112
      %v4816 = vpop.permute.xlu0 %4815
      %4817 = vrot.lane.b32.xlu0 %v4675, 112
      %v4818 = vpop.permute.xlu0 %4817
      %4819 = vrot.lane.b32.xlu0 %v4676, 112
      %v4820 = vpop.permute.xlu0 %4819
      %vm4821 = vcmask 916480
      %v4822 = vsel %vm4821, %v4726, %v4728
      %v4823 = vsel %vm4821, %v4728, %v4730
      %v4824 = vsel %vm4821, %v4732, %v4734
      %v4825 = vsel %vm4821, %v4734, %v4736
      %v4826 = vsel %vm4821, %v4738, %v4740
      %v4827 = vsel %vm4821, %v4740, %v4742
      %v4828 = vsel %vm4821, %v4744, %v4746
      %v4829 = vsel %vm4821, %v4746, %v4748
      %v4830 = vsel %vm4821, %v4750, %v4752
      %v4831 = vsel %vm4821, %v4752, %v4754
      %v4832 = vsel %vm4821, %v4756, %v4758
      %v4833 = vsel %vm4821, %v4758, %v4760
      %v4834 = vsel %vm4821, %v4762, %v4764
      %v4835 = vsel %vm4821, %v4764, %v4766
      %v4836 = vsel %vm4821, %v4768, %v4770
      %v4837 = vsel %vm4821, %v4770, %v4772
      %v4838 = vsel %vm4821, %v4774, %v4776
      %v4839 = vsel %vm4821, %v4776, %v4778
      %v4840 = vsel %vm4821, %v4780, %v4782
      %v4841 = vsel %vm4821, %v4782, %v4784
      %v4842 = vsel %vm4821, %v4786, %v4788
      %v4843 = vsel %vm4821, %v4788, %v4790
      %v4844 = vsel %vm4821, %v4792, %v4794
      %v4845 = vsel %vm4821, %v4794, %v4796
      %v4846 = vsel %vm4821, %v4798, %v4800
      %v4847 = vsel %vm4821, %v4800, %v4802
      %v4848 = vsel %vm4821, %v4804, %v4806
      %v4849 = vsel %vm4821, %v4806, %v4808
      %v4850 = vsel %vm4821, %v4810, %v4812
      %v4851 = vsel %vm4821, %v4812, %v4814
      %v4852 = vsel %vm4821, %v4816, %v4818
      %v4853 = vsel %vm4821, %v4818, %v4820
      %4886 = vst [vmem:[#allocation4 + $0x700] sm:$0xff] %v4822
      %4887 = vst [vmem:[#allocation4 + $0x708] sm:$0xff] %v4823
      %4888 = vst [vmem:[#allocation4 + $0x710] sm:$0xff] %v4824
      %4889 = vst [vmem:[#allocation4 + $0x718] sm:$0xff] %v4825
      %4890 = vst [vmem:[#allocation4 + $0x720] sm:$0xff] %v4826
      %4891 = vst [vmem:[#allocation4 + $0x728] sm:$0xff] %v4827
      %4892 = vst [vmem:[#allocation4 + $0x730] sm:$0xff] %v4828
      %4893 = vst [vmem:[#allocation4 + $0x738] sm:$0xff] %v4829
      %4894 = vst [vmem:[#allocation4 + $0x740] sm:$0xff] %v4830
      %4895 = vst [vmem:[#allocation4 + $0x748] sm:$0xff] %v4831
      %4896 = vst [vmem:[#allocation4 + $0x750] sm:$0xff] %v4832
      %4897 = vst [vmem:[#allocation4 + $0x758] sm:$0xff] %v4833
      %4898 = vst [vmem:[#allocation4 + $0x760] sm:$0xff] %v4834
      %4899 = vst [vmem:[#allocation4 + $0x768] sm:$0xff] %v4835
      %4900 = vst [vmem:[#allocation4 + $0x770] sm:$0xff] %v4836
      %4901 = vst [vmem:[#allocation4 + $0x778] sm:$0xff] %v4837
      %4902 = vst [vmem:[#allocation4 + $0x780] sm:$0xff] %v4838
      %4903 = vst [vmem:[#allocation4 + $0x788] sm:$0xff] %v4839
      %4904 = vst [vmem:[#allocation4 + $0x790] sm:$0xff] %v4840
      %4905 = vst [vmem:[#allocation4 + $0x798] sm:$0xff] %v4841
      %4906 = vst [vmem:[#allocation4 + $0x7a0] sm:$0xff] %v4842
      %4907 = vst [vmem:[#allocation4 + $0x7a8] sm:$0xff] %v4843
      %4908 = vst [vmem:[#allocation4 + $0x7b0] sm:$0xff] %v4844
      %4909 = vst [vmem:[#allocation4 + $0x7b8] sm:$0xff] %v4845
      %4910 = vst [vmem:[#allocation4 + $0x7c0] sm:$0xff] %v4846
      %4911 = vst [vmem:[#allocation4 + $0x7c8] sm:$0xff] %v4847
      %4912 = vst [vmem:[#allocation4 + $0x7d0] sm:$0xff] %v4848
      %4913 = vst [vmem:[#allocation4 + $0x7d8] sm:$0xff] %v4849
      %4914 = vst [vmem:[#allocation4 + $0x7e0] sm:$0xff] %v4850
      %4915 = vst [vmem:[#allocation4 + $0x7e8] sm:$0xff] %v4851
      %4916 = vst [vmem:[#allocation4 + $0x7f0] sm:$0xff] %v4852
      %4917 = vst [vmem:[#allocation4 + $0x7f8] sm:$0xff] %v4853
      %v4918 = vld [vmem:[#allocation3 + $0x8] sm:$0xff]
      %v4919 = vld [vmem:[#allocation3 + $0x10] sm:$0xff]
      %v4920 = vld [vmem:[#allocation3 + $0x18] sm:$0xff]
      %v4921 = vld [vmem:[#allocation3 + $0x28] sm:$0xff]
      %v4922 = vld [vmem:[#allocation3 + $0x30] sm:$0xff]
      %v4923 = vld [vmem:[#allocation3 + $0x38] sm:$0xff]
      %v4924 = vld [vmem:[#allocation3 + $0x48] sm:$0xff]
      %v4925 = vld [vmem:[#allocation3 + $0x50] sm:$0xff]
      %v4926 = vld [vmem:[#allocation3 + $0x58] sm:$0xff]
      %v4927 = vld [vmem:[#allocation3 + $0x68] sm:$0xff]
      %v4928 = vld [vmem:[#allocation3 + $0x70] sm:$0xff]
      %v4929 = vld [vmem:[#allocation3 + $0x78] sm:$0xff]
      %v4930 = vld [vmem:[#allocation3 + $0x88] sm:$0xff]
      %v4931 = vld [vmem:[#allocation3 + $0x90] sm:$0xff]
      %v4932 = vld [vmem:[#allocation3 + $0x98] sm:$0xff]
      %v4933 = vld [vmem:[#allocation3 + $0xa8] sm:$0xff]
      %v4934 = vld [vmem:[#allocation3 + $0xb0] sm:$0xff]
      %v4935 = vld [vmem:[#allocation3 + $0xb8] sm:$0xff]
      %v4936 = vld [vmem:[#allocation3 + $0xc8] sm:$0xff]
      %v4937 = vld [vmem:[#allocation3 + $0xd0] sm:$0xff]
      %v4938 = vld [vmem:[#allocation3 + $0xd8] sm:$0xff]
      %v4939 = vld [vmem:[#allocation3 + $0xe8] sm:$0xff]
      %v4940 = vld [vmem:[#allocation3 + $0xf0] sm:$0xff]
      %v4941 = vld [vmem:[#allocation3 + $0xf8] sm:$0xff]
      %v4942 = vld [vmem:[#allocation3 + $0x108] sm:$0xff]
      %v4943 = vld [vmem:[#allocation3 + $0x110] sm:$0xff]
      %v4944 = vld [vmem:[#allocation3 + $0x118] sm:$0xff]
      %v4945 = vld [vmem:[#allocation3 + $0x128] sm:$0xff]
      %v4946 = vld [vmem:[#allocation3 + $0x130] sm:$0xff]
      %v4947 = vld [vmem:[#allocation3 + $0x138] sm:$0xff]
      %v4948 = vld [vmem:[#allocation3 + $0x148] sm:$0xff]
      %v4949 = vld [vmem:[#allocation3 + $0x150] sm:$0xff]
      %v4950 = vld [vmem:[#allocation3 + $0x158] sm:$0xff]
      %v4951 = vld [vmem:[#allocation3 + $0x168] sm:$0xff]
      %v4952 = vld [vmem:[#allocation3 + $0x170] sm:$0xff]
      %v4953 = vld [vmem:[#allocation3 + $0x178] sm:$0xff]
      %v4954 = vld [vmem:[#allocation3 + $0x188] sm:$0xff]
      %v4955 = vld [vmem:[#allocation3 + $0x190] sm:$0xff]
      %v4956 = vld [vmem:[#allocation3 + $0x198] sm:$0xff]
      %v4957 = vld [vmem:[#allocation3 + $0x1a8] sm:$0xff]
      %v4958 = vld [vmem:[#allocation3 + $0x1b0] sm:$0xff]
      %v4959 = vld [vmem:[#allocation3 + $0x1b8] sm:$0xff]
      %v4960 = vld [vmem:[#allocation3 + $0x1c8] sm:$0xff]
      %v4961 = vld [vmem:[#allocation3 + $0x1d0] sm:$0xff]
      %v4962 = vld [vmem:[#allocation3 + $0x1d8] sm:$0xff]
      %v4963 = vld [vmem:[#allocation3 + $0x1e8] sm:$0xff]
      %v4964 = vld [vmem:[#allocation3 + $0x1f0] sm:$0xff]
      %v4965 = vld [vmem:[#allocation3 + $0x1f8] sm:$0xff]
      %5014 = vrot.lane.b32.xlu0 %v4918, 111
      %v5015 = vpop.permute.xlu0 %5014
      %5016 = vrot.lane.b32.xlu0 %v4919, 111
      %v5017 = vpop.permute.xlu0 %5016
      %5018 = vrot.lane.b32.xlu0 %v4920, 111
      %v5019 = vpop.permute.xlu0 %5018
      %5020 = vrot.lane.b32.xlu0 %v4921, 111
      %v5021 = vpop.permute.xlu0 %5020
      %5022 = vrot.lane.b32.xlu0 %v4922, 111
      %v5023 = vpop.permute.xlu0 %5022
      %5024 = vrot.lane.b32.xlu0 %v4923, 111
      %v5025 = vpop.permute.xlu0 %5024
      %5026 = vrot.lane.b32.xlu0 %v4924, 111
      %v5027 = vpop.permute.xlu0 %5026
      %5028 = vrot.lane.b32.xlu0 %v4925, 111
      %v5029 = vpop.permute.xlu0 %5028
      %5030 = vrot.lane.b32.xlu0 %v4926, 111
      %v5031 = vpop.permute.xlu0 %5030
      %5032 = vrot.lane.b32.xlu0 %v4927, 111
      %v5033 = vpop.permute.xlu0 %5032
      %5034 = vrot.lane.b32.xlu0 %v4928, 111
      %v5035 = vpop.permute.xlu0 %5034
      %5036 = vrot.lane.b32.xlu0 %v4929, 111
      %v5037 = vpop.permute.xlu0 %5036
      %5038 = vrot.lane.b32.xlu0 %v4930, 111
      %v5039 = vpop.permute.xlu0 %5038
      %5040 = vrot.lane.b32.xlu0 %v4931, 111
      %v5041 = vpop.permute.xlu0 %5040
      %5042 = vrot.lane.b32.xlu0 %v4932, 111
      %v5043 = vpop.permute.xlu0 %5042
      %5044 = vrot.lane.b32.xlu0 %v4933, 111
      %v5045 = vpop.permute.xlu0 %5044
      %5046 = vrot.lane.b32.xlu0 %v4934, 111
      %v5047 = vpop.permute.xlu0 %5046
      %5048 = vrot.lane.b32.xlu0 %v4935, 111
      %v5049 = vpop.permute.xlu0 %5048
      %5050 = vrot.lane.b32.xlu0 %v4936, 111
      %v5051 = vpop.permute.xlu0 %5050
      %5052 = vrot.lane.b32.xlu0 %v4937, 111
      %v5053 = vpop.permute.xlu0 %5052
      %5054 = vrot.lane.b32.xlu0 %v4938, 111
      %v5055 = vpop.permute.xlu0 %5054
      %5056 = vrot.lane.b32.xlu0 %v4939, 111
      %v5057 = vpop.permute.xlu0 %5056
      %5058 = vrot.lane.b32.xlu0 %v4940, 111
      %v5059 = vpop.permute.xlu0 %5058
      %5060 = vrot.lane.b32.xlu0 %v4941, 111
      %v5061 = vpop.permute.xlu0 %5060
      %5062 = vrot.lane.b32.xlu0 %v4942, 111
      %v5063 = vpop.permute.xlu0 %5062
      %5064 = vrot.lane.b32.xlu0 %v4943, 111
      %v5065 = vpop.permute.xlu0 %5064
      %5066 = vrot.lane.b32.xlu0 %v4944, 111
      %v5067 = vpop.permute.xlu0 %5066
      %5068 = vrot.lane.b32.xlu0 %v4945, 111
      %v5069 = vpop.permute.xlu0 %5068
      %5070 = vrot.lane.b32.xlu0 %v4946, 111
      %v5071 = vpop.permute.xlu0 %5070
      %5072 = vrot.lane.b32.xlu0 %v4947, 111
      %v5073 = vpop.permute.xlu0 %5072
      %5074 = vrot.lane.b32.xlu0 %v4948, 111
      %v5075 = vpop.permute.xlu0 %5074
      %5076 = vrot.lane.b32.xlu0 %v4949, 111
      %v5077 = vpop.permute.xlu0 %5076
      %5078 = vrot.lane.b32.xlu0 %v4950, 111
      %v5079 = vpop.permute.xlu0 %5078
      %5080 = vrot.lane.b32.xlu0 %v4951, 111
      %v5081 = vpop.permute.xlu0 %5080
      %5082 = vrot.lane.b32.xlu0 %v4952, 111
      %v5083 = vpop.permute.xlu0 %5082
      %5084 = vrot.lane.b32.xlu0 %v4953, 111
      %v5085 = vpop.permute.xlu0 %5084
      %5086 = vrot.lane.b32.xlu0 %v4954, 111
      %v5087 = vpop.permute.xlu0 %5086
      %5088 = vrot.lane.b32.xlu0 %v4955, 111
      %v5089 = vpop.permute.xlu0 %5088
      %5090 = vrot.lane.b32.xlu0 %v4956, 111
      %v5091 = vpop.permute.xlu0 %5090
      %5092 = vrot.lane.b32.xlu0 %v4957, 111
      %v5093 = vpop.permute.xlu0 %5092
      %5094 = vrot.lane.b32.xlu0 %v4958, 111
      %v5095 = vpop.permute.xlu0 %5094
      %5096 = vrot.lane.b32.xlu0 %v4959, 111
      %v5097 = vpop.permute.xlu0 %5096
      %5098 = vrot.lane.b32.xlu0 %v4960, 111
      %v5099 = vpop.permute.xlu0 %5098
      %5100 = vrot.lane.b32.xlu0 %v4961, 111
      %v5101 = vpop.permute.xlu0 %5100
      %5102 = vrot.lane.b32.xlu0 %v4962, 111
      %v5103 = vpop.permute.xlu0 %5102
      %5104 = vrot.lane.b32.xlu0 %v4963, 111
      %v5105 = vpop.permute.xlu0 %5104
      %5106 = vrot.lane.b32.xlu0 %v4964, 111
      %v5107 = vpop.permute.xlu0 %5106
      %5108 = vrot.lane.b32.xlu0 %v4965, 111
      %v5109 = vpop.permute.xlu0 %5108
      %vm5110 = vcmask 908288
      %v5111 = vsel %vm5110, %v5015, %v5017
      %v5112 = vsel %vm5110, %v5017, %v5019
      %v5113 = vsel %vm5110, %v5021, %v5023
      %v5114 = vsel %vm5110, %v5023, %v5025
      %v5115 = vsel %vm5110, %v5027, %v5029
      %v5116 = vsel %vm5110, %v5029, %v5031
      %v5117 = vsel %vm5110, %v5033, %v5035
      %v5118 = vsel %vm5110, %v5035, %v5037
      %v5119 = vsel %vm5110, %v5039, %v5041
      %v5120 = vsel %vm5110, %v5041, %v5043
      %v5121 = vsel %vm5110, %v5045, %v5047
      %v5122 = vsel %vm5110, %v5047, %v5049
      %v5123 = vsel %vm5110, %v5051, %v5053
      %v5124 = vsel %vm5110, %v5053, %v5055
      %v5125 = vsel %vm5110, %v5057, %v5059
      %v5126 = vsel %vm5110, %v5059, %v5061
      %v5127 = vsel %vm5110, %v5063, %v5065
      %v5128 = vsel %vm5110, %v5065, %v5067
      %v5129 = vsel %vm5110, %v5069, %v5071
      %v5130 = vsel %vm5110, %v5071, %v5073
      %v5131 = vsel %vm5110, %v5075, %v5077
      %v5132 = vsel %vm5110, %v5077, %v5079
      %v5133 = vsel %vm5110, %v5081, %v5083
      %v5134 = vsel %vm5110, %v5083, %v5085
      %v5135 = vsel %vm5110, %v5087, %v5089
      %v5136 = vsel %vm5110, %v5089, %v5091
      %v5137 = vsel %vm5110, %v5093, %v5095
      %v5138 = vsel %vm5110, %v5095, %v5097
      %v5139 = vsel %vm5110, %v5099, %v5101
      %v5140 = vsel %vm5110, %v5101, %v5103
      %v5141 = vsel %vm5110, %v5105, %v5107
      %v5142 = vsel %vm5110, %v5107, %v5109
      %v5175 = vsel %vm3327, %v5111, 0.0
      %v5176 = vsel %vm3328, %v5112, 0.0
      %v5177 = vsel %vm3327, %v5113, 0.0
      %v5178 = vsel %vm3328, %v5114, 0.0
      %v5179 = vsel %vm3327, %v5115, 0.0
      %v5180 = vsel %vm3328, %v5116, 0.0
      %v5181 = vsel %vm3327, %v5117, 0.0
      %v5182 = vsel %vm3328, %v5118, 0.0
      %v5183 = vsel %vm3327, %v5119, 0.0
      %v5184 = vsel %vm3328, %v5120, 0.0
      %v5185 = vsel %vm3327, %v5121, 0.0
      %v5186 = vsel %vm3328, %v5122, 0.0
      %v5187 = vsel %vm3327, %v5123, 0.0
      %v5188 = vsel %vm3328, %v5124, 0.0
      %v5189 = vsel %vm3327, %v5125, 0.0
      %v5190 = vsel %vm3328, %v5126, 0.0
      %v5191 = vsel %vm3327, %v5127, 0.0
      %v5192 = vsel %vm3328, %v5128, 0.0
      %v5193 = vsel %vm3327, %v5129, 0.0
      %v5194 = vsel %vm3328, %v5130, 0.0
      %v5195 = vsel %vm3327, %v5131, 0.0
      %v5196 = vsel %vm3328, %v5132, 0.0
      %v5197 = vsel %vm3327, %v5133, 0.0
      %v5198 = vsel %vm3328, %v5134, 0.0
      %v5199 = vsel %vm3327, %v5135, 0.0
      %v5200 = vsel %vm3328, %v5136, 0.0
      %v5201 = vsel %vm3327, %v5137, 0.0
      %v5202 = vsel %vm3328, %v5138, 0.0
      %v5203 = vsel %vm3327, %v5139, 0.0
      %v5204 = vsel %vm3328, %v5140, 0.0
      %v5205 = vsel %vm3327, %v5141, 0.0
      %v5206 = vsel %vm3328, %v5142, 0.0
      %5207 = vst [vmem:[#allocation4 + $0x800] sm:$0xff] %v5175
      %5208 = vst [vmem:[#allocation4 + $0x808] sm:$0xff] %v5176
      %5209 = vst [vmem:[#allocation4 + $0x810] sm:$0xff] %v5177
      %5210 = vst [vmem:[#allocation4 + $0x818] sm:$0xff] %v5178
      %5211 = vst [vmem:[#allocation4 + $0x820] sm:$0xff] %v5179
      %5212 = vst [vmem:[#allocation4 + $0x828] sm:$0xff] %v5180
      %5213 = vst [vmem:[#allocation4 + $0x830] sm:$0xff] %v5181
      %5214 = vst [vmem:[#allocation4 + $0x838] sm:$0xff] %v5182
      %5215 = vst [vmem:[#allocation4 + $0x840] sm:$0xff] %v5183
      %5216 = vst [vmem:[#allocation4 + $0x848] sm:$0xff] %v5184
      %5217 = vst [vmem:[#allocation4 + $0x850] sm:$0xff] %v5185
      %5218 = vst [vmem:[#allocation4 + $0x858] sm:$0xff] %v5186
      %5219 = vst [vmem:[#allocation4 + $0x860] sm:$0xff] %v5187
      %5220 = vst [vmem:[#allocation4 + $0x868] sm:$0xff] %v5188
      %5221 = vst [vmem:[#allocation4 + $0x870] sm:$0xff] %v5189
      %5222 = vst [vmem:[#allocation4 + $0x878] sm:$0xff] %v5190
      %5223 = vst [vmem:[#allocation4 + $0x880] sm:$0xff] %v5191
      %5224 = vst [vmem:[#allocation4 + $0x888] sm:$0xff] %v5192
      %5225 = vst [vmem:[#allocation4 + $0x890] sm:$0xff] %v5193
      %5226 = vst [vmem:[#allocation4 + $0x898] sm:$0xff] %v5194
      %5227 = vst [vmem:[#allocation4 + $0x8a0] sm:$0xff] %v5195
      %5228 = vst [vmem:[#allocation4 + $0x8a8] sm:$0xff] %v5196
      %5229 = vst [vmem:[#allocation4 + $0x8b0] sm:$0xff] %v5197
      %5230 = vst [vmem:[#allocation4 + $0x8b8] sm:$0xff] %v5198
      %5231 = vst [vmem:[#allocation4 + $0x8c0] sm:$0xff] %v5199
      %5232 = vst [vmem:[#allocation4 + $0x8c8] sm:$0xff] %v5200
      %5233 = vst [vmem:[#allocation4 + $0x8d0] sm:$0xff] %v5201
      %5234 = vst [vmem:[#allocation4 + $0x8d8] sm:$0xff] %v5202
      %5235 = vst [vmem:[#allocation4 + $0x8e0] sm:$0xff] %v5203
      %5236 = vst [vmem:[#allocation4 + $0x8e8] sm:$0xff] %v5204
      %5237 = vst [vmem:[#allocation4 + $0x8f0] sm:$0xff] %v5205
      %5238 = vst [vmem:[#allocation4 + $0x8f8] sm:$0xff] %v5206
      %v5239 = vld [vmem:[%s6] sm:$0xff]
      %v5240 = vld [vmem:[%s6 + $0x8] sm:$0xff]
      %v5241 = vld [vmem:[%s6 + $0x10] sm:$0xff]
      %v5242 = vld [vmem:[%s6 + $0x18] sm:$0xff]
      %v5243 = vld [vmem:[%s6 + $0x20] sm:$0xff]
      %v5244 = vld [vmem:[%s6 + $0x28] sm:$0xff]
      %v5245 = vld [vmem:[%s6 + $0x30] sm:$0xff]
      %v5246 = vld [vmem:[%s6 + $0x38] sm:$0xff]
      %v5247 = vld [vmem:[%s6 + $0x40] sm:$0xff]
      %v5248 = vld [vmem:[#allocation4] sm:$0xff]
      %v5249 = vld [vmem:[#allocation4 + $0x8] sm:$0xff]
      %v5250 = vld [vmem:[#allocation4 + $0x10] sm:$0xff]
      %v5251 = vld [vmem:[#allocation4 + $0x18] sm:$0xff]
      %v5252 = vld [vmem:[#allocation4 + $0x20] sm:$0xff]
      %v5253 = vld [vmem:[#allocation4 + $0x28] sm:$0xff]
      %v5254 = vld [vmem:[#allocation4 + $0x30] sm:$0xff]
      %v5255 = vld [vmem:[#allocation4 + $0x38] sm:$0xff]
      %v5256 = vld [vmem:[#allocation4 + $0x40] sm:$0xff]
      %v5257 = vld [vmem:[#allocation4 + $0x48] sm:$0xff]
      %v5258 = vld [vmem:[#allocation4 + $0x50] sm:$0xff]
      %v5259 = vld [vmem:[#allocation4 + $0x58] sm:$0xff]
      %v5260 = vld [vmem:[#allocation4 + $0x60] sm:$0xff]
      %v5261 = vld [vmem:[#allocation4 + $0x68] sm:$0xff]
      %v5262 = vld [vmem:[#allocation4 + $0x70] sm:$0xff]
      %v5263 = vld [vmem:[#allocation4 + $0x78] sm:$0xff]
      %v5264 = vld [vmem:[#allocation4 + $0x80] sm:$0xff]
      %v5265 = vld [vmem:[#allocation4 + $0x88] sm:$0xff]
      %v5266 = vld [vmem:[#allocation4 + $0x90] sm:$0xff]
      %v5267 = vld [vmem:[#allocation4 + $0x98] sm:$0xff]
      %v5268 = vld [vmem:[#allocation4 + $0xa0] sm:$0xff]
      %v5269 = vld [vmem:[#allocation4 + $0xa8] sm:$0xff]
      %v5270 = vld [vmem:[#allocation4 + $0xb0] sm:$0xff]
      %v5271 = vld [vmem:[#allocation4 + $0xb8] sm:$0xff]
      %v5272 = vld [vmem:[#allocation4 + $0xc0] sm:$0xff]
      %v5273 = vld [vmem:[#allocation4 + $0xc8] sm:$0xff]
      %v5274 = vld [vmem:[#allocation4 + $0xd0] sm:$0xff]
      %v5275 = vld [vmem:[#allocation4 + $0xd8] sm:$0xff]
      %v5276 = vld [vmem:[#allocation4 + $0xe0] sm:$0xff]
      %v5277 = vld [vmem:[#allocation4 + $0xe8] sm:$0xff]
      %v5278 = vld [vmem:[#allocation4 + $0xf0] sm:$0xff]
      %v5279 = vld [vmem:[#allocation4 + $0xf8] sm:$0xff]
      %v5280 = vld [vmem:[#allocation4 + $0x100] sm:$0xff]
      %v5281 = vld [vmem:[#allocation4 + $0x108] sm:$0xff]
      %v5282 = vld [vmem:[#allocation4 + $0x110] sm:$0xff]
      %v5283 = vld [vmem:[#allocation4 + $0x118] sm:$0xff]
      %v5284 = vld [vmem:[#allocation4 + $0x120] sm:$0xff]
      %v5285 = vld [vmem:[#allocation4 + $0x128] sm:$0xff]
      %v5286 = vld [vmem:[#allocation4 + $0x130] sm:$0xff]
      %v5287 = vld [vmem:[#allocation4 + $0x138] sm:$0xff]
      %v5288 = vld [vmem:[#allocation4 + $0x140] sm:$0xff]
      %v5289 = vld [vmem:[#allocation4 + $0x148] sm:$0xff]
      %v5290 = vld [vmem:[#allocation4 + $0x150] sm:$0xff]
      %v5291 = vld [vmem:[#allocation4 + $0x158] sm:$0xff]
      %v5292 = vld [vmem:[#allocation4 + $0x160] sm:$0xff]
      %v5293 = vld [vmem:[#allocation4 + $0x168] sm:$0xff]
      %v5294 = vld [vmem:[#allocation4 + $0x170] sm:$0xff]
      %v5295 = vld [vmem:[#allocation4 + $0x178] sm:$0xff]
      %v5296 = vld [vmem:[#allocation4 + $0x180] sm:$0xff]
      %v5297 = vld [vmem:[#allocation4 + $0x188] sm:$0xff]
      %v5298 = vld [vmem:[#allocation4 + $0x190] sm:$0xff]
      %v5299 = vld [vmem:[#allocation4 + $0x198] sm:$0xff]
      %v5300 = vld [vmem:[#allocation4 + $0x1a0] sm:$0xff]
      %v5301 = vld [vmem:[#allocation4 + $0x1a8] sm:$0xff]
      %v5302 = vld [vmem:[#allocation4 + $0x1b0] sm:$0xff]
      %v5303 = vld [vmem:[#allocation4 + $0x1b8] sm:$0xff]
      %v5304 = vld [vmem:[#allocation4 + $0x1c0] sm:$0xff]
      %v5305 = vld [vmem:[#allocation4 + $0x1c8] sm:$0xff]
      %v5306 = vld [vmem:[#allocation4 + $0x1d0] sm:$0xff]
      %v5307 = vld [vmem:[#allocation4 + $0x1d8] sm:$0xff]
      %v5308 = vld [vmem:[#allocation4 + $0x1e0] sm:$0xff]
      %v5309 = vld [vmem:[#allocation4 + $0x1e8] sm:$0xff]
      %v5310 = vld [vmem:[#allocation4 + $0x1f0] sm:$0xff]
      %v5311 = vld [vmem:[#allocation4 + $0x1f8] sm:$0xff]
      %v5312 = vld [vmem:[#allocation4 + $0x200] sm:$0xff]
      %v5313 = vld [vmem:[#allocation4 + $0x208] sm:$0xff]
      %v5314 = vld [vmem:[#allocation4 + $0x210] sm:$0xff]
      %v5315 = vld [vmem:[#allocation4 + $0x218] sm:$0xff]
      %v5316 = vld [vmem:[#allocation4 + $0x220] sm:$0xff]
      %v5317 = vld [vmem:[#allocation4 + $0x228] sm:$0xff]
      %v5318 = vld [vmem:[#allocation4 + $0x230] sm:$0xff]
      %v5319 = vld [vmem:[#allocation4 + $0x238] sm:$0xff]
      %v5320 = vld [vmem:[#allocation4 + $0x240] sm:$0xff]
      %v5321 = vld [vmem:[#allocation4 + $0x248] sm:$0xff]
      %v5322 = vld [vmem:[#allocation4 + $0x250] sm:$0xff]
      %v5323 = vld [vmem:[#allocation4 + $0x258] sm:$0xff]
      %v5324 = vld [vmem:[#allocation4 + $0x260] sm:$0xff]
      %v5325 = vld [vmem:[#allocation4 + $0x268] sm:$0xff]
      %v5326 = vld [vmem:[#allocation4 + $0x270] sm:$0xff]
      %v5327 = vld [vmem:[#allocation4 + $0x278] sm:$0xff]
      %v5328 = vld [vmem:[#allocation4 + $0x280] sm:$0xff]
      %v5329 = vld [vmem:[#allocation4 + $0x288] sm:$0xff]
      %v5330 = vld [vmem:[#allocation4 + $0x290] sm:$0xff]
      %v5331 = vld [vmem:[#allocation4 + $0x298] sm:$0xff]
      %v5332 = vld [vmem:[#allocation4 + $0x2a0] sm:$0xff]
      %v5333 = vld [vmem:[#allocation4 + $0x2a8] sm:$0xff]
      %v5334 = vld [vmem:[#allocation4 + $0x2b0] sm:$0xff]
      %v5335 = vld [vmem:[#allocation4 + $0x2b8] sm:$0xff]
      %v5336 = vld [vmem:[#allocation4 + $0x2c0] sm:$0xff]
      %v5337 = vld [vmem:[#allocation4 + $0x2c8] sm:$0xff]
      %v5338 = vld [vmem:[#allocation4 + $0x2d0] sm:$0xff]
      %v5339 = vld [vmem:[#allocation4 + $0x2d8] sm:$0xff]
      %v5340 = vld [vmem:[#allocation4 + $0x2e0] sm:$0xff]
      %v5341 = vld [vmem:[#allocation4 + $0x2e8] sm:$0xff]
      %v5342 = vld [vmem:[#allocation4 + $0x2f0] sm:$0xff]
      %v5343 = vld [vmem:[#allocation4 + $0x2f8] sm:$0xff]
      %v5344 = vld [vmem:[#allocation4 + $0x300] sm:$0xff]
      %v5345 = vld [vmem:[#allocation4 + $0x308] sm:$0xff]
      %v5346 = vld [vmem:[#allocation4 + $0x310] sm:$0xff]
      %v5347 = vld [vmem:[#allocation4 + $0x318] sm:$0xff]
      %v5348 = vld [vmem:[#allocation4 + $0x320] sm:$0xff]
      %v5349 = vld [vmem:[#allocation4 + $0x328] sm:$0xff]
      %v5350 = vld [vmem:[#allocation4 + $0x330] sm:$0xff]
      %v5351 = vld [vmem:[#allocation4 + $0x338] sm:$0xff]
      %v5352 = vld [vmem:[#allocation4 + $0x340] sm:$0xff]
      %v5353 = vld [vmem:[#allocation4 + $0x348] sm:$0xff]
      %v5354 = vld [vmem:[#allocation4 + $0x350] sm:$0xff]
      %v5355 = vld [vmem:[#allocation4 + $0x358] sm:$0xff]
      %v5356 = vld [vmem:[#allocation4 + $0x360] sm:$0xff]
      %v5357 = vld [vmem:[#allocation4 + $0x368] sm:$0xff]
      %v5358 = vld [vmem:[#allocation4 + $0x370] sm:$0xff]
      %v5359 = vld [vmem:[#allocation4 + $0x378] sm:$0xff]
      %v5360 = vld [vmem:[#allocation4 + $0x380] sm:$0xff]
      %v5361 = vld [vmem:[#allocation4 + $0x388] sm:$0xff]
      %v5362 = vld [vmem:[#allocation4 + $0x390] sm:$0xff]
      %v5363 = vld [vmem:[#allocation4 + $0x398] sm:$0xff]
      %v5364 = vld [vmem:[#allocation4 + $0x3a0] sm:$0xff]
      %v5365 = vld [vmem:[#allocation4 + $0x3a8] sm:$0xff]
      %v5366 = vld [vmem:[#allocation4 + $0x3b0] sm:$0xff]
      %v5367 = vld [vmem:[#allocation4 + $0x3b8] sm:$0xff]
      %v5368 = vld [vmem:[#allocation4 + $0x3c0] sm:$0xff]
      %v5369 = vld [vmem:[#allocation4 + $0x3c8] sm:$0xff]
      %v5370 = vld [vmem:[#allocation4 + $0x3d0] sm:$0xff]
      %v5371 = vld [vmem:[#allocation4 + $0x3d8] sm:$0xff]
      %v5372 = vld [vmem:[#allocation4 + $0x3e0] sm:$0xff]
      %v5373 = vld [vmem:[#allocation4 + $0x3e8] sm:$0xff]
      %v5374 = vld [vmem:[#allocation4 + $0x3f0] sm:$0xff]
      %v5375 = vld [vmem:[#allocation4 + $0x3f8] sm:$0xff]
      %v5376 = vld [vmem:[#allocation4 + $0x400] sm:$0xff]
      %v5377 = vld [vmem:[#allocation4 + $0x408] sm:$0xff]
      %v5378 = vld [vmem:[#allocation4 + $0x410] sm:$0xff]
      %v5379 = vld [vmem:[#allocation4 + $0x418] sm:$0xff]
      %v5380 = vld [vmem:[#allocation4 + $0x420] sm:$0xff]
      %v5381 = vld [vmem:[#allocation4 + $0x428] sm:$0xff]
      %v5382 = vld [vmem:[#allocation4 + $0x430] sm:$0xff]
      %v5383 = vld [vmem:[#allocation4 + $0x438] sm:$0xff]
      %v5384 = vld [vmem:[#allocation4 + $0x440] sm:$0xff]
      %v5385 = vld [vmem:[#allocation4 + $0x448] sm:$0xff]
      %v5386 = vld [vmem:[#allocation4 + $0x450] sm:$0xff]
      %v5387 = vld [vmem:[#allocation4 + $0x458] sm:$0xff]
      %v5388 = vld [vmem:[#allocation4 + $0x460] sm:$0xff]
      %v5389 = vld [vmem:[#allocation4 + $0x468] sm:$0xff]
      %v5390 = vld [vmem:[#allocation4 + $0x470] sm:$0xff]
      %v5391 = vld [vmem:[#allocation4 + $0x478] sm:$0xff]
      %v5392 = vld [vmem:[#allocation4 + $0x480] sm:$0xff]
      %v5393 = vld [vmem:[#allocation4 + $0x488] sm:$0xff]
      %v5394 = vld [vmem:[#allocation4 + $0x490] sm:$0xff]
      %v5395 = vld [vmem:[#allocation4 + $0x498] sm:$0xff]
      %v5396 = vld [vmem:[#allocation4 + $0x4a0] sm:$0xff]
      %v5397 = vld [vmem:[#allocation4 + $0x4a8] sm:$0xff]
      %v5398 = vld [vmem:[#allocation4 + $0x4b0] sm:$0xff]
      %v5399 = vld [vmem:[#allocation4 + $0x4b8] sm:$0xff]
      %v5400 = vld [vmem:[#allocation4 + $0x4c0] sm:$0xff]
      %v5401 = vld [vmem:[#allocation4 + $0x4c8] sm:$0xff]
      %v5402 = vld [vmem:[#allocation4 + $0x4d0] sm:$0xff]
      %v5403 = vld [vmem:[#allocation4 + $0x4d8] sm:$0xff]
      %v5404 = vld [vmem:[#allocation4 + $0x4e0] sm:$0xff]
      %v5405 = vld [vmem:[#allocation4 + $0x4e8] sm:$0xff]
      %v5406 = vld [vmem:[#allocation4 + $0x4f0] sm:$0xff]
      %v5407 = vld [vmem:[#allocation4 + $0x4f8] sm:$0xff]
      %v5408 = vld [vmem:[#allocation4 + $0x500] sm:$0xff]
      %v5409 = vld [vmem:[#allocation4 + $0x508] sm:$0xff]
      %v5410 = vld [vmem:[#allocation4 + $0x510] sm:$0xff]
      %v5411 = vld [vmem:[#allocation4 + $0x518] sm:$0xff]
      %v5412 = vld [vmem:[#allocation4 + $0x520] sm:$0xff]
      %v5413 = vld [vmem:[#allocation4 + $0x528] sm:$0xff]
      %v5414 = vld [vmem:[#allocation4 + $0x530] sm:$0xff]
      %v5415 = vld [vmem:[#allocation4 + $0x538] sm:$0xff]
      %v5416 = vld [vmem:[#allocation4 + $0x540] sm:$0xff]
      %v5417 = vld [vmem:[#allocation4 + $0x548] sm:$0xff]
      %v5418 = vld [vmem:[#allocation4 + $0x550] sm:$0xff]
      %v5419 = vld [vmem:[#allocation4 + $0x558] sm:$0xff]
      %v5420 = vld [vmem:[#allocation4 + $0x560] sm:$0xff]
      %v5421 = vld [vmem:[#allocation4 + $0x568] sm:$0xff]
      %v5422 = vld [vmem:[#allocation4 + $0x570] sm:$0xff]
      %v5423 = vld [vmem:[#allocation4 + $0x578] sm:$0xff]
      %v5424 = vld [vmem:[#allocation4 + $0x580] sm:$0xff]
      %v5425 = vld [vmem:[#allocation4 + $0x588] sm:$0xff]
      %v5426 = vld [vmem:[#allocation4 + $0x590] sm:$0xff]
      %v5427 = vld [vmem:[#allocation4 + $0x598] sm:$0xff]
      %v5428 = vld [vmem:[#allocation4 + $0x5a0] sm:$0xff]
      %v5429 = vld [vmem:[#allocation4 + $0x5a8] sm:$0xff]
      %v5430 = vld [vmem:[#allocation4 + $0x5b0] sm:$0xff]
      %v5431 = vld [vmem:[#allocation4 + $0x5b8] sm:$0xff]
      %v5432 = vld [vmem:[#allocation4 + $0x5c0] sm:$0xff]
      %v5433 = vld [vmem:[#allocation4 + $0x5c8] sm:$0xff]
      %v5434 = vld [vmem:[#allocation4 + $0x5d0] sm:$0xff]
      %v5435 = vld [vmem:[#allocation4 + $0x5d8] sm:$0xff]
      %v5436 = vld [vmem:[#allocation4 + $0x5e0] sm:$0xff]
      %v5437 = vld [vmem:[#allocation4 + $0x5e8] sm:$0xff]
      %v5438 = vld [vmem:[#allocation4 + $0x5f0] sm:$0xff]
      %v5439 = vld [vmem:[#allocation4 + $0x5f8] sm:$0xff]
      %v5440 = vld [vmem:[#allocation4 + $0x600] sm:$0xff]
      %v5441 = vld [vmem:[#allocation4 + $0x608] sm:$0xff]
      %v5442 = vld [vmem:[#allocation4 + $0x610] sm:$0xff]
      %v5443 = vld [vmem:[#allocation4 + $0x618] sm:$0xff]
      %v5444 = vld [vmem:[#allocation4 + $0x620] sm:$0xff]
      %v5445 = vld [vmem:[#allocation4 + $0x628] sm:$0xff]
      %v5446 = vld [vmem:[#allocation4 + $0x630] sm:$0xff]
      %v5447 = vld [vmem:[#allocation4 + $0x638] sm:$0xff]
      %v5448 = vld [vmem:[#allocation4 + $0x640] sm:$0xff]
      %v5449 = vld [vmem:[#allocation4 + $0x648] sm:$0xff]
      %v5450 = vld [vmem:[#allocation4 + $0x650] sm:$0xff]
      %v5451 = vld [vmem:[#allocation4 + $0x658] sm:$0xff]
      %v5452 = vld [vmem:[#allocation4 + $0x660] sm:$0xff]
      %v5453 = vld [vmem:[#allocation4 + $0x668] sm:$0xff]
      %v5454 = vld [vmem:[#allocation4 + $0x670] sm:$0xff]
      %v5455 = vld [vmem:[#allocation4 + $0x678] sm:$0xff]
      %v5456 = vld [vmem:[#allocation4 + $0x680] sm:$0xff]
      %v5457 = vld [vmem:[#allocation4 + $0x688] sm:$0xff]
      %v5458 = vld [vmem:[#allocation4 + $0x690] sm:$0xff]
      %v5459 = vld [vmem:[#allocation4 + $0x698] sm:$0xff]
      %v5460 = vld [vmem:[#allocation4 + $0x6a0] sm:$0xff]
      %v5461 = vld [vmem:[#allocation4 + $0x6a8] sm:$0xff]
      %v5462 = vld [vmem:[#allocation4 + $0x6b0] sm:$0xff]
      %v5463 = vld [vmem:[#allocation4 + $0x6b8] sm:$0xff]
      %v5464 = vld [vmem:[#allocation4 + $0x6c0] sm:$0xff]
      %v5465 = vld [vmem:[#allocation4 + $0x6c8] sm:$0xff]
      %v5466 = vld [vmem:[#allocation4 + $0x6d0] sm:$0xff]
      %v5467 = vld [vmem:[#allocation4 + $0x6d8] sm:$0xff]
      %v5468 = vld [vmem:[#allocation4 + $0x6e0] sm:$0xff]
      %v5469 = vld [vmem:[#allocation4 + $0x6e8] sm:$0xff]
      %v5470 = vld [vmem:[#allocation4 + $0x6f0] sm:$0xff]
      %v5471 = vld [vmem:[#allocation4 + $0x6f8] sm:$0xff]
      %v5472 = vld [vmem:[#allocation4 + $0x700] sm:$0xff]
      %v5473 = vld [vmem:[#allocation4 + $0x708] sm:$0xff]
      %v5474 = vld [vmem:[#allocation4 + $0x710] sm:$0xff]
      %v5475 = vld [vmem:[#allocation4 + $0x718] sm:$0xff]
      %v5476 = vld [vmem:[#allocation4 + $0x720] sm:$0xff]
      %v5477 = vld [vmem:[#allocation4 + $0x728] sm:$0xff]
      %v5478 = vld [vmem:[#allocation4 + $0x730] sm:$0xff]
      %v5479 = vld [vmem:[#allocation4 + $0x738] sm:$0xff]
      %v5480 = vld [vmem:[#allocation4 + $0x740] sm:$0xff]
      %v5481 = vld [vmem:[#allocation4 + $0x748] sm:$0xff]
      %v5482 = vld [vmem:[#allocation4 + $0x750] sm:$0xff]
      %v5483 = vld [vmem:[#allocation4 + $0x758] sm:$0xff]
      %v5484 = vld [vmem:[#allocation4 + $0x760] sm:$0xff]
      %v5485 = vld [vmem:[#allocation4 + $0x768] sm:$0xff]
      %v5486 = vld [vmem:[#allocation4 + $0x770] sm:$0xff]
      %v5487 = vld [vmem:[#allocation4 + $0x778] sm:$0xff]
      %v5488 = vld [vmem:[#allocation4 + $0x780] sm:$0xff]
      %v5489 = vld [vmem:[#allocation4 + $0x788] sm:$0xff]
      %v5490 = vld [vmem:[#allocation4 + $0x790] sm:$0xff]
      %v5491 = vld [vmem:[#allocation4 + $0x798] sm:$0xff]
      %v5492 = vld [vmem:[#allocation4 + $0x7a0] sm:$0xff]
      %v5493 = vld [vmem:[#allocation4 + $0x7a8] sm:$0xff]
      %v5494 = vld [vmem:[#allocation4 + $0x7b0] sm:$0xff]
      %v5495 = vld [vmem:[#allocation4 + $0x7b8] sm:$0xff]
      %v5496 = vld [vmem:[#allocation4 + $0x7c0] sm:$0xff]
      %v5497 = vld [vmem:[#allocation4 + $0x7c8] sm:$0xff]
      %v5498 = vld [vmem:[#allocation4 + $0x7d0] sm:$0xff]
      %v5499 = vld [vmem:[#allocation4 + $0x7d8] sm:$0xff]
      %v5500 = vld [vmem:[#allocation4 + $0x7e0] sm:$0xff]
      %v5501 = vld [vmem:[#allocation4 + $0x7e8] sm:$0xff]
      %v5502 = vld [vmem:[#allocation4 + $0x7f0] sm:$0xff]
      %v5503 = vld [vmem:[#allocation4 + $0x7f8] sm:$0xff]
      %v5504 = vld [vmem:[#allocation4 + $0x800] sm:$0xff]
      %v5505 = vld [vmem:[#allocation4 + $0x808] sm:$0xff]
      %v5506 = vld [vmem:[#allocation4 + $0x810] sm:$0xff]
      %v5507 = vld [vmem:[#allocation4 + $0x818] sm:$0xff]
      %v5508 = vld [vmem:[#allocation4 + $0x820] sm:$0xff]
      %v5509 = vld [vmem:[#allocation4 + $0x828] sm:$0xff]
      %v5510 = vld [vmem:[#allocation4 + $0x830] sm:$0xff]
      %v5511 = vld [vmem:[#allocation4 + $0x838] sm:$0xff]
      %v5512 = vld [vmem:[#allocation4 + $0x840] sm:$0xff]
      %v5513 = vld [vmem:[#allocation4 + $0x848] sm:$0xff]
      %v5514 = vld [vmem:[#allocation4 + $0x850] sm:$0xff]
      %v5515 = vld [vmem:[#allocation4 + $0x858] sm:$0xff]
      %v5516 = vld [vmem:[#allocation4 + $0x860] sm:$0xff]
      %v5517 = vld [vmem:[#allocation4 + $0x868] sm:$0xff]
      %v5518 = vld [vmem:[#allocation4 + $0x870] sm:$0xff]
      %v5519 = vld [vmem:[#allocation4 + $0x878] sm:$0xff]
      %v5520 = vld [vmem:[#allocation4 + $0x880] sm:$0xff]
      %v5521 = vld [vmem:[#allocation4 + $0x888] sm:$0xff]
      %v5522 = vld [vmem:[#allocation4 + $0x890] sm:$0xff]
      %v5523 = vld [vmem:[#allocation4 + $0x898] sm:$0xff]
      %v5524 = vld [vmem:[#allocation4 + $0x8a0] sm:$0xff]
      %v5525 = vld [vmem:[#allocation4 + $0x8a8] sm:$0xff]
      %v5526 = vld [vmem:[#allocation4 + $0x8b0] sm:$0xff]
      %v5527 = vld [vmem:[#allocation4 + $0x8b8] sm:$0xff]
      %v5528 = vld [vmem:[#allocation4 + $0x8c0] sm:$0xff]
      %v5529 = vld [vmem:[#allocation4 + $0x8c8] sm:$0xff]
      %v5530 = vld [vmem:[#allocation4 + $0x8d0] sm:$0xff]
      %v5531 = vld [vmem:[#allocation4 + $0x8d8] sm:$0xff]
      %v5532 = vld [vmem:[#allocation4 + $0x8e0] sm:$0xff]
      %v5533 = vld [vmem:[#allocation4 + $0x8e8] sm:$0xff]
      %v5534 = vld [vmem:[#allocation4 + $0x8f0] sm:$0xff]
      %v5535 = vld [vmem:[#allocation4 + $0x8f8] sm:$0xff]
      %v5536 = vld [vmem:[%s7] sm:$0xff]
      %5538 = vset.pattern.permute.xlu0 0
      %5539 = vperm.xlu0 %5538, %v5536
      %v5540 = vpop.permute.xlu0 %5539
      %5542 = vmatprep.subr.mxu0 %v5279
      %5543 = vmatpush1.msra.mxu0 %v5278
      %5544 = vmatprep.subr.mxu0 %v5277
      %5545 = vmatpush1.msra.mxu0 %v5276
      %5546 = vmatprep.subr.mxu0 %v5275
      %5547 = vmatpush1.msra.mxu0 %v5274
      %5548 = vmatprep.subr.mxu0 %v5273
      %5549 = vmatpush1.msra.mxu0 %v5272
      %5550 = vmatprep.subr.mxu0 %v5271
      %5551 = vmatpush1.msra.mxu0 %v5270
      %5552 = vmatprep.subr.mxu0 %v5269
      %5553 = vmatpush1.msra.mxu0 %v5268
      %5554 = vmatprep.subr.mxu0 %v5267
      %5555 = vmatpush1.msra.mxu0 %v5266
      %5556 = vmatprep.subr.mxu0 %v5265
      %5557 = vmatpush1.msra.mxu0 %v5264
      %5558 = vmatprep.subr.mxu0 %v5263
      %5559 = vmatpush1.msra.mxu0 %v5262
      %5560 = vmatprep.subr.mxu0 %v5261
      %5561 = vmatpush1.msra.mxu0 %v5260
      %5562 = vmatprep.subr.mxu0 %v5259
      %5563 = vmatpush1.msra.mxu0 %v5258
      %5564 = vmatprep.subr.mxu0 %v5257
      %5565 = vmatpush1.msra.mxu0 %v5256
      %5566 = vmatprep.subr.mxu0 %v5255
      %5567 = vmatpush1.msra.mxu0 %v5254
      %5568 = vmatprep.subr.mxu0 %v5253
      %5569 = vmatpush1.msra.mxu0 %v5252
      %5570 = vmatprep.subr.mxu0 %v5251
      %5571 = vmatpush1.msra.mxu0 %v5250
      %5572 = vmatprep.subr.mxu0 %v5249
      %5573 = vmatpush1.msra.mxu0 %v5248
      %5574 = vmatprep.subr.mxu0 %v5311
      %5575 = vmatpush2.msra.mxu0 %v5310
      %5576 = vmatprep.subr.mxu0 %v5309
      %5577 = vmatpush2.msra.mxu0 %v5308
      %5578 = vmatprep.subr.mxu0 %v5307
      %5579 = vmatpush2.msra.mxu0 %v5306
      %5580 = vmatprep.subr.mxu0 %v5305
      %5581 = vmatpush2.msra.mxu0 %v5304
      %5582 = vmatprep.subr.mxu0 %v5303
      %5583 = vmatpush2.msra.mxu0 %v5302
      %5584 = vmatprep.subr.mxu0 %v5301
      %5585 = vmatpush2.msra.mxu0 %v5300
      %5586 = vmatprep.subr.mxu0 %v5299
      %5587 = vmatpush2.msra.mxu0 %v5298
      %5588 = vmatprep.subr.mxu0 %v5297
      %5589 = vmatpush2.msra.mxu0 %v5296
      %5590 = vmatprep.subr.mxu0 %v5295
      %5591 = vmatpush2.msra.mxu0 %v5294
      %5592 = vmatprep.subr.mxu0 %v5293
      %5593 = vmatpush2.msra.mxu0 %v5292
      %5594 = vmatprep.subr.mxu0 %v5291
      %5595 = vmatpush2.msra.mxu0 %v5290
      %5596 = vmatprep.subr.mxu0 %v5289
      %5597 = vmatpush2.msra.mxu0 %v5288
      %5598 = vmatprep.subr.mxu0 %v5287
      %5599 = vmatpush2.msra.mxu0 %v5286
      %5600 = vmatprep.subr.mxu0 %v5285
      %5601 = vmatpush2.msra.mxu0 %v5284
      %5602 = vmatprep.subr.mxu0 %v5283
      %5603 = vmatpush2.msra.mxu0 %v5282
      %5604 = vmatprep.subr.mxu0 %v5281
      %5605 = vmatpush2.msra.mxu0 %v5280
      %5606 = vmatprep.mubr.f32.mxu0 %v5240
      %5607 = vmatmul.mubr.f32.gmra.mxu0 %v5239
      %v5608 = vpop.f32.mrf.mxu0
      %v5609 = vadd.f32 %v5540, %v5608
      %v5610 = vpop.f32.mrf.mxu0
      %v5611 = vadd.f32 %v5540, %v5610
      %5612 = vdwg.mxu0
      %5613 = vmatprep.subr.mxu0 %v5343
      %5614 = vmatpush1.msra.mxu0 %v5342
      %5615 = vmatprep.subr.mxu0 %v5341
      %5616 = vmatpush1.msra.mxu0 %v5340
      %5617 = vmatprep.subr.mxu0 %v5339
      %5618 = vmatpush1.msra.mxu0 %v5338
      %5619 = vmatprep.subr.mxu0 %v5337
      %5620 = vmatpush1.msra.mxu0 %v5336
      %5621 = vmatprep.subr.mxu0 %v5335
      %5622 = vmatpush1.msra.mxu0 %v5334
      %5623 = vmatprep.subr.mxu0 %v5333
      %5624 = vmatpush1.msra.mxu0 %v5332
      %5625 = vmatprep.subr.mxu0 %v5331
      %5626 = vmatpush1.msra.mxu0 %v5330
      %5627 = vmatprep.subr.mxu0 %v5329
      %5628 = vmatpush1.msra.mxu0 %v5328
      %5629 = vmatprep.subr.mxu0 %v5327
      %5630 = vmatpush1.msra.mxu0 %v5326
      %5631 = vmatprep.subr.mxu0 %v5325
      %5632 = vmatpush1.msra.mxu0 %v5324
      %5633 = vmatprep.subr.mxu0 %v5323
      %5634 = vmatpush1.msra.mxu0 %v5322
      %5635 = vmatprep.subr.mxu0 %v5321
      %5636 = vmatpush1.msra.mxu0 %v5320
      %5637 = vmatprep.subr.mxu0 %v5319
      %5638 = vmatpush1.msra.mxu0 %v5318
      %5639 = vmatprep.subr.mxu0 %v5317
      %5640 = vmatpush1.msra.mxu0 %v5316
      %5641 = vmatprep.subr.mxu0 %v5315
      %5642 = vmatpush1.msra.mxu0 %v5314
      %5643 = vmatprep.subr.mxu0 %v5313
      %5644 = vmatpush1.msra.mxu0 %v5312
      %5645 = vmatprep.subr.mxu0 %v5375
      %5646 = vmatpush2.msra.mxu0 %v5374
      %5647 = vmatprep.subr.mxu0 %v5373
      %5648 = vmatpush2.msra.mxu0 %v5372
      %5649 = vmatprep.subr.mxu0 %v5371
      %5650 = vmatpush2.msra.mxu0 %v5370
      %5651 = vmatprep.subr.mxu0 %v5369
      %5652 = vmatpush2.msra.mxu0 %v5368
      %5653 = vmatprep.subr.mxu0 %v5367
      %5654 = vmatpush2.msra.mxu0 %v5366
      %5655 = vmatprep.subr.mxu0 %v5365
      %5656 = vmatpush2.msra.mxu0 %v5364
      %5657 = vmatprep.subr.mxu0 %v5363
      %5658 = vmatpush2.msra.mxu0 %v5362
      %5659 = vmatprep.subr.mxu0 %v5361
      %5660 = vmatpush2.msra.mxu0 %v5360
      %5661 = vmatprep.subr.mxu0 %v5359
      %5662 = vmatpush2.msra.mxu0 %v5358
      %5663 = vmatprep.subr.mxu0 %v5357
      %5664 = vmatpush2.msra.mxu0 %v5356
      %5665 = vmatprep.subr.mxu0 %v5355
      %5666 = vmatpush2.msra.mxu0 %v5354
      %5667 = vmatprep.subr.mxu0 %v5353
      %5668 = vmatpush2.msra.mxu0 %v5352
      %5669 = vmatprep.subr.mxu0 %v5351
      %5670 = vmatpush2.msra.mxu0 %v5350
      %5671 = vmatprep.subr.mxu0 %v5349
      %5672 = vmatpush2.msra.mxu0 %v5348
      %5673 = vmatprep.subr.mxu0 %v5347
      %5674 = vmatpush2.msra.mxu0 %v5346
      %5675 = vmatprep.subr.mxu0 %v5345
      %5676 = vmatpush2.msra.mxu0 %v5344
      %5677 = vmatprep.mubr.f32.mxu0 %v5242
      %5678 = vmatmul.mubr.f32.gmra.mxu0 %v5241
      %v5679 = vpop.f32.mrf.mxu0
      %v5680 = vadd.f32 %v5609, %v5679
      %v5681 = vpop.f32.mrf.mxu0
      %v5682 = vadd.f32 %v5611, %v5681
      %5683 = vdwg.mxu0
      %5684 = vmatprep.subr.mxu0 %v5407
      %5685 = vmatpush1.msra.mxu0 %v5406
      %5686 = vmatprep.subr.mxu0 %v5405
      %5687 = vmatpush1.msra.mxu0 %v5404
      %5688 = vmatprep.subr.mxu0 %v5403
      %5689 = vmatpush1.msra.mxu0 %v5402
      %5690 = vmatprep.subr.mxu0 %v5401
      %5691 = vmatpush1.msra.mxu0 %v5400
      %5692 = vmatprep.subr.mxu0 %v5399
      %5693 = vmatpush1.msra.mxu0 %v5398
      %5694 = vmatprep.subr.mxu0 %v5397
      %5695 = vmatpush1.msra.mxu0 %v5396
      %5696 = vmatprep.subr.mxu0 %v5395
      %5697 = vmatpush1.msra.mxu0 %v5394
      %5698 = vmatprep.subr.mxu0 %v5393
      %5699 = vmatpush1.msra.mxu0 %v5392
      %5700 = vmatprep.subr.mxu0 %v5391
      %5701 = vmatpush1.msra.mxu0 %v5390
      %5702 = vmatprep.subr.mxu0 %v5389
      %5703 = vmatpush1.msra.mxu0 %v5388
      %5704 = vmatprep.subr.mxu0 %v5387
      %5705 = vmatpush1.msra.mxu0 %v5386
      %5706 = vmatprep.subr.mxu0 %v5385
      %5707 = vmatpush1.msra.mxu0 %v5384
      %5708 = vmatprep.subr.mxu0 %v5383
      %5709 = vmatpush1.msra.mxu0 %v5382
      %5710 = vmatprep.subr.mxu0 %v5381
      %5711 = vmatpush1.msra.mxu0 %v5380
      %5712 = vmatprep.subr.mxu0 %v5379
      %5713 = vmatpush1.msra.mxu0 %v5378
      %5714 = vmatprep.subr.mxu0 %v5377
      %5715 = vmatpush1.msra.mxu0 %v5376
      %5716 = vmatprep.subr.mxu0 %v5439
      %5717 = vmatpush2.msra.mxu0 %v5438
      %5718 = vmatprep.subr.mxu0 %v5437
      %5719 = vmatpush2.msra.mxu0 %v5436
      %5720 = vmatprep.subr.mxu0 %v5435
      %5721 = vmatpush2.msra.mxu0 %v5434
      %5722 = vmatprep.subr.mxu0 %v5433
      %5723 = vmatpush2.msra.mxu0 %v5432
      %5724 = vmatprep.subr.mxu0 %v5431
      %5725 = vmatpush2.msra.mxu0 %v5430
      %5726 = vmatprep.subr.mxu0 %v5429
      %5727 = vmatpush2.msra.mxu0 %v5428
      %5728 = vmatprep.subr.mxu0 %v5427
      %5729 = vmatpush2.msra.mxu0 %v5426
      %5730 = vmatprep.subr.mxu0 %v5425
      %5731 = vmatpush2.msra.mxu0 %v5424
      %5732 = vmatprep.subr.mxu0 %v5423
      %5733 = vmatpush2.msra.mxu0 %v5422
      %5734 = vmatprep.subr.mxu0 %v5421
      %5735 = vmatpush2.msra.mxu0 %v5420
      %5736 = vmatprep.subr.mxu0 %v5419
      %5737 = vmatpush2.msra.mxu0 %v5418
      %5738 = vmatprep.subr.mxu0 %v5417
      %5739 = vmatpush2.msra.mxu0 %v5416
      %5740 = vmatprep.subr.mxu0 %v5415
      %5741 = vmatpush2.msra.mxu0 %v5414
      %5742 = vmatprep.subr.mxu0 %v5413
      %5743 = vmatpush2.msra.mxu0 %v5412
      %5744 = vmatprep.subr.mxu0 %v5411
      %5745 = vmatpush2.msra.mxu0 %v5410
      %5746 = vmatprep.subr.mxu0 %v5409
      %5747 = vmatpush2.msra.mxu0 %v5408
      %5748 = vmatprep.mubr.f32.mxu0 %v5244
      %5749 = vmatmul.mubr.f32.gmra.mxu0 %v5243
      %v5750 = vpop.f32.mrf.mxu0
      %v5751 = vadd.f32 %v5680, %v5750
      %v5752 = vpop.f32.mrf.mxu0
      %v5753 = vadd.f32 %v5682, %v5752
      %5754 = vdwg.mxu0
      %5755 = vmatprep.subr.mxu0 %v5471
      %5756 = vmatpush1.msra.mxu0 %v5470
      %5757 = vmatprep.subr.mxu0 %v5469
      %5758 = vmatpush1.msra.mxu0 %v5468
      %5759 = vmatprep.subr.mxu0 %v5467
      %5760 = vmatpush1.msra.mxu0 %v5466
      %5761 = vmatprep.subr.mxu0 %v5465
      %5762 = vmatpush1.msra.mxu0 %v5464
      %5763 = vmatprep.subr.mxu0 %v5463
      %5764 = vmatpush1.msra.mxu0 %v5462
      %5765 = vmatprep.subr.mxu0 %v5461
      %5766 = vmatpush1.msra.mxu0 %v5460
      %5767 = vmatprep.subr.mxu0 %v5459
      %5768 = vmatpush1.msra.mxu0 %v5458
      %5769 = vmatprep.subr.mxu0 %v5457
      %5770 = vmatpush1.msra.mxu0 %v5456
      %5771 = vmatprep.subr.mxu0 %v5455
      %5772 = vmatpush1.msra.mxu0 %v5454
      %5773 = vmatprep.subr.mxu0 %v5453
      %5774 = vmatpush1.msra.mxu0 %v5452
      %5775 = vmatprep.subr.mxu0 %v5451
      %5776 = vmatpush1.msra.mxu0 %v5450
      %5777 = vmatprep.subr.mxu0 %v5449
      %5778 = vmatpush1.msra.mxu0 %v5448
      %5779 = vmatprep.subr.mxu0 %v5447
      %5780 = vmatpush1.msra.mxu0 %v5446
      %5781 = vmatprep.subr.mxu0 %v5445
      %5782 = vmatpush1.msra.mxu0 %v5444
      %5783 = vmatprep.subr.mxu0 %v5443
      %5784 = vmatpush1.msra.mxu0 %v5442
      %5785 = vmatprep.subr.mxu0 %v5441
      %5786 = vmatpush1.msra.mxu0 %v5440
      %5787 = vmatprep.subr.mxu0 %v5503
      %5788 = vmatpush2.msra.mxu0 %v5502
      %5789 = vmatprep.subr.mxu0 %v5501
      %5790 = vmatpush2.msra.mxu0 %v5500
      %5791 = vmatprep.subr.mxu0 %v5499
      %5792 = vmatpush2.msra.mxu0 %v5498
      %5793 = vmatprep.subr.mxu0 %v5497
      %5794 = vmatpush2.msra.mxu0 %v5496
      %5795 = vmatprep.subr.mxu0 %v5495
      %5796 = vmatpush2.msra.mxu0 %v5494
      %5797 = vmatprep.subr.mxu0 %v5493
      %5798 = vmatpush2.msra.mxu0 %v5492
      %5799 = vmatprep.subr.mxu0 %v5491
      %5800 = vmatpush2.msra.mxu0 %v5490
      %5801 = vmatprep.subr.mxu0 %v5489
      %5802 = vmatpush2.msra.mxu0 %v5488
      %5803 = vmatprep.subr.mxu0 %v5487
      %5804 = vmatpush2.msra.mxu0 %v5486
      %5805 = vmatprep.subr.mxu0 %v5485
      %5806 = vmatpush2.msra.mxu0 %v5484
      %5807 = vmatprep.subr.mxu0 %v5483
      %5808 = vmatpush2.msra.mxu0 %v5482
      %5809 = vmatprep.subr.mxu0 %v5481
      %5810 = vmatpush2.msra.mxu0 %v5480
      %5811 = vmatprep.subr.mxu0 %v5479
      %5812 = vmatpush2.msra.mxu0 %v5478
      %5813 = vmatprep.subr.mxu0 %v5477
      %5814 = vmatpush2.msra.mxu0 %v5476
      %5815 = vmatprep.subr.mxu0 %v5475
      %5816 = vmatpush2.msra.mxu0 %v5474
      %5817 = vmatprep.subr.mxu0 %v5473
      %5818 = vmatpush2.msra.mxu0 %v5472
      %5819 = vmatprep.mubr.f32.mxu0 %v5246
      %5820 = vmatmul.mubr.f32.gmra.mxu0 %v5245
      %v5821 = vpop.f32.mrf.mxu0
      %v5822 = vadd.f32 %v5751, %v5821
      %v5823 = vpop.f32.mrf.mxu0
      %v5824 = vadd.f32 %v5753, %v5823
      %5825 = vdwg.mxu0
      %5826 = vmatprep.subr.mxu0 %v5535
      %5827 = vmatpush1.msra.mxu0 %v5534
      %5828 = vmatprep.subr.mxu0 %v5533
      %5829 = vmatpush1.msra.mxu0 %v5532
      %5830 = vmatprep.subr.mxu0 %v5531
      %5831 = vmatpush1.msra.mxu0 %v5530
      %5832 = vmatprep.subr.mxu0 %v5529
      %5833 = vmatpush1.msra.mxu0 %v5528
      %5834 = vmatprep.subr.mxu0 %v5527
      %5835 = vmatpush1.msra.mxu0 %v5526
      %5836 = vmatprep.subr.mxu0 %v5525
      %5837 = vmatpush1.msra.mxu0 %v5524
      %5838 = vmatprep.subr.mxu0 %v5523
      %5839 = vmatpush1.msra.mxu0 %v5522
      %5840 = vmatprep.subr.mxu0 %v5521
      %5841 = vmatpush1.msra.mxu0 %v5520
      %5842 = vmatprep.subr.mxu0 %v5519
      %5843 = vmatpush1.msra.mxu0 %v5518
      %5844 = vmatprep.subr.mxu0 %v5517
      %5845 = vmatpush1.msra.mxu0 %v5516
      %5846 = vmatprep.subr.mxu0 %v5515
      %5847 = vmatpush1.msra.mxu0 %v5514
      %5848 = vmatprep.subr.mxu0 %v5513
      %5849 = vmatpush1.msra.mxu0 %v5512
      %5850 = vmatprep.subr.mxu0 %v5511
      %5851 = vmatpush1.msra.mxu0 %v5510
      %5852 = vmatprep.subr.mxu0 %v5509
      %5853 = vmatpush1.msra.mxu0 %v5508
      %5854 = vmatprep.subr.mxu0 %v5507
      %5855 = vmatpush1.msra.mxu0 %v5506
      %5856 = vmatprep.subr.mxu0 %v5505
      %5857 = vmatpush1.msra.mxu0 %v5504
      %5858 = vmatprep.subr.mxu0 0.0
      %5859 = vmatpush2.msra.mxu0 0.0
      %5860 = vmatprep.subr.mxu0 0.0
      %5861 = vmatpush2.msra.mxu0 0.0
      %5862 = vmatprep.subr.mxu0 0.0
      %5863 = vmatpush2.msra.mxu0 0.0
      %5864 = vmatprep.subr.mxu0 0.0
      %5865 = vmatpush2.msra.mxu0 0.0
      %5866 = vmatprep.subr.mxu0 0.0
      %5867 = vmatpush2.msra.mxu0 0.0
      %5868 = vmatprep.subr.mxu0 0.0
      %5869 = vmatpush2.msra.mxu0 0.0
      %5870 = vmatprep.subr.mxu0 0.0
      %5871 = vmatpush2.msra.mxu0 0.0
      %5872 = vmatprep.subr.mxu0 0.0
      %5873 = vmatpush2.msra.mxu0 0.0
      %5874 = vmatprep.subr.mxu0 0.0
      %5875 = vmatpush2.msra.mxu0 0.0
      %5876 = vmatprep.subr.mxu0 0.0
      %5877 = vmatpush2.msra.mxu0 0.0
      %5878 = vmatprep.subr.mxu0 0.0
      %5879 = vmatpush2.msra.mxu0 0.0
      %5880 = vmatprep.subr.mxu0 0.0
      %5881 = vmatpush2.msra.mxu0 0.0
      %5882 = vmatprep.subr.mxu0 0.0
      %5883 = vmatpush2.msra.mxu0 0.0
      %5884 = vmatprep.subr.mxu0 0.0
      %5885 = vmatpush2.msra.mxu0 0.0
      %5886 = vmatprep.subr.mxu0 0.0
      %5887 = vmatpush2.msra.mxu0 0.0
      %5888 = vmatprep.subr.mxu0 0.0
      %5889 = vmatpush2.msra.mxu0 0.0
      %5890 = vmatprep.mubr.f32.mxu0 0.0
      %5891 = vmatmul.mubr.f32.gmra.mxu0 %v5247
      %v5892 = vpop.f32.mrf.mxu0
      %v5893 = vadd.f32 %v5822, %v5892
      %v5894 = vpop.f32.mrf.mxu0
      %v5895 = vadd.f32 %v5824, %v5894
      %5896 = vdwg.mxu0
      %v5897 = vmax.f32 %v5893, %v5895
      %5898 = vmax.xlane.f32.xlu0 %v5897
      %v5899 = vpop.xlane.xlu0 %5898
      %v5900 = vsub.f32 %v5893, %v5899
      %v5901 = vsub.f32 %v5895, %v5899
      %v5902 = vmul.f32 %v5900, 1.442695
      %v5903 = vpow.pop %v5902
      %v5904 = vmul.f32 %v5901, 1.442695
      %v5905 = vpow.pop %v5904
      %v5906 = vadd.f32 %v5903, %v5905
      %5907 = vadd.xlane.f32.xlu0 %v5906
      %v5908 = vpop.xlane.xlu0 %5907
      %v5909 = vrcp.pop %v5908
      %v5910 = vmul.f32 %v5903, %v5909
      %v5911 = vmul.f32 %v5905, %v5909
      %5912 = vst [vmem:[%s366] sm:$0xff] %v5910
      %5913 = vst [vmem:[%s366 + $0x8] sm:$0xff] %v5911
      %v5914 = vrot.slane %v5910, 4
      %v5915 = vmax.f32 %v5910, %v5914
      %v5916 = vrot.slane %v5915, 2
      %v5917 = vmax.f32 %v5915, %v5916
      %v5918 = vrot.slane %v5917, 1
      %v5919 = vmax.f32 %v5917, %v5918
      %v5920 = vrot.slane %v5911, 4
      %v5921 = vmax.f32 %v5911, %v5920
      %v5922 = vrot.slane %v5921, 2
      %v5923 = vmax.f32 %v5921, %v5922
      %v5924 = vrot.slane %v5923, 1
      %v5925 = vmax.f32 %v5923, %v5924
      %v5926 = vld [vmem:[%s8] sm:$0x3]
      %v5928 = vlaneseq
      %v5929 = vshrl.u32 %v5928, 7
      %v5930 = vsub.s32 0, %v5929
      %v5931 = vrot.slane %v5926, %v5930
      %v5932 = vlaneseq
      %v5933 = vshrl.u32 %v5932, 7
      %v5934 = vsub.s32 1, %v5933
      %v5935 = vrot.slane %v5926, %v5934
      %v5938 = vmul.f32 %v5919, %v5931
      %v5939 = vmul.f32 %v5925, %v5935
      %v5942 = vcombine.low %v5938, %v5939
      %v5944 = vunpack.c.l.s4 1966171168
      %v5945 = vunpack.c.0.s8 %v5944
      %v5946 = vlaneseq
      %v5947 = vshrl.u32 %v5946, 7
      %v5948 = vsub.s32 %v5945, %v5947
      %v5949 = vrot.slane %v5942, %v5948
      %v5951 = vunpack.c.l.s4 1966171168
      %v5952 = vunpack.c.0.s8 %v5951
      %v5953 = vlaneseq
      %v5954 = vshrl.u32 %v5953, 7
      %v5955 = vsub.s32 %v5952, %v5954
      %v5956 = vrot.slane %v5949, %v5955
      %v5958 = vlaneseq
      %vm5959 = vcmp.ge.s32.totalorder %v5958, 0
      %vm5960 = vcmp.lt.s32.totalorder %v5958, 256
      %vm5961 = vmand %vm5959, %vm5960
      %5962 = vst.msk [vmem:[%s370] sm:$0x3] %vm5961, %v5956
      %p5963 = scmp.lt.s32.totalorder %s22, 1
      %s5964 = scalar_select %p5963, %s22, 1
      %s5965 = smul.addr %s5964, 2
      %s5966 = smul.addr %s5965, 8
      %s5967 = scalar_lea.vmem %s9, %s5966
      %p5968 = scmp.lt.s32.totalorder %s22, 1
      %s5969 = scalar_select %p5968, %s22, 1
      %s5970 = smul.addr %s5969, 2
      %s5971 = scalar_lea.vmem %s10, %s5970
      // Predicated region
      $region57: #{attention_forward.1} parent=55 // pred_check
        %p5972 = pneg %p234
      $region58: #{attention_forward.1} parent=55 // pred_check_branch
        %5974 = sbr.rel (%p5972) target = $region60
      $region59: #{attention_forward.1} parent=55 // pred_region
        _
      $region60: #{attention_forward.1} parent=55 // pred_fallthru
        _
      // Predicated region
      $region61: #{attention_forward.1} parent=55 // pred_check
        %p5975 = pneg %p260
      $region62: #{attention_forward.1} parent=55 // pred_check_branch
        %5977 = sbr.rel (%p5975) target = $region64
      $region63: #{attention_forward.1} parent=55 // pred_region
        _
      $region64: #{attention_forward.1} parent=55 // pred_fallthru
        _
    $region56: #{attention_forward.1} parent=5 // pred_fallthru
      _
    %p5978 = scmp.le.s32.totalorder 2, %s17
    // Predicated region
    $region65: #{attention_forward.1} parent=5 // pred_check
      %p5979 = pneg %p5978
    $region66: #{attention_forward.1} parent=5 // pred_check_branch
      %5981 = sbr.rel (%p5979) target = $region68
    $region67: #{attention_forward.1} parent=5 // pred_region
      %s5982 = ssub.s32 %s17, 2
      // Predicated region
      $region69: #{attention_forward.1} parent=67 // pred_check
        %p5983 = pneg %p240
      $region70: #{attention_forward.1} parent=67 // pred_check_branch
        %5985 = sbr.rel (%p5983) target = $region72
      $region71: #{attention_forward.1} parent=67 // pred_region
        %p5986 = scmp.lt.s32.totalorder %s23, 1
        %s5987 = scalar_select %p5986, %s23, 1
        %s5988 = smul.addr %s5987, 2
        %s5989 = smul.addr %s5988, 8
        %s5990 = scalar_lea.vmem %s9, %s5989
      $region72: #{attention_forward.1} parent=67 // pred_fallthru
        _
      // Predicated region
      $region73: #{attention_forward.1} parent=67 // pred_check
        %p5991 = pneg %p266
      $region74: #{attention_forward.1} parent=67 // pred_check_branch
        %5993 = sbr.rel (%p5991) target = $region76
      $region75: #{attention_forward.1} parent=67 // pred_region
        %p5994 = scmp.lt.s32.totalorder %s23, 1
        %s5995 = scalar_select %p5994, %s23, 1
        %s5996 = smul.addr %s5995, 2
        %s5997 = scalar_lea.vmem %s10, %s5996
      $region76: #{attention_forward.1} parent=67 // pred_fallthru
        _
    $region68: #{attention_forward.1} parent=5 // pred_fallthru
      _
  $region6: #{attention_forward.1} parent=0 // loop_footer
    %s21 = sadd.s32 1, %s17
  $region7: #{attention_forward.1} parent=0 // loop_footer_branch
    %16 = sbr.rel target = $region3
  $region8: #{attention_forward.1} parent=0 // loop_exit
    _

</llo_original>
